<compile_context>
chip_gen: v7x
topology: tpu7x:2x2x1
jax: 0.10.0
libtpu: 0.0.40
codegen_flags: <defaults>
</compile_context>

<pallas_src>
import jax
import jax.numpy as jnp
from jax.experimental import pallas as pl
from jax.experimental.pallas import tpu as pltpu

BETA = 0.95
THRESHOLD = 1.0


def _reset_term(spk_prev):
    """Reset-by-subtraction term: spk_{t-1} * threshold (folded when thr==1)."""
    if THRESHOLD == 1.0:
        return spk_prev
    return spk_prev * THRESHOLD


def _snn_kernel(x_ref, w1_ref, b1_ref, w2_ref, b2_ref, spk_ref, mem_ref):
    B = x_ref.shape[0]
    NH = w1_ref.shape[1]
    NO = w2_ref.shape[1]
    num_steps = spk_ref.shape[0]

    # Layer-1 input current is identical every time step -> one MXU matmul.
    cur1 = (jnp.dot(x_ref[...], w1_ref[...], preferred_element_type=jnp.float32)
            + b1_ref[...])

    # Hoist weight/bias loads & broadcasts out of the time loop.
    w2 = w2_ref[...]
    b2 = jnp.broadcast_to(b2_ref[...], (B, NO))

    # init_leaky(): zero membrane potentials. State is carried in vregs.
    mem1 = jnp.zeros((B, NH), jnp.float32)
    mem2 = jnp.zeros((B, NO), jnp.float32)
    # rst_t == (mem_{t-1} > thr) == spk_{t-1}; both are zero at t == 0.
    spk1 = jnp.zeros((B, NH), jnp.float32)
    spk2 = jnp.zeros((B, NO), jnp.float32)

    # Fully unrolled at trace time: static trip count, static output offsets,
    # and full cross-step visibility for the scheduler.
    for t in range(num_steps):
        # --- LIF layer 1 (reset uses previous membrane == previous spike) ---
        mem1 = BETA * mem1 + cur1 - _reset_term(spk1)
        spk1 = (mem1 > THRESHOLD).astype(jnp.float32)

        # --- Linear layer 2 (MXU) ---
        cur2 = jnp.dot(spk1, w2, preferred_element_type=jnp.float32) + b2

        # --- LIF layer 2 ---
        mem2 = BETA * mem2 + cur2 - _reset_term(spk2)
        spk2 = (mem2 > THRESHOLD).astype(jnp.float32)

        # Static-offset stores of this step's outputs.
        spk_ref[t] = spk2
        mem_ref[t] = mem2


def snn_forward(x, w1, b1, w2, b2, num_steps):
    """x: [B, NI]; w1: [NI, NH]; b1: [1, NH]; w2: [NH, NO]; b2: [1, NO]."""
    B, NI = x.shape
    NH = w1.shape[1]
    NO = w2.shape[1]

    out_shape = (
        jax.ShapeDtypeStruct((num_steps, B, NO), jnp.float32),  # spikes
        jax.ShapeDtypeStruct((num_steps, B, NO), jnp.float32),  # membrane potentials
    )

    full = lambda shape: pl.BlockSpec(shape, lambda: tuple(0 for _ in shape))

    # ~400 KiB resident at these shapes: everything fits in VMEM on every
    # generation, so a single grid-less invocation is the lowest-overhead form.
    return pl.pallas_call(
        _snn_kernel,
        out_shape=out_shape,
        grid_spec=pltpu.PrefetchScalarGridSpec(
            num_scalar_prefetch=0,
            grid=(),
            in_specs=[
                full((B, NI)),
                full((NI, NH)),
                full((1, NH)),
                full((NH, NO)),
                full((1, NO)),
            ],
            out_specs=[
                full((num_steps, B, NO)),
                full((num_steps, B, NO)),
            ],
        ),
    )(x, w1, b1, w2, b2)


def _torch_linear_init(key, fan_in, fan_out):
    """Deterministic init mimicking nn.Linear default: U(-1/sqrt(fan_in), 1/sqrt(fan_in))."""
    kw, kb = jax.random.split(key)
    bound = 1.0 / jnp.sqrt(fan_in)
    w = jax.random.uniform(kw, (fan_in, fan_out), jnp.float32, -bound, bound)  # stored [in, out]
    b = jax.random.uniform(kb, (1, fan_out), jnp.float32, -bound, bound)
    return w, b


def _reference(x, w1, b1, w2, b2, num_steps):
    """Pure-JAX reference of the snntorch Leaky forward (for verification)."""
    B = x.shape[0]
    NH = w1.shape[1]
    NO = w2.shape[1]
    mem1 = jnp.zeros((B, NH), jnp.float32)
    mem2 = jnp.zeros((B, NO), jnp.float32)
    spks, mems = [], []
    cur1 = x @ w1 + b1
    for _ in range(num_steps):
        rst1 = (mem1 > THRESHOLD).astype(jnp.float32)
        mem1 = BETA * mem1 + cur1 - rst1 * THRESHOLD
        spk1 = (mem1 > THRESHOLD).astype(jnp.float32)
        cur2 = spk1 @ w2 + b2
        rst2 = (mem2 > THRESHOLD).astype(jnp.float32)
        mem2 = BETA * mem2 + cur2 - rst2 * THRESHOLD
        spk2 = (mem2 > THRESHOLD).astype(jnp.float32)
        spks.append(spk2)
        mems.append(mem2)
    return jnp.stack(spks, 0), jnp.stack(mems, 0)


if __name__ == "__main__":
    # Small, TPU-friendly shapes consistent with the module's forward.
    B = 8            # batch
    NUM_INPUTS = 128
    NUM_HIDDEN = 256
    NUM_OUTPUTS = 128
    NUM_STEPS = 25

    key = jax.random.PRNGKey(0)
    kx, k1, k2 = jax.random.split(key, 3)

    x = jax.random.normal(kx, (B, NUM_INPUTS), jnp.float32)
    w1, b1 = _torch_linear_init(k1, NUM_INPUTS, NUM_HIDDEN)
    w2, b2 = _torch_linear_init(k2, NUM_HIDDEN, NUM_OUTPUTS)

    spk, mem = snn_forward(x, w1, b1, w2, b2, NUM_STEPS)
    jax.block_until_ready((spk, mem))

    # Verify against a pure-JAX reference of the same math.
    spk_ref, mem_ref = _reference(x, w1, b1, w2, b2, NUM_STEPS)
    assert spk.shape == (NUM_STEPS, B, NUM_OUTPUTS)
    assert mem.shape == (NUM_STEPS, B, NUM_OUTPUTS)
    assert jnp.allclose(spk, spk_ref, atol=1e-5)
    assert jnp.allclose(mem, mem_ref, atol=1e-4)

    print("KERNEL_OK")
</pallas_src>

<mosaic_0001>
module attributes {stable_mosaic.version = 11 : i64} {
  func.func @_snn_kernel(%arg0: memref<8x128xf32, #tpu.memory_space<vmem>>, %arg1: memref<128x256xf32, #tpu.memory_space<vmem>>, %arg2: memref<1x256xf32, #tpu.memory_space<vmem>>, %arg3: memref<256x128xf32, #tpu.memory_space<vmem>>, %arg4: memref<1x128xf32, #tpu.memory_space<vmem>>, %arg5: memref<25x8x128xf32, #tpu.memory_space<vmem>>, %arg6: memref<25x8x128xf32, #tpu.memory_space<vmem>>) attributes {dimension_semantics = [], scalar_prefetch = 0 : i64, scratch_operands = 0 : i64, tpu.core_type = #tpu.core_type<tc>} {
    %c0 = arith.constant 0 : index
    %c0_0 = arith.constant 0 : index
    %0 = vector.load %arg0[%c0, %c0_0] : memref<8x128xf32, #tpu.memory_space<vmem>>, vector<8x128xf32>
    %c0_1 = arith.constant 0 : index
    %c0_2 = arith.constant 0 : index
    %1 = vector.load %arg1[%c0_1, %c0_2] : memref<128x256xf32, #tpu.memory_space<vmem>>, vector<128x256xf32>
    %cst = arith.constant dense<0.000000e+00> : vector<8x256xf32>
    %2 = tpu.matmul %0, %1, %cst {dimension_numbers = #tpu.dot_dimension_numbers<[1], [0], [0], [1], [0, 0, 1, 1], [], []>} : vector<8x128xf32>, vector<128x256xf32>, vector<8x256xf32> -> vector<8x256xf32>
    %c0_3 = arith.constant 0 : index
    %c0_4 = arith.constant 0 : index
    %3 = vector.load %arg2[%c0_3, %c0_4] : memref<1x256xf32, #tpu.memory_space<vmem>>, vector<1x256xf32>
    %4 = vector.broadcast %3 : vector<1x256xf32> to vector<8x256xf32>
    %5 = arith.addf %2, %4 : vector<8x256xf32>
    %c0_5 = arith.constant 0 : index
    %c0_6 = arith.constant 0 : index
    %6 = vector.load %arg3[%c0_5, %c0_6] : memref<256x128xf32, #tpu.memory_space<vmem>>, vector<256x128xf32>
    %c0_7 = arith.constant 0 : index
    %c0_8 = arith.constant 0 : index
    %7 = vector.load %arg4[%c0_7, %c0_8] : memref<1x128xf32, #tpu.memory_space<vmem>>, vector<1x128xf32>
    %8 = vector.shape_cast %7 : vector<1x128xf32> to vector<1x128xf32>
    %9 = vector.broadcast %8 : vector<1x128xf32> to vector<8x128xf32>
    %cst_9 = arith.constant 0.000000e+00 : f32
    %10 = vector.broadcast %cst_9 : f32 to vector<8x256xf32>
    %cst_10 = arith.constant 0.000000e+00 : f32
    %11 = vector.broadcast %cst_10 : f32 to vector<8x128xf32>
    %cst_11 = arith.constant 0.000000e+00 : f32
    %12 = vector.broadcast %cst_11 : f32 to vector<8x256xf32>
    %cst_12 = arith.constant 0.000000e+00 : f32
    %13 = vector.broadcast %cst_12 : f32 to vector<8x128xf32>
    %cst_13 = arith.constant 0.949999988 : f32
    %14 = vector.broadcast %cst_13 : f32 to vector<8x256xf32>
    %15 = arith.mulf %14, %10 : vector<8x256xf32>
    %16 = arith.addf %15, %5 : vector<8x256xf32>
    %17 = arith.subf %16, %12 : vector<8x256xf32>
    %cst_14 = arith.constant 1.000000e+00 : f32
    %18 = vector.broadcast %cst_14 : f32 to vector<8x256xf32>
    %19 = arith.cmpf ogt, %17, %18 : vector<8x256xf32>
    %20 = arith.extui %19 : vector<8x256xi1> to vector<8x256xi32>
    %21 = arith.sitofp %20 : vector<8x256xi32> to vector<8x256xf32>
    %cst_15 = arith.constant dense<0.000000e+00> : vector<8x128xf32>
    %22 = tpu.matmul %21, %6, %cst_15 {dimension_numbers = #tpu.dot_dimension_numbers<[1], [0], [0], [1], [0, 0, 1, 1], [], []>} : vector<8x256xf32>, vector<256x128xf32>, vector<8x128xf32> -> vector<8x128xf32>
    %23 = arith.addf %22, %9 : vector<8x128xf32>
    %cst_16 = arith.constant 0.949999988 : f32
    %24 = vector.broadcast %cst_16 : f32 to vector<8x128xf32>
    %25 = arith.mulf %24, %11 : vector<8x128xf32>
    %26 = arith.addf %25, %23 : vector<8x128xf32>
    %27 = arith.subf %26, %13 : vector<8x128xf32>
    %cst_17 = arith.constant 1.000000e+00 : f32
    %28 = vector.broadcast %cst_17 : f32 to vector<8x128xf32>
    %29 = arith.cmpf ogt, %27, %28 : vector<8x128xf32>
    %30 = arith.extui %29 : vector<8x128xi1> to vector<8x128xi32>
    %31 = arith.sitofp %30 : vector<8x128xi32> to vector<8x128xf32>
    %c0_18 = arith.constant 0 : index
    %c0_19 = arith.constant 0 : index
    %c0_20 = arith.constant 0 : index
    %32 = vector.load %arg5[%c0_18, %c0_19, %c0_20] : memref<25x8x128xf32, #tpu.memory_space<vmem>>, vector<1x8x128xf32>
    %33 = vector.shape_cast %32 : vector<1x8x128xf32> to vector<8x128xf32>
    %34 = vector.shape_cast %31 : vector<8x128xf32> to vector<1x8x128xf32>
    tpu.vector_store %arg5[%c0_18, %c0_19, %c0_20], %34 {strides = array<i32>} : memref<25x8x128xf32, #tpu.memory_space<vmem>>, vector<1x8x128xf32>,
    %c0_21 = arith.constant 0 : index
    %c0_22 = arith.constant 0 : index
    %c0_23 = arith.constant 0 : index
    %35 = vector.load %arg6[%c0_21, %c0_22, %c0_23] : memref<25x8x128xf32, #tpu.memory_space<vmem>>, vector<1x8x128xf32>
    %36 = vector.shape_cast %35 : vector<1x8x128xf32> to vector<8x128xf32>
    %37 = vector.shape_cast %27 : vector<8x128xf32> to vector<1x8x128xf32>
    tpu.vector_store %arg6[%c0_21, %c0_22, %c0_23], %37 {strides = array<i32>} : memref<25x8x128xf32, #tpu.memory_space<vmem>>, vector<1x8x128xf32>,
    %cst_24 = arith.constant 0.949999988 : f32
    %38 = vector.broadcast %cst_24 : f32 to vector<8x256xf32>
    %39 = arith.mulf %38, %17 : vector<8x256xf32>
    %40 = arith.addf %39, %5 : vector<8x256xf32>
    %41 = arith.subf %40, %21 : vector<8x256xf32>
    %cst_25 = arith.constant 1.000000e+00 : f32
    %42 = vector.broadcast %cst_25 : f32 to vector<8x256xf32>
    %43 = arith.cmpf ogt, %41, %42 : vector<8x256xf32>
    %44 = arith.extui %43 : vector<8x256xi1> to vector<8x256xi32>
    %45 = arith.sitofp %44 : vector<8x256xi32> to vector<8x256xf32>
    %cst_26 = arith.constant dense<0.000000e+00> : vector<8x128xf32>
    %46 = tpu.matmul %45, %6, %cst_26 {dimension_numbers = #tpu.dot_dimension_numbers<[1], [0], [0], [1], [0, 0, 1, 1], [], []>} : vector<8x256xf32>, vector<256x128xf32>, vector<8x128xf32> -> vector<8x128xf32>
    %47 = arith.addf %46, %9 : vector<8x128xf32>
    %cst_27 = arith.constant 0.949999988 : f32
    %48 = vector.broadcast %cst_27 : f32 to vector<8x128xf32>
    %49 = arith.mulf %48, %27 : vector<8x128xf32>
    %50 = arith.addf %49, %47 : vector<8x128xf32>
    %51 = arith.subf %50, %31 : vector<8x128xf32>
    %cst_28 = arith.constant 1.000000e+00 : f32
    %52 = vector.broadcast %cst_28 : f32 to vector<8x128xf32>
    %53 = arith.cmpf ogt, %51, %52 : vector<8x128xf32>
    %54 = arith.extui %53 : vector<8x128xi1> to vector<8x128xi32>
    %55 = arith.sitofp %54 : vector<8x128xi32> to vector<8x128xf32>
    %c1 = arith.constant 1 : index
    %c0_29 = arith.constant 0 : index
    %c0_30 = arith.constant 0 : index
    %56 = vector.load %arg5[%c1, %c0_29, %c0_30] : memref<25x8x128xf32, #tpu.memory_space<vmem>>, vector<1x8x128xf32>
    %57 = vector.shape_cast %56 : vector<1x8x128xf32> to vector<8x128xf32>
    %58 = vector.shape_cast %55 : vector<8x128xf32> to vector<1x8x128xf32>
    tpu.vector_store %arg5[%c1, %c0_29, %c0_30], %58 {strides = array<i32>} : memref<25x8x128xf32, #tpu.memory_space<vmem>>, vector<1x8x128xf32>,
    %c1_31 = arith.constant 1 : index
    %c0_32 = arith.constant 0 : index
    %c0_33 = arith.constant 0 : index
    %59 = vector.load %arg6[%c1_31, %c0_32, %c0_33] : memref<25x8x128xf32, #tpu.memory_space<vmem>>, vector<1x8x128xf32>
    %60 = vector.shape_cast %59 : vector<1x8x128xf32> to vector<8x128xf32>
    %61 = vector.shape_cast %51 : vector<8x128xf32> to vector<1x8x128xf32>
    tpu.vector_store %arg6[%c1_31, %c0_32, %c0_33], %61 {strides = array<i32>} : memref<25x8x128xf32, #tpu.memory_space<vmem>>, vector<1x8x128xf32>,
    %cst_34 = arith.constant 0.949999988 : f32
    %62 = vector.broadcast %cst_34 : f32 to vector<8x256xf32>
    %63 = arith.mulf %62, %41 : vector<8x256xf32>
    %64 = arith.addf %63, %5 : vector<8x256xf32>
    %65 = arith.subf %64, %45 : vector<8x256xf32>
    %cst_35 = arith.constant 1.000000e+00 : f32
    %66 = vector.broadcast %cst_35 : f32 to vector<8x256xf32>
    %67 = arith.cmpf ogt, %65, %66 : vector<8x256xf32>
    %68 = arith.extui %67 : vector<8x256xi1> to vector<8x256xi32>
    %69 = arith.sitofp %68 : vector<8x256xi32> to vector<8x256xf32>
    %cst_36 = arith.constant dense<0.000000e+00> : vector<8x128xf32>
    %70 = tpu.matmul %69, %6, %cst_36 {dimension_numbers = #tpu.dot_dimension_numbers<[1], [0], [0], [1], [0, 0, 1, 1], [], []>} : vector<8x256xf32>, vector<256x128xf32>, vector<8x128xf32> -> vector<8x128xf32>
    %71 = arith.addf %70, %9 : vector<8x128xf32>
    %cst_37 = arith.constant 0.949999988 : f32
    %72 = vector.broadcast %cst_37 : f32 to vector<8x128xf32>
    %73 = arith.mulf %72, %51 : vector<8x128xf32>
    %74 = arith.addf %73, %71 : vector<8x128xf32>
    %75 = arith.subf %74, %55 : vector<8x128xf32>
    %cst_38 = arith.constant 1.000000e+00 : f32
    %76 = vector.broadcast %cst_38 : f32 to vector<8x128xf32>
    %77 = arith.cmpf ogt, %75, %76 : vector<8x128xf32>
    %78 = arith.extui %77 : vector<8x128xi1> to vector<8x128xi32>
    %79 = arith.sitofp %78 : vector<8x128xi32> to vector<8x128xf32>
    %c2 = arith.constant 2 : index
    %c0_39 = arith.constant 0 : index
    %c0_40 = arith.constant 0 : index
    %80 = vector.load %arg5[%c2, %c0_39, %c0_40] : memref<25x8x128xf32, #tpu.memory_space<vmem>>, vector<1x8x128xf32>
    %81 = vector.shape_cast %80 : vector<1x8x128xf32> to vector<8x128xf32>
    %82 = vector.shape_cast %79 : vector<8x128xf32> to vector<1x8x128xf32>
    tpu.vector_store %arg5[%c2, %c0_39, %c0_40], %82 {strides = array<i32>} : memref<25x8x128xf32, #tpu.memory_space<vmem>>, vector<1x8x128xf32>,
    %c2_41 = arith.constant 2 : index
    %c0_42 = arith.constant 0 : index
    %c0_43 = arith.constant 0 : index
    %83 = vector.load %arg6[%c2_41, %c0_42, %c0_43] : memref<25x8x128xf32, #tpu.memory_space<vmem>>, vector<1x8x128xf32>
    %84 = vector.shape_cast %83 : vector<1x8x128xf32> to vector<8x128xf32>
    %85 = vector.shape_cast %75 : vector<8x128xf32> to vector<1x8x128xf32>
    tpu.vector_store %arg6[%c2_41, %c0_42, %c0_43], %85 {strides = array<i32>} : memref<25x8x128xf32, #tpu.memory_space<vmem>>, vector<1x8x128xf32>,
    %cst_44 = arith.constant 0.949999988 : f32
    %86 = vector.broadcast %cst_44 : f32 to vector<8x256xf32>
    %87 = arith.mulf %86, %65 : vector<8x256xf32>
    %88 = arith.addf %87, %5 : vector<8x256xf32>
    %89 = arith.subf %88, %69 : vector<8x256xf32>
    %cst_45 = arith.constant 1.000000e+00 : f32
    %90 = vector.broadcast %cst_45 : f32 to vector<8x256xf32>
    %91 = arith.cmpf ogt, %89, %90 : vector<8x256xf32>
    %92 = arith.extui %91 : vector<8x256xi1> to vector<8x256xi32>
    %93 = arith.sitofp %92 : vector<8x256xi32> to vector<8x256xf32>
    %cst_46 = arith.constant dense<0.000000e+00> : vector<8x128xf32>
    %94 = tpu.matmul %93, %6, %cst_46 {dimension_numbers = #tpu.dot_dimension_numbers<[1], [0], [0], [1], [0, 0, 1, 1], [], []>} : vector<8x256xf32>, vector<256x128xf32>, vector<8x128xf32> -> vector<8x128xf32>
    %95 = arith.addf %94, %9 : vector<8x128xf32>
    %cst_47 = arith.constant 0.949999988 : f32
    %96 = vector.broadcast %cst_47 : f32 to vector<8x128xf32>
    %97 = arith.mulf %96, %75 : vector<8x128xf32>
    %98 = arith.addf %97, %95 : vector<8x128xf32>
    %99 = arith.subf %98, %79 : vector<8x128xf32>
    %cst_48 = arith.constant 1.000000e+00 : f32
    %100 = vector.broadcast %cst_48 : f32 to vector<8x128xf32>
    %101 = arith.cmpf ogt, %99, %100 : vector<8x128xf32>
    %102 = arith.extui %101 : vector<8x128xi1> to vector<8x128xi32>
    %103 = arith.sitofp %102 : vector<8x128xi32> to vector<8x128xf32>
    %c3 = arith.constant 3 : index
    %c0_49 = arith.constant 0 : index
    %c0_50 = arith.constant 0 : index
    %104 = vector.load %arg5[%c3, %c0_49, %c0_50] : memref<25x8x128xf32, #tpu.memory_space<vmem>>, vector<1x8x128xf32>
    %105 = vector.shape_cast %104 : vector<1x8x128xf32> to vector<8x128xf32>
    %106 = vector.shape_cast %103 : vector<8x128xf32> to vector<1x8x128xf32>
    tpu.vector_store %arg5[%c3, %c0_49, %c0_50], %106 {strides = array<i32>} : memref<25x8x128xf32, #tpu.memory_space<vmem>>, vector<1x8x128xf32>,
    %c3_51 = arith.constant 3 : index
    %c0_52 = arith.constant 0 : index
    %c0_53 = arith.constant 0 : index
    %107 = vector.load %arg6[%c3_51, %c0_52, %c0_53] : memref<25x8x128xf32, #tpu.memory_space<vmem>>, vector<1x8x128xf32>
    %108 = vector.shape_cast %107 : vector<1x8x128xf32> to vector<8x128xf32>
    %109 = vector.shape_cast %99 : vector<8x128xf32> to vector<1x8x128xf32>
    tpu.vector_store %arg6[%c3_51, %c0_52, %c0_53], %109 {strides = array<i32>} : memref<25x8x128xf32, #tpu.memory_space<vmem>>, vector<1x8x128xf32>,
    %cst_54 = arith.constant 0.949999988 : f32
    %110 = vector.broadcast %cst_54 : f32 to vector<8x256xf32>
    %111 = arith.mulf %110, %89 : vector<8x256xf32>
    %112 = arith.addf %111, %5 : vector<8x256xf32>
    %113 = arith.subf %112, %93 : vector<8x256xf32>
    %cst_55 = arith.constant 1.000000e+00 : f32
    %114 = vector.broadcast %cst_55 : f32 to vector<8x256xf32>
    %115 = arith.cmpf ogt, %113, %114 : vector<8x256xf32>
    %116 = arith.extui %115 : vector<8x256xi1> to vector<8x256xi32>
    %117 = arith.sitofp %116 : vector<8x256xi32> to vector<8x256xf32>
    %cst_56 = arith.constant dense<0.000000e+00> : vector<8x128xf32>
    %118 = tpu.matmul %117, %6, %cst_56 {dimension_numbers = #tpu.dot_dimension_numbers<[1], [0], [0], [1], [0, 0, 1, 1], [], []>} : vector<8x256xf32>, vector<256x128xf32>, vector<8x128xf32> -> vector<8x128xf32>
    %119 = arith.addf %118, %9 : vector<8x128xf32>
    %cst_57 = arith.constant 0.949999988 : f32
    %120 = vector.broadcast %cst_57 : f32 to vector<8x128xf32>
    %121 = arith.mulf %120, %99 : vector<8x128xf32>
    %122 = arith.addf %121, %119 : vector<8x128xf32>
    %123 = arith.subf %122, %103 : vector<8x128xf32>
    %cst_58 = arith.constant 1.000000e+00 : f32
    %124 = vector.broadcast %cst_58 : f32 to vector<8x128xf32>
    %125 = arith.cmpf ogt, %123, %124 : vector<8x128xf32>
    %126 = arith.extui %125 : vector<8x128xi1> to vector<8x128xi32>
    %127 = arith.sitofp %126 : vector<8x128xi32> to vector<8x128xf32>
    %c4 = arith.constant 4 : index
    %c0_59 = arith.constant 0 : index
    %c0_60 = arith.constant 0 : index
    %128 = vector.load %arg5[%c4, %c0_59, %c0_60] : memref<25x8x128xf32, #tpu.memory_space<vmem>>, vector<1x8x128xf32>
    %129 = vector.shape_cast %128 : vector<1x8x128xf32> to vector<8x128xf32>
    %130 = vector.shape_cast %127 : vector<8x128xf32> to vector<1x8x128xf32>
    tpu.vector_store %arg5[%c4, %c0_59, %c0_60], %130 {strides = array<i32>} : memref<25x8x128xf32, #tpu.memory_space<vmem>>, vector<1x8x128xf32>,
    %c4_61 = arith.constant 4 : index
    %c0_62 = arith.constant 0 : index
    %c0_63 = arith.constant 0 : index
    %131 = vector.load %arg6[%c4_61, %c0_62, %c0_63] : memref<25x8x128xf32, #tpu.memory_space<vmem>>, vector<1x8x128xf32>
    %132 = vector.shape_cast %131 : vector<1x8x128xf32> to vector<8x128xf32>
    %133 = vector.shape_cast %123 : vector<8x128xf32> to vector<1x8x128xf32>
    tpu.vector_store %arg6[%c4_61, %c0_62, %c0_63], %133 {strides = array<i32>} : memref<25x8x128xf32, #tpu.memory_space<vmem>>, vector<1x8x128xf32>,
    %cst_64 = arith.constant 0.949999988 : f32
    %134 = vector.broadcast %cst_64 : f32 to vector<8x256xf32>
    %135 = arith.mulf %134, %113 : vector<8x256xf32>
    %136 = arith.addf %135, %5 : vector<8x256xf32>
    %137 = arith.subf %136, %117 : vector<8x256xf32>
    %cst_65 = arith.constant 1.000000e+00 : f32
    %138 = vector.broadcast %cst_65 : f32 to vector<8x256xf32>
    %139 = arith.cmpf ogt, %137, %138 : vector<8x256xf32>
    %140 = arith.extui %139 : vector<8x256xi1> to vector<8x256xi32>
    %141 = arith.sitofp %140 : vector<8x256xi32> to vector<8x256xf32>
    %cst_66 = arith.constant dense<0.000000e+00> : vector<8x128xf32>
    %142 = tpu.matmul %141, %6, %cst_66 {dimension_numbers = #tpu.dot_dimension_numbers<[1], [0], [0], [1], [0, 0, 1, 1], [], []>} : vector<8x256xf32>, vector<256x128xf32>, vector<8x128xf32> -> vector<8x128xf32>
    %143 = arith.addf %142, %9 : vector<8x128xf32>
    %cst_67 = arith.constant 0.949999988 : f32
    %144 = vector.broadcast %cst_67 : f32 to vector<8x128xf32>
    %145 = arith.mulf %144, %123 : vector<8x128xf32>
    %146 = arith.addf %145, %143 : vector<8x128xf32>
    %147 = arith.subf %146, %127 : vector<8x128xf32>
    %cst_68 = arith.constant 1.000000e+00 : f32
    %148 = vector.broadcast %cst_68 : f32 to vector<8x128xf32>
    %149 = arith.cmpf ogt, %147, %148 : vector<8x128xf32>
    %150 = arith.extui %149 : vector<8x128xi1> to vector<8x128xi32>
    %151 = arith.sitofp %150 : vector<8x128xi32> to vector<8x128xf32>
    %c5 = arith.constant 5 : index
    %c0_69 = arith.constant 0 : index
    %c0_70 = arith.constant 0 : index
    %152 = vector.load %arg5[%c5, %c0_69, %c0_70] : memref<25x8x128xf32, #tpu.memory_space<vmem>>, vector<1x8x128xf32>
    %153 = vector.shape_cast %152 : vector<1x8x128xf32> to vector<8x128xf32>
    %154 = vector.shape_cast %151 : vector<8x128xf32> to vector<1x8x128xf32>
    tpu.vector_store %arg5[%c5, %c0_69, %c0_70], %154 {strides = array<i32>} : memref<25x8x128xf32, #tpu.memory_space<vmem>>, vector<1x8x128xf32>,
    %c5_71 = arith.constant 5 : index
    %c0_72 = arith.constant 0 : index
    %c0_73 = arith.constant 0 : index
    %155 = vector.load %arg6[%c5_71, %c0_72, %c0_73] : memref<25x8x128xf32, #tpu.memory_space<vmem>>, vector<1x8x128xf32>
    %156 = vector.shape_cast %155 : vector<1x8x128xf32> to vector<8x128xf32>
    %157 = vector.shape_cast %147 : vector<8x128xf32> to vector<1x8x128xf32>
    tpu.vector_store %arg6[%c5_71, %c0_72, %c0_73], %157 {strides = array<i32>} : memref<25x8x128xf32, #tpu.memory_space<vmem>>, vector<1x8x128xf32>,
    %cst_74 = arith.constant 0.949999988 : f32
    %158 = vector.broadcast %cst_74 : f32 to vector<8x256xf32>
    %159 = arith.mulf %158, %137 : vector<8x256xf32>
    %160 = arith.addf %159, %5 : vector<8x256xf32>
    %161 = arith.subf %160, %141 : vector<8x256xf32>
    %cst_75 = arith.constant 1.000000e+00 : f32
    %162 = vector.broadcast %cst_75 : f32 to vector<8x256xf32>
    %163 = arith.cmpf ogt, %161, %162 : vector<8x256xf32>
    %164 = arith.extui %163 : vector<8x256xi1> to vector<8x256xi32>
    %165 = arith.sitofp %164 : vector<8x256xi32> to vector<8x256xf32>
    %cst_76 = arith.constant dense<0.000000e+00> : vector<8x128xf32>
    %166 = tpu.matmul %165, %6, %cst_76 {dimension_numbers = #tpu.dot_dimension_numbers<[1], [0], [0], [1], [0, 0, 1, 1], [], []>} : vector<8x256xf32>, vector<256x128xf32>, vector<8x128xf32> -> vector<8x128xf32>
    %167 = arith.addf %166, %9 : vector<8x128xf32>
    %cst_77 = arith.constant 0.949999988 : f32
    %168 = vector.broadcast %cst_77 : f32 to vector<8x128xf32>
    %169 = arith.mulf %168, %147 : vector<8x128xf32>
    %170 = arith.addf %169, %167 : vector<8x128xf32>
    %171 = arith.subf %170, %151 : vector<8x128xf32>
    %cst_78 = arith.constant 1.000000e+00 : f32
    %172 = vector.broadcast %cst_78 : f32 to vector<8x128xf32>
    %173 = arith.cmpf ogt, %171, %172 : vector<8x128xf32>
    %174 = arith.extui %173 : vector<8x128xi1> to vector<8x128xi32>
    %175 = arith.sitofp %174 : vector<8x128xi32> to vector<8x128xf32>
    %c6 = arith.constant 6 : index
    %c0_79 = arith.constant 0 : index
    %c0_80 = arith.constant 0 : index
    %176 = vector.load %arg5[%c6, %c0_79, %c0_80] : memref<25x8x128xf32, #tpu.memory_space<vmem>>, vector<1x8x128xf32>
    %177 = vector.shape_cast %176 : vector<1x8x128xf32> to vector<8x128xf32>
    %178 = vector.shape_cast %175 : vector<8x128xf32> to vector<1x8x128xf32>
    tpu.vector_store %arg5[%c6, %c0_79, %c0_80], %178 {strides = array<i32>} : memref<25x8x128xf32, #tpu.memory_space<vmem>>, vector<1x8x128xf32>,
    %c6_81 = arith.constant 6 : index
    %c0_82 = arith.constant 0 : index
    %c0_83 = arith.constant 0 : index
    %179 = vector.load %arg6[%c6_81, %c0_82, %c0_83] : memref<25x8x128xf32, #tpu.memory_space<vmem>>, vector<1x8x128xf32>
    %180 = vector.shape_cast %179 : vector<1x8x128xf32> to vector<8x128xf32>
    %181 = vector.shape_cast %171 : vector<8x128xf32> to vector<1x8x128xf32>
    tpu.vector_store %arg6[%c6_81, %c0_82, %c0_83], %181 {strides = array<i32>} : memref<25x8x128xf32, #tpu.memory_space<vmem>>, vector<1x8x128xf32>,
    %cst_84 = arith.constant 0.949999988 : f32
    %182 = vector.broadcast %cst_84 : f32 to vector<8x256xf32>
    %183 = arith.mulf %182, %161 : vector<8x256xf32>
    %184 = arith.addf %183, %5 : vector<8x256xf32>
    %185 = arith.subf %184, %165 : vector<8x256xf32>
    %cst_85 = arith.constant 1.000000e+00 : f32
    %186 = vector.broadcast %cst_85 : f32 to vector<8x256xf32>
    %187 = arith.cmpf ogt, %185, %186 : vector<8x256xf32>
    %188 = arith.extui %187 : vector<8x256xi1> to vector<8x256xi32>
    %189 = arith.sitofp %188 : vector<8x256xi32> to vector<8x256xf32>
    %cst_86 = arith.constant dense<0.000000e+00> : vector<8x128xf32>
    %190 = tpu.matmul %189, %6, %cst_86 {dimension_numbers = #tpu.dot_dimension_numbers<[1], [0], [0], [1], [0, 0, 1, 1], [], []>} : vector<8x256xf32>, vector<256x128xf32>, vector<8x128xf32> -> vector<8x128xf32>
    %191 = arith.addf %190, %9 : vector<8x128xf32>
    %cst_87 = arith.constant 0.949999988 : f32
    %192 = vector.broadcast %cst_87 : f32 to vector<8x128xf32>
    %193 = arith.mulf %192, %171 : vector<8x128xf32>
    %194 = arith.addf %193, %191 : vector<8x128xf32>
    %195 = arith.subf %194, %175 : vector<8x128xf32>
    %cst_88 = arith.constant 1.000000e+00 : f32
    %196 = vector.broadcast %cst_88 : f32 to vector<8x128xf32>
    %197 = arith.cmpf ogt, %195, %196 : vector<8x128xf32>
    %198 = arith.extui %197 : vector<8x128xi1> to vector<8x128xi32>
    %199 = arith.sitofp %198 : vector<8x128xi32> to vector<8x128xf32>
    %c7 = arith.constant 7 : index
    %c0_89 = arith.constant 0 : index
    %c0_90 = arith.constant 0 : index
    %200 = vector.load %arg5[%c7, %c0_89, %c0_90] : memref<25x8x128xf32, #tpu.memory_space<vmem>>, vector<1x8x128xf32>
    %201 = vector.shape_cast %200 : vector<1x8x128xf32> to vector<8x128xf32>
    %202 = vector.shape_cast %199 : vector<8x128xf32> to vector<1x8x128xf32>
    tpu.vector_store %arg5[%c7, %c0_89, %c0_90], %202 {strides = array<i32>} : memref<25x8x128xf32, #tpu.memory_space<vmem>>, vector<1x8x128xf32>,
    %c7_91 = arith.constant 7 : index
    %c0_92 = arith.constant 0 : index
    %c0_93 = arith.constant 0 : index
    %203 = vector.load %arg6[%c7_91, %c0_92, %c0_93] : memref<25x8x128xf32, #tpu.memory_space<vmem>>, vector<1x8x128xf32>
    %204 = vector.shape_cast %203 : vector<1x8x128xf32> to vector<8x128xf32>
    %205 = vector.shape_cast %195 : vector<8x128xf32> to vector<1x8x128xf32>
    tpu.vector_store %arg6[%c7_91, %c0_92, %c0_93], %205 {strides = array<i32>} : memref<25x8x128xf32, #tpu.memory_space<vmem>>, vector<1x8x128xf32>,
    %cst_94 = arith.constant 0.949999988 : f32
    %206 = vector.broadcast %cst_94 : f32 to vector<8x256xf32>
    %207 = arith.mulf %206, %185 : vector<8x256xf32>
    %208 = arith.addf %207, %5 : vector<8x256xf32>
    %209 = arith.subf %208, %189 : vector<8x256xf32>
    %cst_95 = arith.constant 1.000000e+00 : f32
    %210 = vector.broadcast %cst_95 : f32 to vector<8x256xf32>
    %211 = arith.cmpf ogt, %209, %210 : vector<8x256xf32>
    %212 = arith.extui %211 : vector<8x256xi1> to vector<8x256xi32>
    %213 = arith.sitofp %212 : vector<8x256xi32> to vector<8x256xf32>
    %cst_96 = arith.constant dense<0.000000e+00> : vector<8x128xf32>
    %214 = tpu.matmul %213, %6, %cst_96 {dimension_numbers = #tpu.dot_dimension_numbers<[1], [0], [0], [1], [0, 0, 1, 1], [], []>} : vector<8x256xf32>, vector<256x128xf32>, vector<8x128xf32> -> vector<8x128xf32>
    %215 = arith.addf %214, %9 : vector<8x128xf32>
    %cst_97 = arith.constant 0.949999988 : f32
    %216 = vector.broadcast %cst_97 : f32 to vector<8x128xf32>
    %217 = arith.mulf %216, %195 : vector<8x128xf32>
    %218 = arith.addf %217, %215 : vector<8x128xf32>
    %219 = arith.subf %218, %199 : vector<8x128xf32>
    %cst_98 = arith.constant 1.000000e+00 : f32
    %220 = vector.broadcast %cst_98 : f32 to vector<8x128xf32>
    %221 = arith.cmpf ogt, %219, %220 : vector<8x128xf32>
    %222 = arith.extui %221 : vector<8x128xi1> to vector<8x128xi32>
    %223 = arith.sitofp %222 : vector<8x128xi32> to vector<8x128xf32>
    %c8 = arith.constant 8 : index
    %c0_99 = arith.constant 0 : index
    %c0_100 = arith.constant 0 : index
    %224 = vector.load %arg5[%c8, %c0_99, %c0_100] : memref<25x8x128xf32, #tpu.memory_space<vmem>>, vector<1x8x128xf32>
    %225 = vector.shape_cast %224 : vector<1x8x128xf32> to vector<8x128xf32>
    %226 = vector.shape_cast %223 : vector<8x128xf32> to vector<1x8x128xf32>
    tpu.vector_store %arg5[%c8, %c0_99, %c0_100], %226 {strides = array<i32>} : memref<25x8x128xf32, #tpu.memory_space<vmem>>, vector<1x8x128xf32>,
    %c8_101 = arith.constant 8 : index
    %c0_102 = arith.constant 0 : index
    %c0_103 = arith.constant 0 : index
    %227 = vector.load %arg6[%c8_101, %c0_102, %c0_103] : memref<25x8x128xf32, #tpu.memory_space<vmem>>, vector<1x8x128xf32>
    %228 = vector.shape_cast %227 : vector<1x8x128xf32> to vector<8x128xf32>
    %229 = vector.shape_cast %219 : vector<8x128xf32> to vector<1x8x128xf32>
    tpu.vector_store %arg6[%c8_101, %c0_102, %c0_103], %229 {strides = array<i32>} : memref<25x8x128xf32, #tpu.memory_space<vmem>>, vector<1x8x128xf32>,
    %cst_104 = arith.constant 0.949999988 : f32
    %230 = vector.broadcast %cst_104 : f32 to vector<8x256xf32>
    %231 = arith.mulf %230, %209 : vector<8x256xf32>
    %232 = arith.addf %231, %5 : vector<8x256xf32>
    %233 = arith.subf %232, %213 : vector<8x256xf32>
    %cst_105 = arith.constant 1.000000e+00 : f32
    %234 = vector.broadcast %cst_105 : f32 to vector<8x256xf32>
    %235 = arith.cmpf ogt, %233, %234 : vector<8x256xf32>
    %236 = arith.extui %235 : vector<8x256xi1> to vector<8x256xi32>
    %237 = arith.sitofp %236 : vector<8x256xi32> to vector<8x256xf32>
    %cst_106 = arith.constant dense<0.000000e+00> : vector<8x128xf32>
    %238 = tpu.matmul %237, %6, %cst_106 {dimension_numbers = #tpu.dot_dimension_numbers<[1], [0], [0], [1], [0, 0, 1, 1], [], []>} : vector<8x256xf32>, vector<256x128xf32>, vector<8x128xf32> -> vector<8x128xf32>
    %239 = arith.addf %238, %9 : vector<8x128xf32>
    %cst_107 = arith.constant 0.949999988 : f32
    %240 = vector.broadcast %cst_107 : f32 to vector<8x128xf32>
    %241 = arith.mulf %240, %219 : vector<8x128xf32>
    %242 = arith.addf %241, %239 : vector<8x128xf32>
    %243 = arith.subf %242, %223 : vector<8x128xf32>
    %cst_108 = arith.constant 1.000000e+00 : f32
    %244 = vector.broadcast %cst_108 : f32 to vector<8x128xf32>
    %245 = arith.cmpf ogt, %243, %244 : vector<8x128xf32>
    %246 = arith.extui %245 : vector<8x128xi1> to vector<8x128xi32>
    %247 = arith.sitofp %246 : vector<8x128xi32> to vector<8x128xf32>
    %c9 = arith.constant 9 : index
    %c0_109 = arith.constant 0 : index
    %c0_110 = arith.constant 0 : index
    %248 = vector.load %arg5[%c9, %c0_109, %c0_110] : memref<25x8x128xf32, #tpu.memory_space<vmem>>, vector<1x8x128xf32>
    %249 = vector.shape_cast %248 : vector<1x8x128xf32> to vector<8x128xf32>
    %250 = vector.shape_cast %247 : vector<8x128xf32> to vector<1x8x128xf32>
    tpu.vector_store %arg5[%c9, %c0_109, %c0_110], %250 {strides = array<i32>} : memref<25x8x128xf32, #tpu.memory_space<vmem>>, vector<1x8x128xf32>,
    %c9_111 = arith.constant 9 : index
    %c0_112 = arith.constant 0 : index
    %c0_113 = arith.constant 0 : index
    %251 = vector.load %arg6[%c9_111, %c0_112, %c0_113] : memref<25x8x128xf32, #tpu.memory_space<vmem>>, vector<1x8x128xf32>
    %252 = vector.shape_cast %251 : vector<1x8x128xf32> to vector<8x128xf32>
    %253 = vector.shape_cast %243 : vector<8x128xf32> to vector<1x8x128xf32>
    tpu.vector_store %arg6[%c9_111, %c0_112, %c0_113], %253 {strides = array<i32>} : memref<25x8x128xf32, #tpu.memory_space<vmem>>, vector<1x8x128xf32>,
    %cst_114 = arith.constant 0.949999988 : f32
    %254 = vector.broadcast %cst_114 : f32 to vector<8x256xf32>
    %255 = arith.mulf %254, %233 : vector<8x256xf32>
    %256 = arith.addf %255, %5 : vector<8x256xf32>
    %257 = arith.subf %256, %237 : vector<8x256xf32>
    %cst_115 = arith.constant 1.000000e+00 : f32
    %258 = vector.broadcast %cst_115 : f32 to vector<8x256xf32>
    %259 = arith.cmpf ogt, %257, %258 : vector<8x256xf32>
    %260 = arith.extui %259 : vector<8x256xi1> to vector<8x256xi32>
    %261 = arith.sitofp %260 : vector<8x256xi32> to vector<8x256xf32>
    %cst_116 = arith.constant dense<0.000000e+00> : vector<8x128xf32>
    %262 = tpu.matmul %261, %6, %cst_116 {dimension_numbers = #tpu.dot_dimension_numbers<[1], [0], [0], [1], [0, 0, 1, 1], [], []>} : vector<8x256xf32>, vector<256x128xf32>, vector<8x128xf32> -> vector<8x128xf32>
    %263 = arith.addf %262, %9 : vector<8x128xf32>
    %cst_117 = arith.constant 0.949999988 : f32
    %264 = vector.broadcast %cst_117 : f32 to vector<8x128xf32>
    %265 = arith.mulf %264, %243 : vector<8x128xf32>
    %266 = arith.addf %265, %263 : vector<8x128xf32>
    %267 = arith.subf %266, %247 : vector<8x128xf32>
    %cst_118 = arith.constant 1.000000e+00 : f32
    %268 = vector.broadcast %cst_118 : f32 to vector<8x128xf32>
    %269 = arith.cmpf ogt, %267, %268 : vector<8x128xf32>
    %270 = arith.extui %269 : vector<8x128xi1> to vector<8x128xi32>
    %271 = arith.sitofp %270 : vector<8x128xi32> to vector<8x128xf32>
    %c10 = arith.constant 10 : index
    %c0_119 = arith.constant 0 : index
    %c0_120 = arith.constant 0 : index
    %272 = vector.load %arg5[%c10, %c0_119, %c0_120] : memref<25x8x128xf32, #tpu.memory_space<vmem>>, vector<1x8x128xf32>
    %273 = vector.shape_cast %272 : vector<1x8x128xf32> to vector<8x128xf32>
    %274 = vector.shape_cast %271 : vector<8x128xf32> to vector<1x8x128xf32>
    tpu.vector_store %arg5[%c10, %c0_119, %c0_120], %274 {strides = array<i32>} : memref<25x8x128xf32, #tpu.memory_space<vmem>>, vector<1x8x128xf32>,
    %c10_121 = arith.constant 10 : index
    %c0_122 = arith.constant 0 : index
    %c0_123 = arith.constant 0 : index
    %275 = vector.load %arg6[%c10_121, %c0_122, %c0_123] : memref<25x8x128xf32, #tpu.memory_space<vmem>>, vector<1x8x128xf32>
    %276 = vector.shape_cast %275 : vector<1x8x128xf32> to vector<8x128xf32>
    %277 = vector.shape_cast %267 : vector<8x128xf32> to vector<1x8x128xf32>
    tpu.vector_store %arg6[%c10_121, %c0_122, %c0_123], %277 {strides = array<i32>} : memref<25x8x128xf32, #tpu.memory_space<vmem>>, vector<1x8x128xf32>,
    %cst_124 = arith.constant 0.949999988 : f32
    %278 = vector.broadcast %cst_124 : f32 to vector<8x256xf32>
    %279 = arith.mulf %278, %257 : vector<8x256xf32>
    %280 = arith.addf %279, %5 : vector<8x256xf32>
    %281 = arith.subf %280, %261 : vector<8x256xf32>
    %cst_125 = arith.constant 1.000000e+00 : f32
    %282 = vector.broadcast %cst_125 : f32 to vector<8x256xf32>
    %283 = arith.cmpf ogt, %281, %282 : vector<8x256xf32>
    %284 = arith.extui %283 : vector<8x256xi1> to vector<8x256xi32>
    %285 = arith.sitofp %284 : vector<8x256xi32> to vector<8x256xf32>
    %cst_126 = arith.constant dense<0.000000e+00> : vector<8x128xf32>
    %286 = tpu.matmul %285, %6, %cst_126 {dimension_numbers = #tpu.dot_dimension_numbers<[1], [0], [0], [1], [0, 0, 1, 1], [], []>} : vector<8x256xf32>, vector<256x128xf32>, vector<8x128xf32> -> vector<8x128xf32>
    %287 = arith.addf %286, %9 : vector<8x128xf32>
    %cst_127 = arith.constant 0.949999988 : f32
    %288 = vector.broadcast %cst_127 : f32 to vector<8x128xf32>
    %289 = arith.mulf %288, %267 : vector<8x128xf32>
    %290 = arith.addf %289, %287 : vector<8x128xf32>
    %291 = arith.subf %290, %271 : vector<8x128xf32>
    %cst_128 = arith.constant 1.000000e+00 : f32
    %292 = vector.broadcast %cst_128 : f32 to vector<8x128xf32>
    %293 = arith.cmpf ogt, %291, %292 : vector<8x128xf32>
    %294 = arith.extui %293 : vector<8x128xi1> to vector<8x128xi32>
    %295 = arith.sitofp %294 : vector<8x128xi32> to vector<8x128xf32>
    %c11 = arith.constant 11 : index
    %c0_129 = arith.constant 0 : index
    %c0_130 = arith.constant 0 : index
    %296 = vector.load %arg5[%c11, %c0_129, %c0_130] : memref<25x8x128xf32, #tpu.memory_space<vmem>>, vector<1x8x128xf32>
    %297 = vector.shape_cast %296 : vector<1x8x128xf32> to vector<8x128xf32>
    %298 = vector.shape_cast %295 : vector<8x128xf32> to vector<1x8x128xf32>
    tpu.vector_store %arg5[%c11, %c0_129, %c0_130], %298 {strides = array<i32>} : memref<25x8x128xf32, #tpu.memory_space<vmem>>, vector<1x8x128xf32>,
    %c11_131 = arith.constant 11 : index
    %c0_132 = arith.constant 0 : index
    %c0_133 = arith.constant 0 : index
    %299 = vector.load %arg6[%c11_131, %c0_132, %c0_133] : memref<25x8x128xf32, #tpu.memory_space<vmem>>, vector<1x8x128xf32>
    %300 = vector.shape_cast %299 : vector<1x8x128xf32> to vector<8x128xf32>
    %301 = vector.shape_cast %291 : vector<8x128xf32> to vector<1x8x128xf32>
    tpu.vector_store %arg6[%c11_131, %c0_132, %c0_133], %301 {strides = array<i32>} : memref<25x8x128xf32, #tpu.memory_space<vmem>>, vector<1x8x128xf32>,
    %cst_134 = arith.constant 0.949999988 : f32
    %302 = vector.broadcast %cst_134 : f32 to vector<8x256xf32>
    %303 = arith.mulf %302, %281 : vector<8x256xf32>
    %304 = arith.addf %303, %5 : vector<8x256xf32>
    %305 = arith.subf %304, %285 : vector<8x256xf32>
    %cst_135 = arith.constant 1.000000e+00 : f32
    %306 = vector.broadcast %cst_135 : f32 to vector<8x256xf32>
    %307 = arith.cmpf ogt, %305, %306 : vector<8x256xf32>
    %308 = arith.extui %307 : vector<8x256xi1> to vector<8x256xi32>
    %309 = arith.sitofp %308 : vector<8x256xi32> to vector<8x256xf32>
    %cst_136 = arith.constant dense<0.000000e+00> : vector<8x128xf32>
    %310 = tpu.matmul %309, %6, %cst_136 {dimension_numbers = #tpu.dot_dimension_numbers<[1], [0], [0], [1], [0, 0, 1, 1], [], []>} : vector<8x256xf32>, vector<256x128xf32>, vector<8x128xf32> -> vector<8x128xf32>
    %311 = arith.addf %310, %9 : vector<8x128xf32>
    %cst_137 = arith.constant 0.949999988 : f32
    %312 = vector.broadcast %cst_137 : f32 to vector<8x128xf32>
    %313 = arith.mulf %312, %291 : vector<8x128xf32>
    %314 = arith.addf %313, %311 : vector<8x128xf32>
    %315 = arith.subf %314, %295 : vector<8x128xf32>
    %cst_138 = arith.constant 1.000000e+00 : f32
    %316 = vector.broadcast %cst_138 : f32 to vector<8x128xf32>
    %317 = arith.cmpf ogt, %315, %316 : vector<8x128xf32>
    %318 = arith.extui %317 : vector<8x128xi1> to vector<8x128xi32>
    %319 = arith.sitofp %318 : vector<8x128xi32> to vector<8x128xf32>
    %c12 = arith.constant 12 : index
    %c0_139 = arith.constant 0 : index
    %c0_140 = arith.constant 0 : index
    %320 = vector.load %arg5[%c12, %c0_139, %c0_140] : memref<25x8x128xf32, #tpu.memory_space<vmem>>, vector<1x8x128xf32>
    %321 = vector.shape_cast %320 : vector<1x8x128xf32> to vector<8x128xf32>
    %322 = vector.shape_cast %319 : vector<8x128xf32> to vector<1x8x128xf32>
    tpu.vector_store %arg5[%c12, %c0_139, %c0_140], %322 {strides = array<i32>} : memref<25x8x128xf32, #tpu.memory_space<vmem>>, vector<1x8x128xf32>,
    %c12_141 = arith.constant 12 : index
    %c0_142 = arith.constant 0 : index
    %c0_143 = arith.constant 0 : index
    %323 = vector.load %arg6[%c12_141, %c0_142, %c0_143] : memref<25x8x128xf32, #tpu.memory_space<vmem>>, vector<1x8x128xf32>
    %324 = vector.shape_cast %323 : vector<1x8x128xf32> to vector<8x128xf32>
    %325 = vector.shape_cast %315 : vector<8x128xf32> to vector<1x8x128xf32>
    tpu.vector_store %arg6[%c12_141, %c0_142, %c0_143], %325 {strides = array<i32>} : memref<25x8x128xf32, #tpu.memory_space<vmem>>, vector<1x8x128xf32>,
    %cst_144 = arith.constant 0.949999988 : f32
    %326 = vector.broadcast %cst_144 : f32 to vector<8x256xf32>
    %327 = arith.mulf %326, %305 : vector<8x256xf32>
    %328 = arith.addf %327, %5 : vector<8x256xf32>
    %329 = arith.subf %328, %309 : vector<8x256xf32>
    %cst_145 = arith.constant 1.000000e+00 : f32
    %330 = vector.broadcast %cst_145 : f32 to vector<8x256xf32>
    %331 = arith.cmpf ogt, %329, %330 : vector<8x256xf32>
    %332 = arith.extui %331 : vector<8x256xi1> to vector<8x256xi32>
    %333 = arith.sitofp %332 : vector<8x256xi32> to vector<8x256xf32>
    %cst_146 = arith.constant dense<0.000000e+00> : vector<8x128xf32>
    %334 = tpu.matmul %333, %6, %cst_146 {dimension_numbers = #tpu.dot_dimension_numbers<[1], [0], [0], [1], [0, 0, 1, 1], [], []>} : vector<8x256xf32>, vector<256x128xf32>, vector<8x128xf32> -> vector<8x128xf32>
    %335 = arith.addf %334, %9 : vector<8x128xf32>
    %cst_147 = arith.constant 0.949999988 : f32
    %336 = vector.broadcast %cst_147 : f32 to vector<8x128xf32>
    %337 = arith.mulf %336, %315 : vector<8x128xf32>
    %338 = arith.addf %337, %335 : vector<8x128xf32>
    %339 = arith.subf %338, %319 : vector<8x128xf32>
    %cst_148 = arith.constant 1.000000e+00 : f32
    %340 = vector.broadcast %cst_148 : f32 to vector<8x128xf32>
    %341 = arith.cmpf ogt, %339, %340 : vector<8x128xf32>
    %342 = arith.extui %341 : vector<8x128xi1> to vector<8x128xi32>
    %343 = arith.sitofp %342 : vector<8x128xi32> to vector<8x128xf32>
    %c13 = arith.constant 13 : index
    %c0_149 = arith.constant 0 : index
    %c0_150 = arith.constant 0 : index
    %344 = vector.load %arg5[%c13, %c0_149, %c0_150] : memref<25x8x128xf32, #tpu.memory_space<vmem>>, vector<1x8x128xf32>
    %345 = vector.shape_cast %344 : vector<1x8x128xf32> to vector<8x128xf32>
    %346 = vector.shape_cast %343 : vector<8x128xf32> to vector<1x8x128xf32>
    tpu.vector_store %arg5[%c13, %c0_149, %c0_150], %346 {strides = array<i32>} : memref<25x8x128xf32, #tpu.memory_space<vmem>>, vector<1x8x128xf32>,
    %c13_151 = arith.constant 13 : index
    %c0_152 = arith.constant 0 : index
    %c0_153 = arith.constant 0 : index
    %347 = vector.load %arg6[%c13_151, %c0_152, %c0_153] : memref<25x8x128xf32, #tpu.memory_space<vmem>>, vector<1x8x128xf32>
    %348 = vector.shape_cast %347 : vector<1x8x128xf32> to vector<8x128xf32>
    %349 = vector.shape_cast %339 : vector<8x128xf32> to vector<1x8x128xf32>
    tpu.vector_store %arg6[%c13_151, %c0_152, %c0_153], %349 {strides = array<i32>} : memref<25x8x128xf32, #tpu.memory_space<vmem>>, vector<1x8x128xf32>,
    %cst_154 = arith.constant 0.949999988 : f32
    %350 = vector.broadcast %cst_154 : f32 to vector<8x256xf32>
    %351 = arith.mulf %350, %329 : vector<8x256xf32>
    %352 = arith.addf %351, %5 : vector<8x256xf32>
    %353 = arith.subf %352, %333 : vector<8x256xf32>
    %cst_155 = arith.constant 1.000000e+00 : f32
    %354 = vector.broadcast %cst_155 : f32 to vector<8x256xf32>
    %355 = arith.cmpf ogt, %353, %354 : vector<8x256xf32>
    %356 = arith.extui %355 : vector<8x256xi1> to vector<8x256xi32>
    %357 = arith.sitofp %356 : vector<8x256xi32> to vector<8x256xf32>
    %cst_156 = arith.constant dense<0.000000e+00> : vector<8x128xf32>
    %358 = tpu.matmul %357, %6, %cst_156 {dimension_numbers = #tpu.dot_dimension_numbers<[1], [0], [0], [1], [0, 0, 1, 1], [], []>} : vector<8x256xf32>, vector<256x128xf32>, vector<8x128xf32> -> vector<8x128xf32>
    %359 = arith.addf %358, %9 : vector<8x128xf32>
    %cst_157 = arith.constant 0.949999988 : f32
    %360 = vector.broadcast %cst_157 : f32 to vector<8x128xf32>
    %361 = arith.mulf %360, %339 : vector<8x128xf32>
    %362 = arith.addf %361, %359 : vector<8x128xf32>
    %363 = arith.subf %362, %343 : vector<8x128xf32>
    %cst_158 = arith.constant 1.000000e+00 : f32
    %364 = vector.broadcast %cst_158 : f32 to vector<8x128xf32>
    %365 = arith.cmpf ogt, %363, %364 : vector<8x128xf32>
    %366 = arith.extui %365 : vector<8x128xi1> to vector<8x128xi32>
    %367 = arith.sitofp %366 : vector<8x128xi32> to vector<8x128xf32>
    %c14 = arith.constant 14 : index
    %c0_159 = arith.constant 0 : index
    %c0_160 = arith.constant 0 : index
    %368 = vector.load %arg5[%c14, %c0_159, %c0_160] : memref<25x8x128xf32, #tpu.memory_space<vmem>>, vector<1x8x128xf32>
    %369 = vector.shape_cast %368 : vector<1x8x128xf32> to vector<8x128xf32>
    %370 = vector.shape_cast %367 : vector<8x128xf32> to vector<1x8x128xf32>
    tpu.vector_store %arg5[%c14, %c0_159, %c0_160], %370 {strides = array<i32>} : memref<25x8x128xf32, #tpu.memory_space<vmem>>, vector<1x8x128xf32>,
    %c14_161 = arith.constant 14 : index
    %c0_162 = arith.constant 0 : index
    %c0_163 = arith.constant 0 : index
    %371 = vector.load %arg6[%c14_161, %c0_162, %c0_163] : memref<25x8x128xf32, #tpu.memory_space<vmem>>, vector<1x8x128xf32>
    %372 = vector.shape_cast %371 : vector<1x8x128xf32> to vector<8x128xf32>
    %373 = vector.shape_cast %363 : vector<8x128xf32> to vector<1x8x128xf32>
    tpu.vector_store %arg6[%c14_161, %c0_162, %c0_163], %373 {strides = array<i32>} : memref<25x8x128xf32, #tpu.memory_space<vmem>>, vector<1x8x128xf32>,
    %cst_164 = arith.constant 0.949999988 : f32
    %374 = vector.broadcast %cst_164 : f32 to vector<8x256xf32>
    %375 = arith.mulf %374, %353 : vector<8x256xf32>
    %376 = arith.addf %375, %5 : vector<8x256xf32>
    %377 = arith.subf %376, %357 : vector<8x256xf32>
    %cst_165 = arith.constant 1.000000e+00 : f32
    %378 = vector.broadcast %cst_165 : f32 to vector<8x256xf32>
    %379 = arith.cmpf ogt, %377, %378 : vector<8x256xf32>
    %380 = arith.extui %379 : vector<8x256xi1> to vector<8x256xi32>
    %381 = arith.sitofp %380 : vector<8x256xi32> to vector<8x256xf32>
    %cst_166 = arith.constant dense<0.000000e+00> : vector<8x128xf32>
    %382 = tpu.matmul %381, %6, %cst_166 {dimension_numbers = #tpu.dot_dimension_numbers<[1], [0], [0], [1], [0, 0, 1, 1], [], []>} : vector<8x256xf32>, vector<256x128xf32>, vector<8x128xf32> -> vector<8x128xf32>
    %383 = arith.addf %382, %9 : vector<8x128xf32>
    %cst_167 = arith.constant 0.949999988 : f32
    %384 = vector.broadcast %cst_167 : f32 to vector<8x128xf32>
    %385 = arith.mulf %384, %363 : vector<8x128xf32>
    %386 = arith.addf %385, %383 : vector<8x128xf32>
    %387 = arith.subf %386, %367 : vector<8x128xf32>
    %cst_168 = arith.constant 1.000000e+00 : f32
    %388 = vector.broadcast %cst_168 : f32 to vector<8x128xf32>
    %389 = arith.cmpf ogt, %387, %388 : vector<8x128xf32>
    %390 = arith.extui %389 : vector<8x128xi1> to vector<8x128xi32>
    %391 = arith.sitofp %390 : vector<8x128xi32> to vector<8x128xf32>
    %c15 = arith.constant 15 : index
    %c0_169 = arith.constant 0 : index
    %c0_170 = arith.constant 0 : index
    %392 = vector.load %arg5[%c15, %c0_169, %c0_170] : memref<25x8x128xf32, #tpu.memory_space<vmem>>, vector<1x8x128xf32>
    %393 = vector.shape_cast %392 : vector<1x8x128xf32> to vector<8x128xf32>
    %394 = vector.shape_cast %391 : vector<8x128xf32> to vector<1x8x128xf32>
    tpu.vector_store %arg5[%c15, %c0_169, %c0_170], %394 {strides = array<i32>} : memref<25x8x128xf32, #tpu.memory_space<vmem>>, vector<1x8x128xf32>,
    %c15_171 = arith.constant 15 : index
    %c0_172 = arith.constant 0 : index
    %c0_173 = arith.constant 0 : index
    %395 = vector.load %arg6[%c15_171, %c0_172, %c0_173] : memref<25x8x128xf32, #tpu.memory_space<vmem>>, vector<1x8x128xf32>
    %396 = vector.shape_cast %395 : vector<1x8x128xf32> to vector<8x128xf32>
    %397 = vector.shape_cast %387 : vector<8x128xf32> to vector<1x8x128xf32>
    tpu.vector_store %arg6[%c15_171, %c0_172, %c0_173], %397 {strides = array<i32>} : memref<25x8x128xf32, #tpu.memory_space<vmem>>, vector<1x8x128xf32>,
    %cst_174 = arith.constant 0.949999988 : f32
    %398 = vector.broadcast %cst_174 : f32 to vector<8x256xf32>
    %399 = arith.mulf %398, %377 : vector<8x256xf32>
    %400 = arith.addf %399, %5 : vector<8x256xf32>
    %401 = arith.subf %400, %381 : vector<8x256xf32>
    %cst_175 = arith.constant 1.000000e+00 : f32
    %402 = vector.broadcast %cst_175 : f32 to vector<8x256xf32>
    %403 = arith.cmpf ogt, %401, %402 : vector<8x256xf32>
    %404 = arith.extui %403 : vector<8x256xi1> to vector<8x256xi32>
    %405 = arith.sitofp %404 : vector<8x256xi32> to vector<8x256xf32>
    %cst_176 = arith.constant dense<0.000000e+00> : vector<8x128xf32>
    %406 = tpu.matmul %405, %6, %cst_176 {dimension_numbers = #tpu.dot_dimension_numbers<[1], [0], [0], [1], [0, 0, 1, 1], [], []>} : vector<8x256xf32>, vector<256x128xf32>, vector<8x128xf32> -> vector<8x128xf32>
    %407 = arith.addf %406, %9 : vector<8x128xf32>
    %cst_177 = arith.constant 0.949999988 : f32
    %408 = vector.broadcast %cst_177 : f32 to vector<8x128xf32>
    %409 = arith.mulf %408, %387 : vector<8x128xf32>
    %410 = arith.addf %409, %407 : vector<8x128xf32>
    %411 = arith.subf %410, %391 : vector<8x128xf32>
    %cst_178 = arith.constant 1.000000e+00 : f32
    %412 = vector.broadcast %cst_178 : f32 to vector<8x128xf32>
    %413 = arith.cmpf ogt, %411, %412 : vector<8x128xf32>
    %414 = arith.extui %413 : vector<8x128xi1> to vector<8x128xi32>
    %415 = arith.sitofp %414 : vector<8x128xi32> to vector<8x128xf32>
    %c16 = arith.constant 16 : index
    %c0_179 = arith.constant 0 : index
    %c0_180 = arith.constant 0 : index
    %416 = vector.load %arg5[%c16, %c0_179, %c0_180] : memref<25x8x128xf32, #tpu.memory_space<vmem>>, vector<1x8x128xf32>
    %417 = vector.shape_cast %416 : vector<1x8x128xf32> to vector<8x128xf32>
    %418 = vector.shape_cast %415 : vector<8x128xf32> to vector<1x8x128xf32>
    tpu.vector_store %arg5[%c16, %c0_179, %c0_180], %418 {strides = array<i32>} : memref<25x8x128xf32, #tpu.memory_space<vmem>>, vector<1x8x128xf32>,
    %c16_181 = arith.constant 16 : index
    %c0_182 = arith.constant 0 : index
    %c0_183 = arith.constant 0 : index
    %419 = vector.load %arg6[%c16_181, %c0_182, %c0_183] : memref<25x8x128xf32, #tpu.memory_space<vmem>>, vector<1x8x128xf32>
    %420 = vector.shape_cast %419 : vector<1x8x128xf32> to vector<8x128xf32>
    %421 = vector.shape_cast %411 : vector<8x128xf32> to vector<1x8x128xf32>
    tpu.vector_store %arg6[%c16_181, %c0_182, %c0_183], %421 {strides = array<i32>} : memref<25x8x128xf32, #tpu.memory_space<vmem>>, vector<1x8x128xf32>,
    %cst_184 = arith.constant 0.949999988 : f32
    %422 = vector.broadcast %cst_184 : f32 to vector<8x256xf32>
    %423 = arith.mulf %422, %401 : vector<8x256xf32>
    %424 = arith.addf %423, %5 : vector<8x256xf32>
    %425 = arith.subf %424, %405 : vector<8x256xf32>
    %cst_185 = arith.constant 1.000000e+00 : f32
    %426 = vector.broadcast %cst_185 : f32 to vector<8x256xf32>
    %427 = arith.cmpf ogt, %425, %426 : vector<8x256xf32>
    %428 = arith.extui %427 : vector<8x256xi1> to vector<8x256xi32>
    %429 = arith.sitofp %428 : vector<8x256xi32> to vector<8x256xf32>
    %cst_186 = arith.constant dense<0.000000e+00> : vector<8x128xf32>
    %430 = tpu.matmul %429, %6, %cst_186 {dimension_numbers = #tpu.dot_dimension_numbers<[1], [0], [0], [1], [0, 0, 1, 1], [], []>} : vector<8x256xf32>, vector<256x128xf32>, vector<8x128xf32> -> vector<8x128xf32>
    %431 = arith.addf %430, %9 : vector<8x128xf32>
    %cst_187 = arith.constant 0.949999988 : f32
    %432 = vector.broadcast %cst_187 : f32 to vector<8x128xf32>
    %433 = arith.mulf %432, %411 : vector<8x128xf32>
    %434 = arith.addf %433, %431 : vector<8x128xf32>
    %435 = arith.subf %434, %415 : vector<8x128xf32>
    %cst_188 = arith.constant 1.000000e+00 : f32
    %436 = vector.broadcast %cst_188 : f32 to vector<8x128xf32>
    %437 = arith.cmpf ogt, %435, %436 : vector<8x128xf32>
    %438 = arith.extui %437 : vector<8x128xi1> to vector<8x128xi32>
    %439 = arith.sitofp %438 : vector<8x128xi32> to vector<8x128xf32>
    %c17 = arith.constant 17 : index
    %c0_189 = arith.constant 0 : index
    %c0_190 = arith.constant 0 : index
    %440 = vector.load %arg5[%c17, %c0_189, %c0_190] : memref<25x8x128xf32, #tpu.memory_space<vmem>>, vector<1x8x128xf32>
    %441 = vector.shape_cast %440 : vector<1x8x128xf32> to vector<8x128xf32>
    %442 = vector.shape_cast %439 : vector<8x128xf32> to vector<1x8x128xf32>
    tpu.vector_store %arg5[%c17, %c0_189, %c0_190], %442 {strides = array<i32>} : memref<25x8x128xf32, #tpu.memory_space<vmem>>, vector<1x8x128xf32>,
    %c17_191 = arith.constant 17 : index
    %c0_192 = arith.constant 0 : index
    %c0_193 = arith.constant 0 : index
    %443 = vector.load %arg6[%c17_191, %c0_192, %c0_193] : memref<25x8x128xf32, #tpu.memory_space<vmem>>, vector<1x8x128xf32>
    %444 = vector.shape_cast %443 : vector<1x8x128xf32> to vector<8x128xf32>
    %445 = vector.shape_cast %435 : vector<8x128xf32> to vector<1x8x128xf32>
    tpu.vector_store %arg6[%c17_191, %c0_192, %c0_193], %445 {strides = array<i32>} : memref<25x8x128xf32, #tpu.memory_space<vmem>>, vector<1x8x128xf32>,
    %cst_194 = arith.constant 0.949999988 : f32
    %446 = vector.broadcast %cst_194 : f32 to vector<8x256xf32>
    %447 = arith.mulf %446, %425 : vector<8x256xf32>
    %448 = arith.addf %447, %5 : vector<8x256xf32>
    %449 = arith.subf %448, %429 : vector<8x256xf32>
    %cst_195 = arith.constant 1.000000e+00 : f32
    %450 = vector.broadcast %cst_195 : f32 to vector<8x256xf32>
    %451 = arith.cmpf ogt, %449, %450 : vector<8x256xf32>
    %452 = arith.extui %451 : vector<8x256xi1> to vector<8x256xi32>
    %453 = arith.sitofp %452 : vector<8x256xi32> to vector<8x256xf32>
    %cst_196 = arith.constant dense<0.000000e+00> : vector<8x128xf32>
    %454 = tpu.matmul %453, %6, %cst_196 {dimension_numbers = #tpu.dot_dimension_numbers<[1], [0], [0], [1], [0, 0, 1, 1], [], []>} : vector<8x256xf32>, vector<256x128xf32>, vector<8x128xf32> -> vector<8x128xf32>
    %455 = arith.addf %454, %9 : vector<8x128xf32>
    %cst_197 = arith.constant 0.949999988 : f32
    %456 = vector.broadcast %cst_197 : f32 to vector<8x128xf32>
    %457 = arith.mulf %456, %435 : vector<8x128xf32>
    %458 = arith.addf %457, %455 : vector<8x128xf32>
    %459 = arith.subf %458, %439 : vector<8x128xf32>
    %cst_198 = arith.constant 1.000000e+00 : f32
    %460 = vector.broadcast %cst_198 : f32 to vector<8x128xf32>
    %461 = arith.cmpf ogt, %459, %460 : vector<8x128xf32>
    %462 = arith.extui %461 : vector<8x128xi1> to vector<8x128xi32>
    %463 = arith.sitofp %462 : vector<8x128xi32> to vector<8x128xf32>
    %c18 = arith.constant 18 : index
    %c0_199 = arith.constant 0 : index
    %c0_200 = arith.constant 0 : index
    %464 = vector.load %arg5[%c18, %c0_199, %c0_200] : memref<25x8x128xf32, #tpu.memory_space<vmem>>, vector<1x8x128xf32>
    %465 = vector.shape_cast %464 : vector<1x8x128xf32> to vector<8x128xf32>
    %466 = vector.shape_cast %463 : vector<8x128xf32> to vector<1x8x128xf32>
    tpu.vector_store %arg5[%c18, %c0_199, %c0_200], %466 {strides = array<i32>} : memref<25x8x128xf32, #tpu.memory_space<vmem>>, vector<1x8x128xf32>,
    %c18_201 = arith.constant 18 : index
    %c0_202 = arith.constant 0 : index
    %c0_203 = arith.constant 0 : index
    %467 = vector.load %arg6[%c18_201, %c0_202, %c0_203] : memref<25x8x128xf32, #tpu.memory_space<vmem>>, vector<1x8x128xf32>
    %468 = vector.shape_cast %467 : vector<1x8x128xf32> to vector<8x128xf32>
    %469 = vector.shape_cast %459 : vector<8x128xf32> to vector<1x8x128xf32>
    tpu.vector_store %arg6[%c18_201, %c0_202, %c0_203], %469 {strides = array<i32>} : memref<25x8x128xf32, #tpu.memory_space<vmem>>, vector<1x8x128xf32>,
    %cst_204 = arith.constant 0.949999988 : f32
    %470 = vector.broadcast %cst_204 : f32 to vector<8x256xf32>
    %471 = arith.mulf %470, %449 : vector<8x256xf32>
    %472 = arith.addf %471, %5 : vector<8x256xf32>
    %473 = arith.subf %472, %453 : vector<8x256xf32>
    %cst_205 = arith.constant 1.000000e+00 : f32
    %474 = vector.broadcast %cst_205 : f32 to vector<8x256xf32>
    %475 = arith.cmpf ogt, %473, %474 : vector<8x256xf32>
    %476 = arith.extui %475 : vector<8x256xi1> to vector<8x256xi32>
    %477 = arith.sitofp %476 : vector<8x256xi32> to vector<8x256xf32>
    %cst_206 = arith.constant dense<0.000000e+00> : vector<8x128xf32>
    %478 = tpu.matmul %477, %6, %cst_206 {dimension_numbers = #tpu.dot_dimension_numbers<[1], [0], [0], [1], [0, 0, 1, 1], [], []>} : vector<8x256xf32>, vector<256x128xf32>, vector<8x128xf32> -> vector<8x128xf32>
    %479 = arith.addf %478, %9 : vector<8x128xf32>
    %cst_207 = arith.constant 0.949999988 : f32
    %480 = vector.broadcast %cst_207 : f32 to vector<8x128xf32>
    %481 = arith.mulf %480, %459 : vector<8x128xf32>
    %482 = arith.addf %481, %479 : vector<8x128xf32>
    %483 = arith.subf %482, %463 : vector<8x128xf32>
    %cst_208 = arith.constant 1.000000e+00 : f32
    %484 = vector.broadcast %cst_208 : f32 to vector<8x128xf32>
    %485 = arith.cmpf ogt, %483, %484 : vector<8x128xf32>
    %486 = arith.extui %485 : vector<8x128xi1> to vector<8x128xi32>
    %487 = arith.sitofp %486 : vector<8x128xi32> to vector<8x128xf32>
    %c19 = arith.constant 19 : index
    %c0_209 = arith.constant 0 : index
    %c0_210 = arith.constant 0 : index
    %488 = vector.load %arg5[%c19, %c0_209, %c0_210] : memref<25x8x128xf32, #tpu.memory_space<vmem>>, vector<1x8x128xf32>
    %489 = vector.shape_cast %488 : vector<1x8x128xf32> to vector<8x128xf32>
    %490 = vector.shape_cast %487 : vector<8x128xf32> to vector<1x8x128xf32>
    tpu.vector_store %arg5[%c19, %c0_209, %c0_210], %490 {strides = array<i32>} : memref<25x8x128xf32, #tpu.memory_space<vmem>>, vector<1x8x128xf32>,
    %c19_211 = arith.constant 19 : index
    %c0_212 = arith.constant 0 : index
    %c0_213 = arith.constant 0 : index
    %491 = vector.load %arg6[%c19_211, %c0_212, %c0_213] : memref<25x8x128xf32, #tpu.memory_space<vmem>>, vector<1x8x128xf32>
    %492 = vector.shape_cast %491 : vector<1x8x128xf32> to vector<8x128xf32>
    %493 = vector.shape_cast %483 : vector<8x128xf32> to vector<1x8x128xf32>
    tpu.vector_store %arg6[%c19_211, %c0_212, %c0_213], %493 {strides = array<i32>} : memref<25x8x128xf32, #tpu.memory_space<vmem>>, vector<1x8x128xf32>,
    %cst_214 = arith.constant 0.949999988 : f32
    %494 = vector.broadcast %cst_214 : f32 to vector<8x256xf32>
    %495 = arith.mulf %494, %473 : vector<8x256xf32>
    %496 = arith.addf %495, %5 : vector<8x256xf32>
    %497 = arith.subf %496, %477 : vector<8x256xf32>
    %cst_215 = arith.constant 1.000000e+00 : f32
    %498 = vector.broadcast %cst_215 : f32 to vector<8x256xf32>
    %499 = arith.cmpf ogt, %497, %498 : vector<8x256xf32>
    %500 = arith.extui %499 : vector<8x256xi1> to vector<8x256xi32>
    %501 = arith.sitofp %500 : vector<8x256xi32> to vector<8x256xf32>
    %cst_216 = arith.constant dense<0.000000e+00> : vector<8x128xf32>
    %502 = tpu.matmul %501, %6, %cst_216 {dimension_numbers = #tpu.dot_dimension_numbers<[1], [0], [0], [1], [0, 0, 1, 1], [], []>} : vector<8x256xf32>, vector<256x128xf32>, vector<8x128xf32> -> vector<8x128xf32>
    %503 = arith.addf %502, %9 : vector<8x128xf32>
    %cst_217 = arith.constant 0.949999988 : f32
    %504 = vector.broadcast %cst_217 : f32 to vector<8x128xf32>
    %505 = arith.mulf %504, %483 : vector<8x128xf32>
    %506 = arith.addf %505, %503 : vector<8x128xf32>
    %507 = arith.subf %506, %487 : vector<8x128xf32>
    %cst_218 = arith.constant 1.000000e+00 : f32
    %508 = vector.broadcast %cst_218 : f32 to vector<8x128xf32>
    %509 = arith.cmpf ogt, %507, %508 : vector<8x128xf32>
    %510 = arith.extui %509 : vector<8x128xi1> to vector<8x128xi32>
    %511 = arith.sitofp %510 : vector<8x128xi32> to vector<8x128xf32>
    %c20 = arith.constant 20 : index
    %c0_219 = arith.constant 0 : index
    %c0_220 = arith.constant 0 : index
    %512 = vector.load %arg5[%c20, %c0_219, %c0_220] : memref<25x8x128xf32, #tpu.memory_space<vmem>>, vector<1x8x128xf32>
    %513 = vector.shape_cast %512 : vector<1x8x128xf32> to vector<8x128xf32>
    %514 = vector.shape_cast %511 : vector<8x128xf32> to vector<1x8x128xf32>
    tpu.vector_store %arg5[%c20, %c0_219, %c0_220], %514 {strides = array<i32>} : memref<25x8x128xf32, #tpu.memory_space<vmem>>, vector<1x8x128xf32>,
    %c20_221 = arith.constant 20 : index
    %c0_222 = arith.constant 0 : index
    %c0_223 = arith.constant 0 : index
    %515 = vector.load %arg6[%c20_221, %c0_222, %c0_223] : memref<25x8x128xf32, #tpu.memory_space<vmem>>, vector<1x8x128xf32>
    %516 = vector.shape_cast %515 : vector<1x8x128xf32> to vector<8x128xf32>
    %517 = vector.shape_cast %507 : vector<8x128xf32> to vector<1x8x128xf32>
    tpu.vector_store %arg6[%c20_221, %c0_222, %c0_223], %517 {strides = array<i32>} : memref<25x8x128xf32, #tpu.memory_space<vmem>>, vector<1x8x128xf32>,
    %cst_224 = arith.constant 0.949999988 : f32
    %518 = vector.broadcast %cst_224 : f32 to vector<8x256xf32>
    %519 = arith.mulf %518, %497 : vector<8x256xf32>
    %520 = arith.addf %519, %5 : vector<8x256xf32>
    %521 = arith.subf %520, %501 : vector<8x256xf32>
    %cst_225 = arith.constant 1.000000e+00 : f32
    %522 = vector.broadcast %cst_225 : f32 to vector<8x256xf32>
    %523 = arith.cmpf ogt, %521, %522 : vector<8x256xf32>
    %524 = arith.extui %523 : vector<8x256xi1> to vector<8x256xi32>
    %525 = arith.sitofp %524 : vector<8x256xi32> to vector<8x256xf32>
    %cst_226 = arith.constant dense<0.000000e+00> : vector<8x128xf32>
    %526 = tpu.matmul %525, %6, %cst_226 {dimension_numbers = #tpu.dot_dimension_numbers<[1], [0], [0], [1], [0, 0, 1, 1], [], []>} : vector<8x256xf32>, vector<256x128xf32>, vector<8x128xf32> -> vector<8x128xf32>
    %527 = arith.addf %526, %9 : vector<8x128xf32>
    %cst_227 = arith.constant 0.949999988 : f32
    %528 = vector.broadcast %cst_227 : f32 to vector<8x128xf32>
    %529 = arith.mulf %528, %507 : vector<8x128xf32>
    %530 = arith.addf %529, %527 : vector<8x128xf32>
    %531 = arith.subf %530, %511 : vector<8x128xf32>
    %cst_228 = arith.constant 1.000000e+00 : f32
    %532 = vector.broadcast %cst_228 : f32 to vector<8x128xf32>
    %533 = arith.cmpf ogt, %531, %532 : vector<8x128xf32>
    %534 = arith.extui %533 : vector<8x128xi1> to vector<8x128xi32>
    %535 = arith.sitofp %534 : vector<8x128xi32> to vector<8x128xf32>
    %c21 = arith.constant 21 : index
    %c0_229 = arith.constant 0 : index
    %c0_230 = arith.constant 0 : index
    %536 = vector.load %arg5[%c21, %c0_229, %c0_230] : memref<25x8x128xf32, #tpu.memory_space<vmem>>, vector<1x8x128xf32>
    %537 = vector.shape_cast %536 : vector<1x8x128xf32> to vector<8x128xf32>
    %538 = vector.shape_cast %535 : vector<8x128xf32> to vector<1x8x128xf32>
    tpu.vector_store %arg5[%c21, %c0_229, %c0_230], %538 {strides = array<i32>} : memref<25x8x128xf32, #tpu.memory_space<vmem>>, vector<1x8x128xf32>,
    %c21_231 = arith.constant 21 : index
    %c0_232 = arith.constant 0 : index
    %c0_233 = arith.constant 0 : index
    %539 = vector.load %arg6[%c21_231, %c0_232, %c0_233] : memref<25x8x128xf32, #tpu.memory_space<vmem>>, vector<1x8x128xf32>
    %540 = vector.shape_cast %539 : vector<1x8x128xf32> to vector<8x128xf32>
    %541 = vector.shape_cast %531 : vector<8x128xf32> to vector<1x8x128xf32>
    tpu.vector_store %arg6[%c21_231, %c0_232, %c0_233], %541 {strides = array<i32>} : memref<25x8x128xf32, #tpu.memory_space<vmem>>, vector<1x8x128xf32>,
    %cst_234 = arith.constant 0.949999988 : f32
    %542 = vector.broadcast %cst_234 : f32 to vector<8x256xf32>
    %543 = arith.mulf %542, %521 : vector<8x256xf32>
    %544 = arith.addf %543, %5 : vector<8x256xf32>
    %545 = arith.subf %544, %525 : vector<8x256xf32>
    %cst_235 = arith.constant 1.000000e+00 : f32
    %546 = vector.broadcast %cst_235 : f32 to vector<8x256xf32>
    %547 = arith.cmpf ogt, %545, %546 : vector<8x256xf32>
    %548 = arith.extui %547 : vector<8x256xi1> to vector<8x256xi32>
    %549 = arith.sitofp %548 : vector<8x256xi32> to vector<8x256xf32>
    %cst_236 = arith.constant dense<0.000000e+00> : vector<8x128xf32>
    %550 = tpu.matmul %549, %6, %cst_236 {dimension_numbers = #tpu.dot_dimension_numbers<[1], [0], [0], [1], [0, 0, 1, 1], [], []>} : vector<8x256xf32>, vector<256x128xf32>, vector<8x128xf32> -> vector<8x128xf32>
    %551 = arith.addf %550, %9 : vector<8x128xf32>
    %cst_237 = arith.constant 0.949999988 : f32
    %552 = vector.broadcast %cst_237 : f32 to vector<8x128xf32>
    %553 = arith.mulf %552, %531 : vector<8x128xf32>
    %554 = arith.addf %553, %551 : vector<8x128xf32>
    %555 = arith.subf %554, %535 : vector<8x128xf32>
    %cst_238 = arith.constant 1.000000e+00 : f32
    %556 = vector.broadcast %cst_238 : f32 to vector<8x128xf32>
    %557 = arith.cmpf ogt, %555, %556 : vector<8x128xf32>
    %558 = arith.extui %557 : vector<8x128xi1> to vector<8x128xi32>
    %559 = arith.sitofp %558 : vector<8x128xi32> to vector<8x128xf32>
    %c22 = arith.constant 22 : index
    %c0_239 = arith.constant 0 : index
    %c0_240 = arith.constant 0 : index
    %560 = vector.load %arg5[%c22, %c0_239, %c0_240] : memref<25x8x128xf32, #tpu.memory_space<vmem>>, vector<1x8x128xf32>
    %561 = vector.shape_cast %560 : vector<1x8x128xf32> to vector<8x128xf32>
    %562 = vector.shape_cast %559 : vector<8x128xf32> to vector<1x8x128xf32>
    tpu.vector_store %arg5[%c22, %c0_239, %c0_240], %562 {strides = array<i32>} : memref<25x8x128xf32, #tpu.memory_space<vmem>>, vector<1x8x128xf32>,
    %c22_241 = arith.constant 22 : index
    %c0_242 = arith.constant 0 : index
    %c0_243 = arith.constant 0 : index
    %563 = vector.load %arg6[%c22_241, %c0_242, %c0_243] : memref<25x8x128xf32, #tpu.memory_space<vmem>>, vector<1x8x128xf32>
    %564 = vector.shape_cast %563 : vector<1x8x128xf32> to vector<8x128xf32>
    %565 = vector.shape_cast %555 : vector<8x128xf32> to vector<1x8x128xf32>
    tpu.vector_store %arg6[%c22_241, %c0_242, %c0_243], %565 {strides = array<i32>} : memref<25x8x128xf32, #tpu.memory_space<vmem>>, vector<1x8x128xf32>,
    %cst_244 = arith.constant 0.949999988 : f32
    %566 = vector.broadcast %cst_244 : f32 to vector<8x256xf32>
    %567 = arith.mulf %566, %545 : vector<8x256xf32>
    %568 = arith.addf %567, %5 : vector<8x256xf32>
    %569 = arith.subf %568, %549 : vector<8x256xf32>
    %cst_245 = arith.constant 1.000000e+00 : f32
    %570 = vector.broadcast %cst_245 : f32 to vector<8x256xf32>
    %571 = arith.cmpf ogt, %569, %570 : vector<8x256xf32>
    %572 = arith.extui %571 : vector<8x256xi1> to vector<8x256xi32>
    %573 = arith.sitofp %572 : vector<8x256xi32> to vector<8x256xf32>
    %cst_246 = arith.constant dense<0.000000e+00> : vector<8x128xf32>
    %574 = tpu.matmul %573, %6, %cst_246 {dimension_numbers = #tpu.dot_dimension_numbers<[1], [0], [0], [1], [0, 0, 1, 1], [], []>} : vector<8x256xf32>, vector<256x128xf32>, vector<8x128xf32> -> vector<8x128xf32>
    %575 = arith.addf %574, %9 : vector<8x128xf32>
    %cst_247 = arith.constant 0.949999988 : f32
    %576 = vector.broadcast %cst_247 : f32 to vector<8x128xf32>
    %577 = arith.mulf %576, %555 : vector<8x128xf32>
    %578 = arith.addf %577, %575 : vector<8x128xf32>
    %579 = arith.subf %578, %559 : vector<8x128xf32>
    %cst_248 = arith.constant 1.000000e+00 : f32
    %580 = vector.broadcast %cst_248 : f32 to vector<8x128xf32>
    %581 = arith.cmpf ogt, %579, %580 : vector<8x128xf32>
    %582 = arith.extui %581 : vector<8x128xi1> to vector<8x128xi32>
    %583 = arith.sitofp %582 : vector<8x128xi32> to vector<8x128xf32>
    %c23 = arith.constant 23 : index
    %c0_249 = arith.constant 0 : index
    %c0_250 = arith.constant 0 : index
    %584 = vector.load %arg5[%c23, %c0_249, %c0_250] : memref<25x8x128xf32, #tpu.memory_space<vmem>>, vector<1x8x128xf32>
    %585 = vector.shape_cast %584 : vector<1x8x128xf32> to vector<8x128xf32>
    %586 = vector.shape_cast %583 : vector<8x128xf32> to vector<1x8x128xf32>
    tpu.vector_store %arg5[%c23, %c0_249, %c0_250], %586 {strides = array<i32>} : memref<25x8x128xf32, #tpu.memory_space<vmem>>, vector<1x8x128xf32>,
    %c23_251 = arith.constant 23 : index
    %c0_252 = arith.constant 0 : index
    %c0_253 = arith.constant 0 : index
    %587 = vector.load %arg6[%c23_251, %c0_252, %c0_253] : memref<25x8x128xf32, #tpu.memory_space<vmem>>, vector<1x8x128xf32>
    %588 = vector.shape_cast %587 : vector<1x8x128xf32> to vector<8x128xf32>
    %589 = vector.shape_cast %579 : vector<8x128xf32> to vector<1x8x128xf32>
    tpu.vector_store %arg6[%c23_251, %c0_252, %c0_253], %589 {strides = array<i32>} : memref<25x8x128xf32, #tpu.memory_space<vmem>>, vector<1x8x128xf32>,
    %cst_254 = arith.constant 0.949999988 : f32
    %590 = vector.broadcast %cst_254 : f32 to vector<8x256xf32>
    %591 = arith.mulf %590, %569 : vector<8x256xf32>
    %592 = arith.addf %591, %5 : vector<8x256xf32>
    %593 = arith.subf %592, %573 : vector<8x256xf32>
    %cst_255 = arith.constant 1.000000e+00 : f32
    %594 = vector.broadcast %cst_255 : f32 to vector<8x256xf32>
    %595 = arith.cmpf ogt, %593, %594 : vector<8x256xf32>
    %596 = arith.extui %595 : vector<8x256xi1> to vector<8x256xi32>
    %597 = arith.sitofp %596 : vector<8x256xi32> to vector<8x256xf32>
    %cst_256 = arith.constant dense<0.000000e+00> : vector<8x128xf32>
    %598 = tpu.matmul %597, %6, %cst_256 {dimension_numbers = #tpu.dot_dimension_numbers<[1], [0], [0], [1], [0, 0, 1, 1], [], []>} : vector<8x256xf32>, vector<256x128xf32>, vector<8x128xf32> -> vector<8x128xf32>
    %599 = arith.addf %598, %9 : vector<8x128xf32>
    %cst_257 = arith.constant 0.949999988 : f32
    %600 = vector.broadcast %cst_257 : f32 to vector<8x128xf32>
    %601 = arith.mulf %600, %579 : vector<8x128xf32>
    %602 = arith.addf %601, %599 : vector<8x128xf32>
    %603 = arith.subf %602, %583 : vector<8x128xf32>
    %cst_258 = arith.constant 1.000000e+00 : f32
    %604 = vector.broadcast %cst_258 : f32 to vector<8x128xf32>
    %605 = arith.cmpf ogt, %603, %604 : vector<8x128xf32>
    %606 = arith.extui %605 : vector<8x128xi1> to vector<8x128xi32>
    %607 = arith.sitofp %606 : vector<8x128xi32> to vector<8x128xf32>
    %c24 = arith.constant 24 : index
    %c0_259 = arith.constant 0 : index
    %c0_260 = arith.constant 0 : index
    %608 = vector.load %arg5[%c24, %c0_259, %c0_260] : memref<25x8x128xf32, #tpu.memory_space<vmem>>, vector<1x8x128xf32>
    %609 = vector.shape_cast %608 : vector<1x8x128xf32> to vector<8x128xf32>
    %610 = vector.shape_cast %607 : vector<8x128xf32> to vector<1x8x128xf32>
    tpu.vector_store %arg5[%c24, %c0_259, %c0_260], %610 {strides = array<i32>} : memref<25x8x128xf32, #tpu.memory_space<vmem>>, vector<1x8x128xf32>,
    %c24_261 = arith.constant 24 : index
    %c0_262 = arith.constant 0 : index
    %c0_263 = arith.constant 0 : index
    %611 = vector.load %arg6[%c24_261, %c0_262, %c0_263] : memref<25x8x128xf32, #tpu.memory_space<vmem>>, vector<1x8x128xf32>
    %612 = vector.shape_cast %611 : vector<1x8x128xf32> to vector<8x128xf32>
    %613 = vector.shape_cast %603 : vector<8x128xf32> to vector<1x8x128xf32>
    tpu.vector_store %arg6[%c24_261, %c0_262, %c0_263], %613 {strides = array<i32>} : memref<25x8x128xf32, #tpu.memory_space<vmem>>, vector<1x8x128xf32>,
    return
  }
}

</mosaic_0001>

<llo_original>
// kernel: tpu_custom_call.1
$region0: #{tpu_custom_call.1}
  #allocation0 [shape = 'u32[]', space=smem, size = 0x4, offset = 0x4, fixed_abs, tag = 'smem constant byte address 0x4 - core index']
  #allocation1 [shape = 'u32[144,128]{1,0:T(1,128)}', space=vmem, size = 0x12000, scoped, tag = 'internal scratch']
  %s0 = inlined_call_operand.hbm [shape: f32[8,128], index: 0, kind: input, shape index: {}]
  %s1 = inlined_call_operand.hbm [shape: f32[128,256], index: 1, kind: input, shape index: {}]
  %s2 = inlined_call_operand.vmem [shape: f32[1,256], index: 2, kind: input, shape index: {}]
  %s3 = inlined_call_operand.hbm [shape: f32[256,128], index: 3, kind: input, shape index: {}]
  %s4 = inlined_call_operand.vmem [shape: f32[1,128], index: 4, kind: input, shape index: {}]
  %s5 = inlined_call_operand.hbm [shape: f32[25,8,128], index: 5, kind: output, shape index: {0}]
  %s6 = inlined_call_operand.hbm [shape: f32[25,8,128], index: 6, kind: output, shape index: {1}]
  %7 = xla_tuple %s5, %s6
  %s8 = sld [smem:[#allocation0]]
  $region50: #{tpu_custom_call.1} parent=0
    _
  %s10 = ssub.s32 1, %s8
  %s11 = scalar_select 0, %s10, %s8
  $region1: #{tpu_custom_call.1} parent=0
    #allocation2 [shape = 'u8[4096]{0}', space=vmem, size = 0x1000, scoped, tag = 'input window, operand 0, single buffered']
    #allocation3 [shape = 's32[1]{0}', space=sflag, size = 0x4, scoped, tag = 'scoped memory for tpu_custom_call.1']
    #allocation4 [shape = 's32[1]{0}', space=sflag, size = 0x4, scoped, tag = 'scoped memory for tpu_custom_call.1']
    #allocation5 [shape = 'u8[131072]{0}', space=vmem, size = 0x20000, scoped, tag = 'input window, operand 1, single buffered']
    #allocation6 [shape = 's32[1]{0}', space=sflag, size = 0x4, scoped, tag = 'scoped memory for tpu_custom_call.1']
    #allocation7 [shape = 'u8[131072]{0}', space=vmem, size = 0x20000, scoped, tag = 'input window, operand 3, single buffered']
    #allocation8 [shape = 'u8[102400]{0}', space=vmem, size = 0x19000, scoped, tag = 'output window, operand 0, single buffered']
    #allocation9 [shape = 'u8[102400]{0}', space=vmem, size = 0x19000, scoped, tag = 'output window, operand 1, single buffered']
    #allocation10 [shape = 's32[1]{0}', space=sflag, size = 0x4, scoped, tag = 'scoped memory for tpu_custom_call.1']
    %12 = vsyncpa [#allocation3], 0
    %13 = vsyncpa [#allocation6], 0
    %14 = vsyncpa [#allocation4], 0
    %15 = vsyncpa [#allocation10], 0
    // Predicated region
    $region2: #{tpu_custom_call.1} parent=1 // pred_check
      _
    $region3: #{tpu_custom_call.1} parent=1 // pred_check_branch
      %17 = sbr.rel (0) target = $region5
    $region4: #{tpu_custom_call.1} parent=1 // pred_region
      %s19 = ssub.s32 128, 128
      %20 = vsyncadd [#allocation3], %s19
      %s22 = sshll.u32 [#allocation2], 4
      %s23 = int_to_ptr.vmem [resolvable:$true] %s22
      %25 = dma.hbm_to_vmem [thread:$0]  %s0, 128, %s23, [#allocation3]
    $region5: #{tpu_custom_call.1} parent=1 // pred_fallthru
      _
    // Predicated region
    $region6: #{tpu_custom_call.1} parent=1 // pred_check
      _
    $region7: #{tpu_custom_call.1} parent=1 // pred_check_branch
      %27 = sbr.rel (0) target = $region9
    $region8: #{tpu_custom_call.1} parent=1 // pred_region
      %s29 = ssub.s32 4096, 4096
      %30 = vsyncadd [#allocation6], %s29
      %s31 = sshll.u32 [#allocation5], 4
      %s32 = int_to_ptr.vmem [resolvable:$true] %s31
      %37 = dma.hbm_to_vmem [thread:$0]  %s1, 4096, %s32, [#allocation6], 256, 256, 16
    $region9: #{tpu_custom_call.1} parent=1 // pred_fallthru
      _
    // Predicated region
    $region10: #{tpu_custom_call.1} parent=1 // pred_check
      _
    $region11: #{tpu_custom_call.1} parent=1 // pred_check_branch
      %39 = sbr.rel (0) target = $region13
    $region12: #{tpu_custom_call.1} parent=1 // pred_region
      _
    $region13: #{tpu_custom_call.1} parent=1 // pred_fallthru
      _
    // Predicated region
    $region14: #{tpu_custom_call.1} parent=1 // pred_check
      _
    $region15: #{tpu_custom_call.1} parent=1 // pred_check_branch
      %41 = sbr.rel (0) target = $region17
    $region16: #{tpu_custom_call.1} parent=1 // pred_region
      %s43 = ssub.s32 4096, 4096
      %44 = vsyncadd [#allocation6], %s43
      %s45 = sshll.u32 [#allocation7], 4
      %s46 = int_to_ptr.vmem [resolvable:$true] %s45
      %51 = dma.hbm_to_vmem [thread:$0]  %s3, 4096, %s46, [#allocation6], 128, 128, 8
    $region17: #{tpu_custom_call.1} parent=1 // pred_fallthru
      _
    // Predicated region
    $region18: #{tpu_custom_call.1} parent=1 // pred_check
      _
    $region19: #{tpu_custom_call.1} parent=1 // pred_check_branch
      %53 = sbr.rel (0) target = $region21
    $region20: #{tpu_custom_call.1} parent=1 // pred_region
      _
    $region21: #{tpu_custom_call.1} parent=1 // pred_fallthru
      _
    // Predicated region
    $region22: #{tpu_custom_call.1} parent=1 // pred_check
      _
    $region23: #{tpu_custom_call.1} parent=1 // pred_check_branch
      %55 = sbr.rel (0) target = $region25
    $region24: #{tpu_custom_call.1} parent=1 // pred_region
      %56 = dma.done [#allocation3], 128
    $region25: #{tpu_custom_call.1} parent=1 // pred_fallthru
      _
    // Predicated region
    $region26: #{tpu_custom_call.1} parent=1 // pred_check
      _
    $region27: #{tpu_custom_call.1} parent=1 // pred_check_branch
      %58 = sbr.rel (0) target = $region29
    $region28: #{tpu_custom_call.1} parent=1 // pred_region
      %59 = dma.done [#allocation6], 4096
    $region29: #{tpu_custom_call.1} parent=1 // pred_fallthru
      _
    // Predicated region
    $region30: #{tpu_custom_call.1} parent=1 // pred_check
      _
    $region31: #{tpu_custom_call.1} parent=1 // pred_check_branch
      %61 = sbr.rel (0) target = $region33
    $region32: #{tpu_custom_call.1} parent=1 // pred_region
      %62 = dma.done [#allocation6], 4096
    $region33: #{tpu_custom_call.1} parent=1 // pred_fallthru
      _
    %v63 = vld [vmem:[#allocation2] sm:$0xff]
    %v64 = vld [vmem:[#allocation5] sm:$0xff]
    %v65 = vld [vmem:[#allocation5 + $0x8] sm:$0xff]
    %v66 = vld [vmem:[#allocation5 + $0x10] sm:$0xff]
    %v67 = vld [vmem:[#allocation5 + $0x18] sm:$0xff]
    %v68 = vld [vmem:[#allocation5 + $0x20] sm:$0xff]
    %v69 = vld [vmem:[#allocation5 + $0x28] sm:$0xff]
    %v70 = vld [vmem:[#allocation5 + $0x30] sm:$0xff]
    %v71 = vld [vmem:[#allocation5 + $0x38] sm:$0xff]
    %v72 = vld [vmem:[#allocation5 + $0x40] sm:$0xff]
    %v73 = vld [vmem:[#allocation5 + $0x48] sm:$0xff]
    %v74 = vld [vmem:[#allocation5 + $0x50] sm:$0xff]
    %v75 = vld [vmem:[#allocation5 + $0x58] sm:$0xff]
    %v76 = vld [vmem:[#allocation5 + $0x60] sm:$0xff]
    %v77 = vld [vmem:[#allocation5 + $0x68] sm:$0xff]
    %v78 = vld [vmem:[#allocation5 + $0x70] sm:$0xff]
    %v79 = vld [vmem:[#allocation5 + $0x78] sm:$0xff]
    %v80 = vld [vmem:[#allocation5 + $0x80] sm:$0xff]
    %v81 = vld [vmem:[#allocation5 + $0x88] sm:$0xff]
    %v82 = vld [vmem:[#allocation5 + $0x90] sm:$0xff]
    %v83 = vld [vmem:[#allocation5 + $0x98] sm:$0xff]
    %v84 = vld [vmem:[#allocation5 + $0xa0] sm:$0xff]
    %v85 = vld [vmem:[#allocation5 + $0xa8] sm:$0xff]
    %v86 = vld [vmem:[#allocation5 + $0xb0] sm:$0xff]
    %v87 = vld [vmem:[#allocation5 + $0xb8] sm:$0xff]
    %v88 = vld [vmem:[#allocation5 + $0xc0] sm:$0xff]
    %v89 = vld [vmem:[#allocation5 + $0xc8] sm:$0xff]
    %v90 = vld [vmem:[#allocation5 + $0xd0] sm:$0xff]
    %v91 = vld [vmem:[#allocation5 + $0xd8] sm:$0xff]
    %v92 = vld [vmem:[#allocation5 + $0xe0] sm:$0xff]
    %v93 = vld [vmem:[#allocation5 + $0xe8] sm:$0xff]
    %v94 = vld [vmem:[#allocation5 + $0xf0] sm:$0xff]
    %v95 = vld [vmem:[#allocation5 + $0xf8] sm:$0xff]
    %v96 = vld [vmem:[%s2] sm:$0x3]
    %v98 = vlaneseq
    %v99 = vshrl.u32 %v98, 7
    %v100 = vsub.s32 0, %v99
    %v101 = vrot.slane %v96, %v100
    %v102 = vlaneseq
    %v103 = vshrl.u32 %v102, 7
    %v104 = vsub.s32 1, %v103
    %v105 = vrot.slane %v96, %v104
    %108 = vmatprep.subr.mxu0 %v65
    %109 = vmatpush1.msra.mxu0 %v64
    %110 = vmatprep.subr.mxu0 %v67
    %111 = vmatpush1.msra.mxu0 %v66
    %112 = vmatprep.subr.mxu0 %v69
    %113 = vmatpush1.msra.mxu0 %v68
    %114 = vmatprep.subr.mxu0 %v71
    %115 = vmatpush1.msra.mxu0 %v70
    %116 = vmatprep.subr.mxu0 %v73
    %117 = vmatpush1.msra.mxu0 %v72
    %118 = vmatprep.subr.mxu0 %v75
    %119 = vmatpush1.msra.mxu0 %v74
    %120 = vmatprep.subr.mxu0 %v77
    %121 = vmatpush1.msra.mxu0 %v76
    %122 = vmatprep.subr.mxu0 %v79
    %123 = vmatpush1.msra.mxu0 %v78
    %124 = vmatprep.subr.mxu0 %v81
    %125 = vmatpush1.msra.mxu0 %v80
    %126 = vmatprep.subr.mxu0 %v83
    %127 = vmatpush1.msra.mxu0 %v82
    %128 = vmatprep.subr.mxu0 %v85
    %129 = vmatpush1.msra.mxu0 %v84
    %130 = vmatprep.subr.mxu0 %v87
    %131 = vmatpush1.msra.mxu0 %v86
    %132 = vmatprep.subr.mxu0 %v89
    %133 = vmatpush1.msra.mxu0 %v88
    %134 = vmatprep.subr.mxu0 %v91
    %135 = vmatpush1.msra.mxu0 %v90
    %136 = vmatprep.subr.mxu0 %v93
    %137 = vmatpush1.msra.mxu0 %v92
    %138 = vmatprep.subr.mxu0 %v95
    %139 = vmatpush1.msra.mxu0 %v94
    %140 = vmatprep.subr.mxu0 0.0
    %141 = vmatpush1.msra.mxu0 0.0
    %142 = vmatprep.subr.mxu0 0.0
    %143 = vmatpush1.msra.mxu0 0.0
    %144 = vmatprep.subr.mxu0 0.0
    %145 = vmatpush1.msra.mxu0 0.0
    %146 = vmatprep.subr.mxu0 0.0
    %147 = vmatpush1.msra.mxu0 0.0
    %148 = vmatprep.subr.mxu0 0.0
    %149 = vmatpush1.msra.mxu0 0.0
    %150 = vmatprep.subr.mxu0 0.0
    %151 = vmatpush1.msra.mxu0 0.0
    %152 = vmatprep.subr.mxu0 0.0
    %153 = vmatpush1.msra.mxu0 0.0
    %154 = vmatprep.subr.mxu0 0.0
    %155 = vmatpush1.msra.mxu0 0.0
    %156 = vmatprep.subr.mxu0 0.0
    %157 = vmatpush1.msra.mxu0 0.0
    %158 = vmatprep.subr.mxu0 0.0
    %159 = vmatpush1.msra.mxu0 0.0
    %160 = vmatprep.subr.mxu0 0.0
    %161 = vmatpush1.msra.mxu0 0.0
    %162 = vmatprep.subr.mxu0 0.0
    %163 = vmatpush1.msra.mxu0 0.0
    %164 = vmatprep.subr.mxu0 0.0
    %165 = vmatpush1.msra.mxu0 0.0
    %166 = vmatprep.subr.mxu0 0.0
    %167 = vmatpush1.msra.mxu0 0.0
    %168 = vmatprep.subr.mxu0 0.0
    %169 = vmatpush1.msra.mxu0 0.0
    %170 = vmatprep.subr.mxu0 0.0
    %171 = vmatpush1.msra.mxu0 0.0
    %172 = vmatprep.mubr.f32.mxu0 0.0
    %173 = vmatmul.mubr.f32.gmra.mrb[0].mxu0 %v63
    %v174 = vpop.f32.mrb[0].mxu0
    %v175 = vadd.f32 %v101, %v174
    %v176 = vpop.f32.mrb[0].mxu0
    %v177 = vadd.f32 %v105, %v176
    %178 = vdwg.mxu0
    %v179 = vld [vmem:[#allocation7] sm:$0xff]
    %v180 = vld [vmem:[#allocation7 + $0x8] sm:$0xff]
    %v181 = vld [vmem:[#allocation7 + $0x10] sm:$0xff]
    %v182 = vld [vmem:[#allocation7 + $0x18] sm:$0xff]
    %v183 = vld [vmem:[#allocation7 + $0x20] sm:$0xff]
    %v184 = vld [vmem:[#allocation7 + $0x28] sm:$0xff]
    %v185 = vld [vmem:[#allocation7 + $0x30] sm:$0xff]
    %v186 = vld [vmem:[#allocation7 + $0x38] sm:$0xff]
    %v187 = vld [vmem:[#allocation7 + $0x40] sm:$0xff]
    %v188 = vld [vmem:[#allocation7 + $0x48] sm:$0xff]
    %v189 = vld [vmem:[#allocation7 + $0x50] sm:$0xff]
    %v190 = vld [vmem:[#allocation7 + $0x58] sm:$0xff]
    %v191 = vld [vmem:[#allocation7 + $0x60] sm:$0xff]
    %v192 = vld [vmem:[#allocation7 + $0x68] sm:$0xff]
    %v193 = vld [vmem:[#allocation7 + $0x70] sm:$0xff]
    %v194 = vld [vmem:[#allocation7 + $0x78] sm:$0xff]
    %v195 = vld [vmem:[#allocation7 + $0x80] sm:$0xff]
    %v196 = vld [vmem:[#allocation7 + $0x88] sm:$0xff]
    %v197 = vld [vmem:[#allocation7 + $0x90] sm:$0xff]
    %v198 = vld [vmem:[#allocation7 + $0x98] sm:$0xff]
    %v199 = vld [vmem:[#allocation7 + $0xa0] sm:$0xff]
    %v200 = vld [vmem:[#allocation7 + $0xa8] sm:$0xff]
    %v201 = vld [vmem:[#allocation7 + $0xb0] sm:$0xff]
    %v202 = vld [vmem:[#allocation7 + $0xb8] sm:$0xff]
    %v203 = vld [vmem:[#allocation7 + $0xc0] sm:$0xff]
    %v204 = vld [vmem:[#allocation7 + $0xc8] sm:$0xff]
    %v205 = vld [vmem:[#allocation7 + $0xd0] sm:$0xff]
    %v206 = vld [vmem:[#allocation7 + $0xd8] sm:$0xff]
    %v207 = vld [vmem:[#allocation7 + $0xe0] sm:$0xff]
    %v208 = vld [vmem:[#allocation7 + $0xe8] sm:$0xff]
    %v209 = vld [vmem:[#allocation7 + $0xf0] sm:$0xff]
    %v210 = vld [vmem:[#allocation7 + $0xf8] sm:$0xff]
    %v211 = vld [vmem:[%s4] sm:$0x1]
    %v213 = vlaneseq
    %v214 = vshrl.u32 %v213, 7
    %v215 = vsub.s32 0, %v214
    %v216 = vrot.slane %v211, %v215
    %v218 = vadd.f32 %v175, 0.0
    %v219 = vadd.f32 %v177, 0.0
    %vm220 = vcmp.gt.f32.partialorder %v218, 1.0
    %vm221 = vcmp.gt.f32.partialorder %v219, 1.0
    %v222 = vsel %vm220, 1, 0
    %v223 = vsel %vm221, 1, 0
    %v224 = vcvt.s32.f32 %v222
    %v225 = vcvt.s32.f32 %v223
    %226 = vmatprep.subr.mxu0 0.0
    %227 = vmatpush1.msra.mxu0 %v179
    %228 = vmatprep.subr.mxu0 0.0
    %229 = vmatpush1.msra.mxu0 %v180
    %230 = vmatprep.subr.mxu0 0.0
    %231 = vmatpush1.msra.mxu0 %v181
    %232 = vmatprep.subr.mxu0 0.0
    %233 = vmatpush1.msra.mxu0 %v182
    %234 = vmatprep.subr.mxu0 0.0
    %235 = vmatpush1.msra.mxu0 %v183
    %236 = vmatprep.subr.mxu0 0.0
    %237 = vmatpush1.msra.mxu0 %v184
    %238 = vmatprep.subr.mxu0 0.0
    %239 = vmatpush1.msra.mxu0 %v185
    %240 = vmatprep.subr.mxu0 0.0
    %241 = vmatpush1.msra.mxu0 %v186
    %242 = vmatprep.subr.mxu0 0.0
    %243 = vmatpush1.msra.mxu0 %v187
    %244 = vmatprep.subr.mxu0 0.0
    %245 = vmatpush1.msra.mxu0 %v188
    %246 = vmatprep.subr.mxu0 0.0
    %247 = vmatpush1.msra.mxu0 %v189
    %248 = vmatprep.subr.mxu0 0.0
    %249 = vmatpush1.msra.mxu0 %v190
    %250 = vmatprep.subr.mxu0 0.0
    %251 = vmatpush1.msra.mxu0 %v191
    %252 = vmatprep.subr.mxu0 0.0
    %253 = vmatpush1.msra.mxu0 %v192
    %254 = vmatprep.subr.mxu0 0.0
    %255 = vmatpush1.msra.mxu0 %v193
    %256 = vmatprep.subr.mxu0 0.0
    %257 = vmatpush1.msra.mxu0 %v194
    %258 = vmatprep.subr.mxu0 0.0
    %259 = vmatpush1.msra.mxu0 %v195
    %260 = vmatprep.subr.mxu0 0.0
    %261 = vmatpush1.msra.mxu0 %v196
    %262 = vmatprep.subr.mxu0 0.0
    %263 = vmatpush1.msra.mxu0 %v197
    %264 = vmatprep.subr.mxu0 0.0
    %265 = vmatpush1.msra.mxu0 %v198
    %266 = vmatprep.subr.mxu0 0.0
    %267 = vmatpush1.msra.mxu0 %v199
    %268 = vmatprep.subr.mxu0 0.0
    %269 = vmatpush1.msra.mxu0 %v200
    %270 = vmatprep.subr.mxu0 0.0
    %271 = vmatpush1.msra.mxu0 %v201
    %272 = vmatprep.subr.mxu0 0.0
    %273 = vmatpush1.msra.mxu0 %v202
    %274 = vmatprep.subr.mxu0 0.0
    %275 = vmatpush1.msra.mxu0 %v203
    %276 = vmatprep.subr.mxu0 0.0
    %277 = vmatpush1.msra.mxu0 %v204
    %278 = vmatprep.subr.mxu0 0.0
    %279 = vmatpush1.msra.mxu0 %v205
    %280 = vmatprep.subr.mxu0 0.0
    %281 = vmatpush1.msra.mxu0 %v206
    %282 = vmatprep.subr.mxu0 0.0
    %283 = vmatpush1.msra.mxu0 %v207
    %284 = vmatprep.subr.mxu0 0.0
    %285 = vmatpush1.msra.mxu0 %v208
    %286 = vmatprep.subr.mxu0 0.0
    %287 = vmatpush1.msra.mxu0 %v209
    %288 = vmatprep.subr.mxu0 0.0
    %289 = vmatpush1.msra.mxu0 %v210
    %290 = vmatprep.mubr.f32.mxu0 %v225
    %291 = vmatmul.mubr.f32.gmra.mrb[0].mxu0 %v224
    %v292 = vpop.f32.mrb[0].mxu0
    %v293 = vadd.f32 %v216, %v292
    %v294 = vpop.f32.mrb[0].mxu0
    %295 = vdwg.mxu0
    %v296 = vadd.f32 %v293, 0.0
    %vm297 = vcmp.gt.f32.partialorder %v296, 1.0
    %v298 = vsel %vm297, 1, 0
    %v299 = vcvt.s32.f32 %v298
    %300 = vst [vmem:[#allocation8] sm:$0xff] %v299
    %301 = vst [vmem:[#allocation9] sm:$0xff] %v296
    %v302 = vmul.f32 %v218, 0.95
    %v303 = vmul.f32 %v219, 0.95
    %v304 = vadd.f32 %v302, %v175
    %v305 = vadd.f32 %v303, %v177
    %v306 = vsub.f32 %v304, %v224
    %v307 = vsub.f32 %v305, %v225
    %vm308 = vcmp.gt.f32.partialorder %v306, 1.0
    %vm309 = vcmp.gt.f32.partialorder %v307, 1.0
    %v310 = vsel %vm308, 1, 0
    %v311 = vsel %vm309, 1, 0
    %v312 = vcvt.s32.f32 %v310
    %v313 = vcvt.s32.f32 %v311
    %314 = vmatprep.subr.mxu0 0.0
    %315 = vmatpush1.msra.mxu0 %v179
    %316 = vmatprep.subr.mxu0 0.0
    %317 = vmatpush1.msra.mxu0 %v180
    %318 = vmatprep.subr.mxu0 0.0
    %319 = vmatpush1.msra.mxu0 %v181
    %320 = vmatprep.subr.mxu0 0.0
    %321 = vmatpush1.msra.mxu0 %v182
    %322 = vmatprep.subr.mxu0 0.0
    %323 = vmatpush1.msra.mxu0 %v183
    %324 = vmatprep.subr.mxu0 0.0
    %325 = vmatpush1.msra.mxu0 %v184
    %326 = vmatprep.subr.mxu0 0.0
    %327 = vmatpush1.msra.mxu0 %v185
    %328 = vmatprep.subr.mxu0 0.0
    %329 = vmatpush1.msra.mxu0 %v186
    %330 = vmatprep.subr.mxu0 0.0
    %331 = vmatpush1.msra.mxu0 %v187
    %332 = vmatprep.subr.mxu0 0.0
    %333 = vmatpush1.msra.mxu0 %v188
    %334 = vmatprep.subr.mxu0 0.0
    %335 = vmatpush1.msra.mxu0 %v189
    %336 = vmatprep.subr.mxu0 0.0
    %337 = vmatpush1.msra.mxu0 %v190
    %338 = vmatprep.subr.mxu0 0.0
    %339 = vmatpush1.msra.mxu0 %v191
    %340 = vmatprep.subr.mxu0 0.0
    %341 = vmatpush1.msra.mxu0 %v192
    %342 = vmatprep.subr.mxu0 0.0
    %343 = vmatpush1.msra.mxu0 %v193
    %344 = vmatprep.subr.mxu0 0.0
    %345 = vmatpush1.msra.mxu0 %v194
    %346 = vmatprep.subr.mxu0 0.0
    %347 = vmatpush1.msra.mxu0 %v195
    %348 = vmatprep.subr.mxu0 0.0
    %349 = vmatpush1.msra.mxu0 %v196
    %350 = vmatprep.subr.mxu0 0.0
    %351 = vmatpush1.msra.mxu0 %v197
    %352 = vmatprep.subr.mxu0 0.0
    %353 = vmatpush1.msra.mxu0 %v198
    %354 = vmatprep.subr.mxu0 0.0
    %355 = vmatpush1.msra.mxu0 %v199
    %356 = vmatprep.subr.mxu0 0.0
    %357 = vmatpush1.msra.mxu0 %v200
    %358 = vmatprep.subr.mxu0 0.0
    %359 = vmatpush1.msra.mxu0 %v201
    %360 = vmatprep.subr.mxu0 0.0
    %361 = vmatpush1.msra.mxu0 %v202
    %362 = vmatprep.subr.mxu0 0.0
    %363 = vmatpush1.msra.mxu0 %v203
    %364 = vmatprep.subr.mxu0 0.0
    %365 = vmatpush1.msra.mxu0 %v204
    %366 = vmatprep.subr.mxu0 0.0
    %367 = vmatpush1.msra.mxu0 %v205
    %368 = vmatprep.subr.mxu0 0.0
    %369 = vmatpush1.msra.mxu0 %v206
    %370 = vmatprep.subr.mxu0 0.0
    %371 = vmatpush1.msra.mxu0 %v207
    %372 = vmatprep.subr.mxu0 0.0
    %373 = vmatpush1.msra.mxu0 %v208
    %374 = vmatprep.subr.mxu0 0.0
    %375 = vmatpush1.msra.mxu0 %v209
    %376 = vmatprep.subr.mxu0 0.0
    %377 = vmatpush1.msra.mxu0 %v210
    %378 = vmatprep.mubr.f32.mxu0 %v313
    %379 = vmatmul.mubr.f32.gmra.mrb[0].mxu0 %v312
    %v380 = vpop.f32.mrb[0].mxu0
    %v381 = vadd.f32 %v216, %v380
    %v382 = vpop.f32.mrb[0].mxu0
    %383 = vdwg.mxu0
    %v384 = vmul.f32 %v296, 0.95
    %v385 = vadd.f32 %v384, %v381
    %v386 = vsub.f32 %v385, %v299
    %vm387 = vcmp.gt.f32.partialorder %v386, 1.0
    %v388 = vsel %vm387, 1, 0
    %v389 = vcvt.s32.f32 %v388
    %s390 = scalar_lea.vmem [#allocation8], 8
    %391 = vst [vmem:[%s390] sm:$0xff] %v389
    %s392 = scalar_lea.vmem [#allocation9], 8
    %393 = vst [vmem:[%s392] sm:$0xff] %v386
    %v394 = vmul.f32 %v306, 0.95
    %v395 = vmul.f32 %v307, 0.95
    %v396 = vadd.f32 %v394, %v175
    %v397 = vadd.f32 %v395, %v177
    %v398 = vsub.f32 %v396, %v312
    %v399 = vsub.f32 %v397, %v313
    %vm400 = vcmp.gt.f32.partialorder %v398, 1.0
    %vm401 = vcmp.gt.f32.partialorder %v399, 1.0
    %v402 = vsel %vm400, 1, 0
    %v403 = vsel %vm401, 1, 0
    %v404 = vcvt.s32.f32 %v402
    %v405 = vcvt.s32.f32 %v403
    %406 = vmatprep.subr.mxu0 0.0
    %407 = vmatpush1.msra.mxu0 %v179
    %408 = vmatprep.subr.mxu0 0.0
    %409 = vmatpush1.msra.mxu0 %v180
    %410 = vmatprep.subr.mxu0 0.0
    %411 = vmatpush1.msra.mxu0 %v181
    %412 = vmatprep.subr.mxu0 0.0
    %413 = vmatpush1.msra.mxu0 %v182
    %414 = vmatprep.subr.mxu0 0.0
    %415 = vmatpush1.msra.mxu0 %v183
    %416 = vmatprep.subr.mxu0 0.0
    %417 = vmatpush1.msra.mxu0 %v184
    %418 = vmatprep.subr.mxu0 0.0
    %419 = vmatpush1.msra.mxu0 %v185
    %420 = vmatprep.subr.mxu0 0.0
    %421 = vmatpush1.msra.mxu0 %v186
    %422 = vmatprep.subr.mxu0 0.0
    %423 = vmatpush1.msra.mxu0 %v187
    %424 = vmatprep.subr.mxu0 0.0
    %425 = vmatpush1.msra.mxu0 %v188
    %426 = vmatprep.subr.mxu0 0.0
    %427 = vmatpush1.msra.mxu0 %v189
    %428 = vmatprep.subr.mxu0 0.0
    %429 = vmatpush1.msra.mxu0 %v190
    %430 = vmatprep.subr.mxu0 0.0
    %431 = vmatpush1.msra.mxu0 %v191
    %432 = vmatprep.subr.mxu0 0.0
    %433 = vmatpush1.msra.mxu0 %v192
    %434 = vmatprep.subr.mxu0 0.0
    %435 = vmatpush1.msra.mxu0 %v193
    %436 = vmatprep.subr.mxu0 0.0
    %437 = vmatpush1.msra.mxu0 %v194
    %438 = vmatprep.subr.mxu0 0.0
    %439 = vmatpush1.msra.mxu0 %v195
    %440 = vmatprep.subr.mxu0 0.0
    %441 = vmatpush1.msra.mxu0 %v196
    %442 = vmatprep.subr.mxu0 0.0
    %443 = vmatpush1.msra.mxu0 %v197
    %444 = vmatprep.subr.mxu0 0.0
    %445 = vmatpush1.msra.mxu0 %v198
    %446 = vmatprep.subr.mxu0 0.0
    %447 = vmatpush1.msra.mxu0 %v199
    %448 = vmatprep.subr.mxu0 0.0
    %449 = vmatpush1.msra.mxu0 %v200
    %450 = vmatprep.subr.mxu0 0.0
    %451 = vmatpush1.msra.mxu0 %v201
    %452 = vmatprep.subr.mxu0 0.0
    %453 = vmatpush1.msra.mxu0 %v202
    %454 = vmatprep.subr.mxu0 0.0
    %455 = vmatpush1.msra.mxu0 %v203
    %456 = vmatprep.subr.mxu0 0.0
    %457 = vmatpush1.msra.mxu0 %v204
    %458 = vmatprep.subr.mxu0 0.0
    %459 = vmatpush1.msra.mxu0 %v205
    %460 = vmatprep.subr.mxu0 0.0
    %461 = vmatpush1.msra.mxu0 %v206
    %462 = vmatprep.subr.mxu0 0.0
    %463 = vmatpush1.msra.mxu0 %v207
    %464 = vmatprep.subr.mxu0 0.0
    %465 = vmatpush1.msra.mxu0 %v208
    %466 = vmatprep.subr.mxu0 0.0
    %467 = vmatpush1.msra.mxu0 %v209
    %468 = vmatprep.subr.mxu0 0.0
    %469 = vmatpush1.msra.mxu0 %v210
    %470 = vmatprep.mubr.f32.mxu0 %v405
    %471 = vmatmul.mubr.f32.gmra.mrb[0].mxu0 %v404
    %v472 = vpop.f32.mrb[0].mxu0
    %v473 = vadd.f32 %v216, %v472
    %v474 = vpop.f32.mrb[0].mxu0
    %475 = vdwg.mxu0
    %v476 = vmul.f32 %v386, 0.95
    %v477 = vadd.f32 %v476, %v473
    %v478 = vsub.f32 %v477, %v389
    %vm479 = vcmp.gt.f32.partialorder %v478, 1.0
    %v480 = vsel %vm479, 1, 0
    %v481 = vcvt.s32.f32 %v480
    %s482 = scalar_lea.vmem [#allocation8], 16
    %483 = vst [vmem:[%s482] sm:$0xff] %v481
    %s484 = scalar_lea.vmem [#allocation9], 16
    %485 = vst [vmem:[%s484] sm:$0xff] %v478
    %v486 = vmul.f32 %v398, 0.95
    %v487 = vmul.f32 %v399, 0.95
    %v488 = vadd.f32 %v486, %v175
    %v489 = vadd.f32 %v487, %v177
    %v490 = vsub.f32 %v488, %v404
    %v491 = vsub.f32 %v489, %v405
    %vm492 = vcmp.gt.f32.partialorder %v490, 1.0
    %vm493 = vcmp.gt.f32.partialorder %v491, 1.0
    %v494 = vsel %vm492, 1, 0
    %v495 = vsel %vm493, 1, 0
    %v496 = vcvt.s32.f32 %v494
    %v497 = vcvt.s32.f32 %v495
    %498 = vmatprep.subr.mxu0 0.0
    %499 = vmatpush1.msra.mxu0 %v179
    %500 = vmatprep.subr.mxu0 0.0
    %501 = vmatpush1.msra.mxu0 %v180
    %502 = vmatprep.subr.mxu0 0.0
    %503 = vmatpush1.msra.mxu0 %v181
    %504 = vmatprep.subr.mxu0 0.0
    %505 = vmatpush1.msra.mxu0 %v182
    %506 = vmatprep.subr.mxu0 0.0
    %507 = vmatpush1.msra.mxu0 %v183
    %508 = vmatprep.subr.mxu0 0.0
    %509 = vmatpush1.msra.mxu0 %v184
    %510 = vmatprep.subr.mxu0 0.0
    %511 = vmatpush1.msra.mxu0 %v185
    %512 = vmatprep.subr.mxu0 0.0
    %513 = vmatpush1.msra.mxu0 %v186
    %514 = vmatprep.subr.mxu0 0.0
    %515 = vmatpush1.msra.mxu0 %v187
    %516 = vmatprep.subr.mxu0 0.0
    %517 = vmatpush1.msra.mxu0 %v188
    %518 = vmatprep.subr.mxu0 0.0
    %519 = vmatpush1.msra.mxu0 %v189
    %520 = vmatprep.subr.mxu0 0.0
    %521 = vmatpush1.msra.mxu0 %v190
    %522 = vmatprep.subr.mxu0 0.0
    %523 = vmatpush1.msra.mxu0 %v191
    %524 = vmatprep.subr.mxu0 0.0
    %525 = vmatpush1.msra.mxu0 %v192
    %526 = vmatprep.subr.mxu0 0.0
    %527 = vmatpush1.msra.mxu0 %v193
    %528 = vmatprep.subr.mxu0 0.0
    %529 = vmatpush1.msra.mxu0 %v194
    %530 = vmatprep.subr.mxu0 0.0
    %531 = vmatpush1.msra.mxu0 %v195
    %532 = vmatprep.subr.mxu0 0.0
    %533 = vmatpush1.msra.mxu0 %v196
    %534 = vmatprep.subr.mxu0 0.0
    %535 = vmatpush1.msra.mxu0 %v197
    %536 = vmatprep.subr.mxu0 0.0
    %537 = vmatpush1.msra.mxu0 %v198
    %538 = vmatprep.subr.mxu0 0.0
    %539 = vmatpush1.msra.mxu0 %v199
    %540 = vmatprep.subr.mxu0 0.0
    %541 = vmatpush1.msra.mxu0 %v200
    %542 = vmatprep.subr.mxu0 0.0
    %543 = vmatpush1.msra.mxu0 %v201
    %544 = vmatprep.subr.mxu0 0.0
    %545 = vmatpush1.msra.mxu0 %v202
    %546 = vmatprep.subr.mxu0 0.0
    %547 = vmatpush1.msra.mxu0 %v203
    %548 = vmatprep.subr.mxu0 0.0
    %549 = vmatpush1.msra.mxu0 %v204
    %550 = vmatprep.subr.mxu0 0.0
    %551 = vmatpush1.msra.mxu0 %v205
    %552 = vmatprep.subr.mxu0 0.0
    %553 = vmatpush1.msra.mxu0 %v206
    %554 = vmatprep.subr.mxu0 0.0
    %555 = vmatpush1.msra.mxu0 %v207
    %556 = vmatprep.subr.mxu0 0.0
    %557 = vmatpush1.msra.mxu0 %v208
    %558 = vmatprep.subr.mxu0 0.0
    %559 = vmatpush1.msra.mxu0 %v209
    %560 = vmatprep.subr.mxu0 0.0
    %561 = vmatpush1.msra.mxu0 %v210
    %562 = vmatprep.mubr.f32.mxu0 %v497
    %563 = vmatmul.mubr.f32.gmra.mrb[0].mxu0 %v496
    %v564 = vpop.f32.mrb[0].mxu0
    %v565 = vadd.f32 %v216, %v564
    %v566 = vpop.f32.mrb[0].mxu0
    %567 = vdwg.mxu0
    %v568 = vmul.f32 %v478, 0.95
    %v569 = vadd.f32 %v568, %v565
    %v570 = vsub.f32 %v569, %v481
    %vm571 = vcmp.gt.f32.partialorder %v570, 1.0
    %v572 = vsel %vm571, 1, 0
    %v573 = vcvt.s32.f32 %v572
    %s574 = scalar_lea.vmem [#allocation8], 24
    %575 = vst [vmem:[%s574] sm:$0xff] %v573
    %s576 = scalar_lea.vmem [#allocation9], 24
    %577 = vst [vmem:[%s576] sm:$0xff] %v570
    %v578 = vmul.f32 %v490, 0.95
    %v579 = vmul.f32 %v491, 0.95
    %v580 = vadd.f32 %v578, %v175
    %v581 = vadd.f32 %v579, %v177
    %v582 = vsub.f32 %v580, %v496
    %v583 = vsub.f32 %v581, %v497
    %vm584 = vcmp.gt.f32.partialorder %v582, 1.0
    %vm585 = vcmp.gt.f32.partialorder %v583, 1.0
    %v586 = vsel %vm584, 1, 0
    %v587 = vsel %vm585, 1, 0
    %v588 = vcvt.s32.f32 %v586
    %v589 = vcvt.s32.f32 %v587
    %590 = vmatprep.subr.mxu0 0.0
    %591 = vmatpush1.msra.mxu0 %v179
    %592 = vmatprep.subr.mxu0 0.0
    %593 = vmatpush1.msra.mxu0 %v180
    %594 = vmatprep.subr.mxu0 0.0
    %595 = vmatpush1.msra.mxu0 %v181
    %596 = vmatprep.subr.mxu0 0.0
    %597 = vmatpush1.msra.mxu0 %v182
    %598 = vmatprep.subr.mxu0 0.0
    %599 = vmatpush1.msra.mxu0 %v183
    %600 = vmatprep.subr.mxu0 0.0
    %601 = vmatpush1.msra.mxu0 %v184
    %602 = vmatprep.subr.mxu0 0.0
    %603 = vmatpush1.msra.mxu0 %v185
    %604 = vmatprep.subr.mxu0 0.0
    %605 = vmatpush1.msra.mxu0 %v186
    %606 = vmatprep.subr.mxu0 0.0
    %607 = vmatpush1.msra.mxu0 %v187
    %608 = vmatprep.subr.mxu0 0.0
    %609 = vmatpush1.msra.mxu0 %v188
    %610 = vmatprep.subr.mxu0 0.0
    %611 = vmatpush1.msra.mxu0 %v189
    %612 = vmatprep.subr.mxu0 0.0
    %613 = vmatpush1.msra.mxu0 %v190
    %614 = vmatprep.subr.mxu0 0.0
    %615 = vmatpush1.msra.mxu0 %v191
    %616 = vmatprep.subr.mxu0 0.0
    %617 = vmatpush1.msra.mxu0 %v192
    %618 = vmatprep.subr.mxu0 0.0
    %619 = vmatpush1.msra.mxu0 %v193
    %620 = vmatprep.subr.mxu0 0.0
    %621 = vmatpush1.msra.mxu0 %v194
    %622 = vmatprep.subr.mxu0 0.0
    %623 = vmatpush1.msra.mxu0 %v195
    %624 = vmatprep.subr.mxu0 0.0
    %625 = vmatpush1.msra.mxu0 %v196
    %626 = vmatprep.subr.mxu0 0.0
    %627 = vmatpush1.msra.mxu0 %v197
    %628 = vmatprep.subr.mxu0 0.0
    %629 = vmatpush1.msra.mxu0 %v198
    %630 = vmatprep.subr.mxu0 0.0
    %631 = vmatpush1.msra.mxu0 %v199
    %632 = vmatprep.subr.mxu0 0.0
    %633 = vmatpush1.msra.mxu0 %v200
    %634 = vmatprep.subr.mxu0 0.0
    %635 = vmatpush1.msra.mxu0 %v201
    %636 = vmatprep.subr.mxu0 0.0
    %637 = vmatpush1.msra.mxu0 %v202
    %638 = vmatprep.subr.mxu0 0.0
    %639 = vmatpush1.msra.mxu0 %v203
    %640 = vmatprep.subr.mxu0 0.0
    %641 = vmatpush1.msra.mxu0 %v204
    %642 = vmatprep.subr.mxu0 0.0
    %643 = vmatpush1.msra.mxu0 %v205
    %644 = vmatprep.subr.mxu0 0.0
    %645 = vmatpush1.msra.mxu0 %v206
    %646 = vmatprep.subr.mxu0 0.0
    %647 = vmatpush1.msra.mxu0 %v207
    %648 = vmatprep.subr.mxu0 0.0
    %649 = vmatpush1.msra.mxu0 %v208
    %650 = vmatprep.subr.mxu0 0.0
    %651 = vmatpush1.msra.mxu0 %v209
    %652 = vmatprep.subr.mxu0 0.0
    %653 = vmatpush1.msra.mxu0 %v210
    %654 = vmatprep.mubr.f32.mxu0 %v589
    %655 = vmatmul.mubr.f32.gmra.mrb[0].mxu0 %v588
    %v656 = vpop.f32.mrb[0].mxu0
    %v657 = vadd.f32 %v216, %v656
    %v658 = vpop.f32.mrb[0].mxu0
    %659 = vdwg.mxu0
    %v660 = vmul.f32 %v570, 0.95
    %v661 = vadd.f32 %v660, %v657
    %v662 = vsub.f32 %v661, %v573
    %vm663 = vcmp.gt.f32.partialorder %v662, 1.0
    %v664 = vsel %vm663, 1, 0
    %v665 = vcvt.s32.f32 %v664
    %s666 = scalar_lea.vmem [#allocation8], 32
    %667 = vst [vmem:[%s666] sm:$0xff] %v665
    %s668 = scalar_lea.vmem [#allocation9], 32
    %669 = vst [vmem:[%s668] sm:$0xff] %v662
    %v670 = vmul.f32 %v582, 0.95
    %v671 = vmul.f32 %v583, 0.95
    %v672 = vadd.f32 %v670, %v175
    %v673 = vadd.f32 %v671, %v177
    %v674 = vsub.f32 %v672, %v588
    %v675 = vsub.f32 %v673, %v589
    %vm676 = vcmp.gt.f32.partialorder %v674, 1.0
    %vm677 = vcmp.gt.f32.partialorder %v675, 1.0
    %v678 = vsel %vm676, 1, 0
    %v679 = vsel %vm677, 1, 0
    %v680 = vcvt.s32.f32 %v678
    %v681 = vcvt.s32.f32 %v679
    %682 = vmatprep.subr.mxu0 0.0
    %683 = vmatpush1.msra.mxu0 %v179
    %684 = vmatprep.subr.mxu0 0.0
    %685 = vmatpush1.msra.mxu0 %v180
    %686 = vmatprep.subr.mxu0 0.0
    %687 = vmatpush1.msra.mxu0 %v181
    %688 = vmatprep.subr.mxu0 0.0
    %689 = vmatpush1.msra.mxu0 %v182
    %690 = vmatprep.subr.mxu0 0.0
    %691 = vmatpush1.msra.mxu0 %v183
    %692 = vmatprep.subr.mxu0 0.0
    %693 = vmatpush1.msra.mxu0 %v184
    %694 = vmatprep.subr.mxu0 0.0
    %695 = vmatpush1.msra.mxu0 %v185
    %696 = vmatprep.subr.mxu0 0.0
    %697 = vmatpush1.msra.mxu0 %v186
    %698 = vmatprep.subr.mxu0 0.0
    %699 = vmatpush1.msra.mxu0 %v187
    %700 = vmatprep.subr.mxu0 0.0
    %701 = vmatpush1.msra.mxu0 %v188
    %702 = vmatprep.subr.mxu0 0.0
    %703 = vmatpush1.msra.mxu0 %v189
    %704 = vmatprep.subr.mxu0 0.0
    %705 = vmatpush1.msra.mxu0 %v190
    %706 = vmatprep.subr.mxu0 0.0
    %707 = vmatpush1.msra.mxu0 %v191
    %708 = vmatprep.subr.mxu0 0.0
    %709 = vmatpush1.msra.mxu0 %v192
    %710 = vmatprep.subr.mxu0 0.0
    %711 = vmatpush1.msra.mxu0 %v193
    %712 = vmatprep.subr.mxu0 0.0
    %713 = vmatpush1.msra.mxu0 %v194
    %714 = vmatprep.subr.mxu0 0.0
    %715 = vmatpush1.msra.mxu0 %v195
    %716 = vmatprep.subr.mxu0 0.0
    %717 = vmatpush1.msra.mxu0 %v196
    %718 = vmatprep.subr.mxu0 0.0
    %719 = vmatpush1.msra.mxu0 %v197
    %720 = vmatprep.subr.mxu0 0.0
    %721 = vmatpush1.msra.mxu0 %v198
    %722 = vmatprep.subr.mxu0 0.0
    %723 = vmatpush1.msra.mxu0 %v199
    %724 = vmatprep.subr.mxu0 0.0
    %725 = vmatpush1.msra.mxu0 %v200
    %726 = vmatprep.subr.mxu0 0.0
    %727 = vmatpush1.msra.mxu0 %v201
    %728 = vmatprep.subr.mxu0 0.0
    %729 = vmatpush1.msra.mxu0 %v202
    %730 = vmatprep.subr.mxu0 0.0
    %731 = vmatpush1.msra.mxu0 %v203
    %732 = vmatprep.subr.mxu0 0.0
    %733 = vmatpush1.msra.mxu0 %v204
    %734 = vmatprep.subr.mxu0 0.0
    %735 = vmatpush1.msra.mxu0 %v205
    %736 = vmatprep.subr.mxu0 0.0
    %737 = vmatpush1.msra.mxu0 %v206
    %738 = vmatprep.subr.mxu0 0.0
    %739 = vmatpush1.msra.mxu0 %v207
    %740 = vmatprep.subr.mxu0 0.0
    %741 = vmatpush1.msra.mxu0 %v208
    %742 = vmatprep.subr.mxu0 0.0
    %743 = vmatpush1.msra.mxu0 %v209
    %744 = vmatprep.subr.mxu0 0.0
    %745 = vmatpush1.msra.mxu0 %v210
    %746 = vmatprep.mubr.f32.mxu0 %v681
    %747 = vmatmul.mubr.f32.gmra.mrb[0].mxu0 %v680
    %v748 = vpop.f32.mrb[0].mxu0
    %v749 = vadd.f32 %v216, %v748
    %v750 = vpop.f32.mrb[0].mxu0
    %751 = vdwg.mxu0
    %v752 = vmul.f32 %v662, 0.95
    %v753 = vadd.f32 %v752, %v749
    %v754 = vsub.f32 %v753, %v665
    %vm755 = vcmp.gt.f32.partialorder %v754, 1.0
    %v756 = vsel %vm755, 1, 0
    %v757 = vcvt.s32.f32 %v756
    %s758 = scalar_lea.vmem [#allocation8], 40
    %759 = vst [vmem:[%s758] sm:$0xff] %v757
    %s760 = scalar_lea.vmem [#allocation9], 40
    %761 = vst [vmem:[%s760] sm:$0xff] %v754
    %v762 = vmul.f32 %v674, 0.95
    %v763 = vmul.f32 %v675, 0.95
    %v764 = vadd.f32 %v762, %v175
    %v765 = vadd.f32 %v763, %v177
    %v766 = vsub.f32 %v764, %v680
    %v767 = vsub.f32 %v765, %v681
    %vm768 = vcmp.gt.f32.partialorder %v766, 1.0
    %vm769 = vcmp.gt.f32.partialorder %v767, 1.0
    %v770 = vsel %vm768, 1, 0
    %v771 = vsel %vm769, 1, 0
    %v772 = vcvt.s32.f32 %v770
    %v773 = vcvt.s32.f32 %v771
    %774 = vmatprep.subr.mxu0 0.0
    %775 = vmatpush1.msra.mxu0 %v179
    %776 = vmatprep.subr.mxu0 0.0
    %777 = vmatpush1.msra.mxu0 %v180
    %778 = vmatprep.subr.mxu0 0.0
    %779 = vmatpush1.msra.mxu0 %v181
    %780 = vmatprep.subr.mxu0 0.0
    %781 = vmatpush1.msra.mxu0 %v182
    %782 = vmatprep.subr.mxu0 0.0
    %783 = vmatpush1.msra.mxu0 %v183
    %784 = vmatprep.subr.mxu0 0.0
    %785 = vmatpush1.msra.mxu0 %v184
    %786 = vmatprep.subr.mxu0 0.0
    %787 = vmatpush1.msra.mxu0 %v185
    %788 = vmatprep.subr.mxu0 0.0
    %789 = vmatpush1.msra.mxu0 %v186
    %790 = vmatprep.subr.mxu0 0.0
    %791 = vmatpush1.msra.mxu0 %v187
    %792 = vmatprep.subr.mxu0 0.0
    %793 = vmatpush1.msra.mxu0 %v188
    %794 = vmatprep.subr.mxu0 0.0
    %795 = vmatpush1.msra.mxu0 %v189
    %796 = vmatprep.subr.mxu0 0.0
    %797 = vmatpush1.msra.mxu0 %v190
    %798 = vmatprep.subr.mxu0 0.0
    %799 = vmatpush1.msra.mxu0 %v191
    %800 = vmatprep.subr.mxu0 0.0
    %801 = vmatpush1.msra.mxu0 %v192
    %802 = vmatprep.subr.mxu0 0.0
    %803 = vmatpush1.msra.mxu0 %v193
    %804 = vmatprep.subr.mxu0 0.0
    %805 = vmatpush1.msra.mxu0 %v194
    %806 = vmatprep.subr.mxu0 0.0
    %807 = vmatpush1.msra.mxu0 %v195
    %808 = vmatprep.subr.mxu0 0.0
    %809 = vmatpush1.msra.mxu0 %v196
    %810 = vmatprep.subr.mxu0 0.0
    %811 = vmatpush1.msra.mxu0 %v197
    %812 = vmatprep.subr.mxu0 0.0
    %813 = vmatpush1.msra.mxu0 %v198
    %814 = vmatprep.subr.mxu0 0.0
    %815 = vmatpush1.msra.mxu0 %v199
    %816 = vmatprep.subr.mxu0 0.0
    %817 = vmatpush1.msra.mxu0 %v200
    %818 = vmatprep.subr.mxu0 0.0
    %819 = vmatpush1.msra.mxu0 %v201
    %820 = vmatprep.subr.mxu0 0.0
    %821 = vmatpush1.msra.mxu0 %v202
    %822 = vmatprep.subr.mxu0 0.0
    %823 = vmatpush1.msra.mxu0 %v203
    %824 = vmatprep.subr.mxu0 0.0
    %825 = vmatpush1.msra.mxu0 %v204
    %826 = vmatprep.subr.mxu0 0.0
    %827 = vmatpush1.msra.mxu0 %v205
    %828 = vmatprep.subr.mxu0 0.0
    %829 = vmatpush1.msra.mxu0 %v206
    %830 = vmatprep.subr.mxu0 0.0
    %831 = vmatpush1.msra.mxu0 %v207
    %832 = vmatprep.subr.mxu0 0.0
    %833 = vmatpush1.msra.mxu0 %v208
    %834 = vmatprep.subr.mxu0 0.0
    %835 = vmatpush1.msra.mxu0 %v209
    %836 = vmatprep.subr.mxu0 0.0
    %837 = vmatpush1.msra.mxu0 %v210
    %838 = vmatprep.mubr.f32.mxu0 %v773
    %839 = vmatmul.mubr.f32.gmra.mrb[0].mxu0 %v772
    %v840 = vpop.f32.mrb[0].mxu0
    %v841 = vadd.f32 %v216, %v840
    %v842 = vpop.f32.mrb[0].mxu0
    %843 = vdwg.mxu0
    %v844 = vmul.f32 %v754, 0.95
    %v845 = vadd.f32 %v844, %v841
    %v846 = vsub.f32 %v845, %v757
    %vm847 = vcmp.gt.f32.partialorder %v846, 1.0
    %v848 = vsel %vm847, 1, 0
    %v849 = vcvt.s32.f32 %v848
    %s850 = scalar_lea.vmem [#allocation8], 48
    %851 = vst [vmem:[%s850] sm:$0xff] %v849
    %s852 = scalar_lea.vmem [#allocation9], 48
    %853 = vst [vmem:[%s852] sm:$0xff] %v846
    %v854 = vmul.f32 %v766, 0.95
    %v855 = vmul.f32 %v767, 0.95
    %v856 = vadd.f32 %v854, %v175
    %v857 = vadd.f32 %v855, %v177
    %v858 = vsub.f32 %v856, %v772
    %v859 = vsub.f32 %v857, %v773
    %vm860 = vcmp.gt.f32.partialorder %v858, 1.0
    %vm861 = vcmp.gt.f32.partialorder %v859, 1.0
    %v862 = vsel %vm860, 1, 0
    %v863 = vsel %vm861, 1, 0
    %v864 = vcvt.s32.f32 %v862
    %v865 = vcvt.s32.f32 %v863
    %866 = vmatprep.subr.mxu0 0.0
    %867 = vmatpush1.msra.mxu0 %v179
    %868 = vmatprep.subr.mxu0 0.0
    %869 = vmatpush1.msra.mxu0 %v180
    %870 = vmatprep.subr.mxu0 0.0
    %871 = vmatpush1.msra.mxu0 %v181
    %872 = vmatprep.subr.mxu0 0.0
    %873 = vmatpush1.msra.mxu0 %v182
    %874 = vmatprep.subr.mxu0 0.0
    %875 = vmatpush1.msra.mxu0 %v183
    %876 = vmatprep.subr.mxu0 0.0
    %877 = vmatpush1.msra.mxu0 %v184
    %878 = vmatprep.subr.mxu0 0.0
    %879 = vmatpush1.msra.mxu0 %v185
    %880 = vmatprep.subr.mxu0 0.0
    %881 = vmatpush1.msra.mxu0 %v186
    %882 = vmatprep.subr.mxu0 0.0
    %883 = vmatpush1.msra.mxu0 %v187
    %884 = vmatprep.subr.mxu0 0.0
    %885 = vmatpush1.msra.mxu0 %v188
    %886 = vmatprep.subr.mxu0 0.0
    %887 = vmatpush1.msra.mxu0 %v189
    %888 = vmatprep.subr.mxu0 0.0
    %889 = vmatpush1.msra.mxu0 %v190
    %890 = vmatprep.subr.mxu0 0.0
    %891 = vmatpush1.msra.mxu0 %v191
    %892 = vmatprep.subr.mxu0 0.0
    %893 = vmatpush1.msra.mxu0 %v192
    %894 = vmatprep.subr.mxu0 0.0
    %895 = vmatpush1.msra.mxu0 %v193
    %896 = vmatprep.subr.mxu0 0.0
    %897 = vmatpush1.msra.mxu0 %v194
    %898 = vmatprep.subr.mxu0 0.0
    %899 = vmatpush1.msra.mxu0 %v195
    %900 = vmatprep.subr.mxu0 0.0
    %901 = vmatpush1.msra.mxu0 %v196
    %902 = vmatprep.subr.mxu0 0.0
    %903 = vmatpush1.msra.mxu0 %v197
    %904 = vmatprep.subr.mxu0 0.0
    %905 = vmatpush1.msra.mxu0 %v198
    %906 = vmatprep.subr.mxu0 0.0
    %907 = vmatpush1.msra.mxu0 %v199
    %908 = vmatprep.subr.mxu0 0.0
    %909 = vmatpush1.msra.mxu0 %v200
    %910 = vmatprep.subr.mxu0 0.0
    %911 = vmatpush1.msra.mxu0 %v201
    %912 = vmatprep.subr.mxu0 0.0
    %913 = vmatpush1.msra.mxu0 %v202
    %914 = vmatprep.subr.mxu0 0.0
    %915 = vmatpush1.msra.mxu0 %v203
    %916 = vmatprep.subr.mxu0 0.0
    %917 = vmatpush1.msra.mxu0 %v204
    %918 = vmatprep.subr.mxu0 0.0
    %919 = vmatpush1.msra.mxu0 %v205
    %920 = vmatprep.subr.mxu0 0.0
    %921 = vmatpush1.msra.mxu0 %v206
    %922 = vmatprep.subr.mxu0 0.0
    %923 = vmatpush1.msra.mxu0 %v207
    %924 = vmatprep.subr.mxu0 0.0
    %925 = vmatpush1.msra.mxu0 %v208
    %926 = vmatprep.subr.mxu0 0.0
    %927 = vmatpush1.msra.mxu0 %v209
    %928 = vmatprep.subr.mxu0 0.0
    %929 = vmatpush1.msra.mxu0 %v210
    %930 = vmatprep.mubr.f32.mxu0 %v865
    %931 = vmatmul.mubr.f32.gmra.mrb[0].mxu0 %v864
    %v932 = vpop.f32.mrb[0].mxu0
    %v933 = vadd.f32 %v216, %v932
    %v934 = vpop.f32.mrb[0].mxu0
    %935 = vdwg.mxu0
    %v936 = vmul.f32 %v846, 0.95
    %v937 = vadd.f32 %v936, %v933
    %v938 = vsub.f32 %v937, %v849
    %vm939 = vcmp.gt.f32.partialorder %v938, 1.0
    %v940 = vsel %vm939, 1, 0
    %v941 = vcvt.s32.f32 %v940
    %s942 = scalar_lea.vmem [#allocation8], 56
    %943 = vst [vmem:[%s942] sm:$0xff] %v941
    %s944 = scalar_lea.vmem [#allocation9], 56
    %945 = vst [vmem:[%s944] sm:$0xff] %v938
    %v946 = vmul.f32 %v858, 0.95
    %v947 = vmul.f32 %v859, 0.95
    %v948 = vadd.f32 %v946, %v175
    %v949 = vadd.f32 %v947, %v177
    %v950 = vsub.f32 %v948, %v864
    %v951 = vsub.f32 %v949, %v865
    %vm952 = vcmp.gt.f32.partialorder %v950, 1.0
    %vm953 = vcmp.gt.f32.partialorder %v951, 1.0
    %v954 = vsel %vm952, 1, 0
    %v955 = vsel %vm953, 1, 0
    %v956 = vcvt.s32.f32 %v954
    %v957 = vcvt.s32.f32 %v955
    %958 = vmatprep.subr.mxu0 0.0
    %959 = vmatpush1.msra.mxu0 %v179
    %960 = vmatprep.subr.mxu0 0.0
    %961 = vmatpush1.msra.mxu0 %v180
    %962 = vmatprep.subr.mxu0 0.0
    %963 = vmatpush1.msra.mxu0 %v181
    %964 = vmatprep.subr.mxu0 0.0
    %965 = vmatpush1.msra.mxu0 %v182
    %966 = vmatprep.subr.mxu0 0.0
    %967 = vmatpush1.msra.mxu0 %v183
    %968 = vmatprep.subr.mxu0 0.0
    %969 = vmatpush1.msra.mxu0 %v184
    %970 = vmatprep.subr.mxu0 0.0
    %971 = vmatpush1.msra.mxu0 %v185
    %972 = vmatprep.subr.mxu0 0.0
    %973 = vmatpush1.msra.mxu0 %v186
    %974 = vmatprep.subr.mxu0 0.0
    %975 = vmatpush1.msra.mxu0 %v187
    %976 = vmatprep.subr.mxu0 0.0
    %977 = vmatpush1.msra.mxu0 %v188
    %978 = vmatprep.subr.mxu0 0.0
    %979 = vmatpush1.msra.mxu0 %v189
    %980 = vmatprep.subr.mxu0 0.0
    %981 = vmatpush1.msra.mxu0 %v190
    %982 = vmatprep.subr.mxu0 0.0
    %983 = vmatpush1.msra.mxu0 %v191
    %984 = vmatprep.subr.mxu0 0.0
    %985 = vmatpush1.msra.mxu0 %v192
    %986 = vmatprep.subr.mxu0 0.0
    %987 = vmatpush1.msra.mxu0 %v193
    %988 = vmatprep.subr.mxu0 0.0
    %989 = vmatpush1.msra.mxu0 %v194
    %990 = vmatprep.subr.mxu0 0.0
    %991 = vmatpush1.msra.mxu0 %v195
    %992 = vmatprep.subr.mxu0 0.0
    %993 = vmatpush1.msra.mxu0 %v196
    %994 = vmatprep.subr.mxu0 0.0
    %995 = vmatpush1.msra.mxu0 %v197
    %996 = vmatprep.subr.mxu0 0.0
    %997 = vmatpush1.msra.mxu0 %v198
    %998 = vmatprep.subr.mxu0 0.0
    %999 = vmatpush1.msra.mxu0 %v199
    %1000 = vmatprep.subr.mxu0 0.0
    %1001 = vmatpush1.msra.mxu0 %v200
    %1002 = vmatprep.subr.mxu0 0.0
    %1003 = vmatpush1.msra.mxu0 %v201
    %1004 = vmatprep.subr.mxu0 0.0
    %1005 = vmatpush1.msra.mxu0 %v202
    %1006 = vmatprep.subr.mxu0 0.0
    %1007 = vmatpush1.msra.mxu0 %v203
    %1008 = vmatprep.subr.mxu0 0.0
    %1009 = vmatpush1.msra.mxu0 %v204
    %1010 = vmatprep.subr.mxu0 0.0
    %1011 = vmatpush1.msra.mxu0 %v205
    %1012 = vmatprep.subr.mxu0 0.0
    %1013 = vmatpush1.msra.mxu0 %v206
    %1014 = vmatprep.subr.mxu0 0.0
    %1015 = vmatpush1.msra.mxu0 %v207
    %1016 = vmatprep.subr.mxu0 0.0
    %1017 = vmatpush1.msra.mxu0 %v208
    %1018 = vmatprep.subr.mxu0 0.0
    %1019 = vmatpush1.msra.mxu0 %v209
    %1020 = vmatprep.subr.mxu0 0.0
    %1021 = vmatpush1.msra.mxu0 %v210
    %1022 = vmatprep.mubr.f32.mxu0 %v957
    %1023 = vmatmul.mubr.f32.gmra.mrb[0].mxu0 %v956
    %v1024 = vpop.f32.mrb[0].mxu0
    %v1025 = vadd.f32 %v216, %v1024
    %v1026 = vpop.f32.mrb[0].mxu0
    %1027 = vdwg.mxu0
    %v1028 = vmul.f32 %v938, 0.95
    %v1029 = vadd.f32 %v1028, %v1025
    %v1030 = vsub.f32 %v1029, %v941
    %vm1031 = vcmp.gt.f32.partialorder %v1030, 1.0
    %v1032 = vsel %vm1031, 1, 0
    %v1033 = vcvt.s32.f32 %v1032
    %s1034 = scalar_lea.vmem [#allocation8], 64
    %1035 = vst [vmem:[%s1034] sm:$0xff] %v1033
    %s1036 = scalar_lea.vmem [#allocation9], 64
    %1037 = vst [vmem:[%s1036] sm:$0xff] %v1030
    %v1038 = vmul.f32 %v950, 0.95
    %v1039 = vmul.f32 %v951, 0.95
    %v1040 = vadd.f32 %v1038, %v175
    %v1041 = vadd.f32 %v1039, %v177
    %v1042 = vsub.f32 %v1040, %v956
    %v1043 = vsub.f32 %v1041, %v957
    %vm1044 = vcmp.gt.f32.partialorder %v1042, 1.0
    %vm1045 = vcmp.gt.f32.partialorder %v1043, 1.0
    %v1046 = vsel %vm1044, 1, 0
    %v1047 = vsel %vm1045, 1, 0
    %v1048 = vcvt.s32.f32 %v1046
    %v1049 = vcvt.s32.f32 %v1047
    %1050 = vmatprep.subr.mxu0 0.0
    %1051 = vmatpush1.msra.mxu0 %v179
    %1052 = vmatprep.subr.mxu0 0.0
    %1053 = vmatpush1.msra.mxu0 %v180
    %1054 = vmatprep.subr.mxu0 0.0
    %1055 = vmatpush1.msra.mxu0 %v181
    %1056 = vmatprep.subr.mxu0 0.0
    %1057 = vmatpush1.msra.mxu0 %v182
    %1058 = vmatprep.subr.mxu0 0.0
    %1059 = vmatpush1.msra.mxu0 %v183
    %1060 = vmatprep.subr.mxu0 0.0
    %1061 = vmatpush1.msra.mxu0 %v184
    %1062 = vmatprep.subr.mxu0 0.0
    %1063 = vmatpush1.msra.mxu0 %v185
    %1064 = vmatprep.subr.mxu0 0.0
    %1065 = vmatpush1.msra.mxu0 %v186
    %1066 = vmatprep.subr.mxu0 0.0
    %1067 = vmatpush1.msra.mxu0 %v187
    %1068 = vmatprep.subr.mxu0 0.0
    %1069 = vmatpush1.msra.mxu0 %v188
    %1070 = vmatprep.subr.mxu0 0.0
    %1071 = vmatpush1.msra.mxu0 %v189
    %1072 = vmatprep.subr.mxu0 0.0
    %1073 = vmatpush1.msra.mxu0 %v190
    %1074 = vmatprep.subr.mxu0 0.0
    %1075 = vmatpush1.msra.mxu0 %v191
    %1076 = vmatprep.subr.mxu0 0.0
    %1077 = vmatpush1.msra.mxu0 %v192
    %1078 = vmatprep.subr.mxu0 0.0
    %1079 = vmatpush1.msra.mxu0 %v193
    %1080 = vmatprep.subr.mxu0 0.0
    %1081 = vmatpush1.msra.mxu0 %v194
    %1082 = vmatprep.subr.mxu0 0.0
    %1083 = vmatpush1.msra.mxu0 %v195
    %1084 = vmatprep.subr.mxu0 0.0
    %1085 = vmatpush1.msra.mxu0 %v196
    %1086 = vmatprep.subr.mxu0 0.0
    %1087 = vmatpush1.msra.mxu0 %v197
    %1088 = vmatprep.subr.mxu0 0.0
    %1089 = vmatpush1.msra.mxu0 %v198
    %1090 = vmatprep.subr.mxu0 0.0
    %1091 = vmatpush1.msra.mxu0 %v199
    %1092 = vmatprep.subr.mxu0 0.0
    %1093 = vmatpush1.msra.mxu0 %v200
    %1094 = vmatprep.subr.mxu0 0.0
    %1095 = vmatpush1.msra.mxu0 %v201
    %1096 = vmatprep.subr.mxu0 0.0
    %1097 = vmatpush1.msra.mxu0 %v202
    %1098 = vmatprep.subr.mxu0 0.0
    %1099 = vmatpush1.msra.mxu0 %v203
    %1100 = vmatprep.subr.mxu0 0.0
    %1101 = vmatpush1.msra.mxu0 %v204
    %1102 = vmatprep.subr.mxu0 0.0
    %1103 = vmatpush1.msra.mxu0 %v205
    %1104 = vmatprep.subr.mxu0 0.0
    %1105 = vmatpush1.msra.mxu0 %v206
    %1106 = vmatprep.subr.mxu0 0.0
    %1107 = vmatpush1.msra.mxu0 %v207
    %1108 = vmatprep.subr.mxu0 0.0
    %1109 = vmatpush1.msra.mxu0 %v208
    %1110 = vmatprep.subr.mxu0 0.0
    %1111 = vmatpush1.msra.mxu0 %v209
    %1112 = vmatprep.subr.mxu0 0.0
    %1113 = vmatpush1.msra.mxu0 %v210
    %1114 = vmatprep.mubr.f32.mxu0 %v1049
    %1115 = vmatmul.mubr.f32.gmra.mrb[0].mxu0 %v1048
    %v1116 = vpop.f32.mrb[0].mxu0
    %v1117 = vadd.f32 %v216, %v1116
    %v1118 = vpop.f32.mrb[0].mxu0
    %1119 = vdwg.mxu0
    %v1120 = vmul.f32 %v1030, 0.95
    %v1121 = vadd.f32 %v1120, %v1117
    %v1122 = vsub.f32 %v1121, %v1033
    %vm1123 = vcmp.gt.f32.partialorder %v1122, 1.0
    %v1124 = vsel %vm1123, 1, 0
    %v1125 = vcvt.s32.f32 %v1124
    %s1126 = scalar_lea.vmem [#allocation8], 72
    %1127 = vst [vmem:[%s1126] sm:$0xff] %v1125
    %s1128 = scalar_lea.vmem [#allocation9], 72
    %1129 = vst [vmem:[%s1128] sm:$0xff] %v1122
    %v1130 = vmul.f32 %v1042, 0.95
    %v1131 = vmul.f32 %v1043, 0.95
    %v1132 = vadd.f32 %v1130, %v175
    %v1133 = vadd.f32 %v1131, %v177
    %v1134 = vsub.f32 %v1132, %v1048
    %v1135 = vsub.f32 %v1133, %v1049
    %vm1136 = vcmp.gt.f32.partialorder %v1134, 1.0
    %vm1137 = vcmp.gt.f32.partialorder %v1135, 1.0
    %v1138 = vsel %vm1136, 1, 0
    %v1139 = vsel %vm1137, 1, 0
    %v1140 = vcvt.s32.f32 %v1138
    %v1141 = vcvt.s32.f32 %v1139
    %1142 = vmatprep.subr.mxu0 0.0
    %1143 = vmatpush1.msra.mxu0 %v179
    %1144 = vmatprep.subr.mxu0 0.0
    %1145 = vmatpush1.msra.mxu0 %v180
    %1146 = vmatprep.subr.mxu0 0.0
    %1147 = vmatpush1.msra.mxu0 %v181
    %1148 = vmatprep.subr.mxu0 0.0
    %1149 = vmatpush1.msra.mxu0 %v182
    %1150 = vmatprep.subr.mxu0 0.0
    %1151 = vmatpush1.msra.mxu0 %v183
    %1152 = vmatprep.subr.mxu0 0.0
    %1153 = vmatpush1.msra.mxu0 %v184
    %1154 = vmatprep.subr.mxu0 0.0
    %1155 = vmatpush1.msra.mxu0 %v185
    %1156 = vmatprep.subr.mxu0 0.0
    %1157 = vmatpush1.msra.mxu0 %v186
    %1158 = vmatprep.subr.mxu0 0.0
    %1159 = vmatpush1.msra.mxu0 %v187
    %1160 = vmatprep.subr.mxu0 0.0
    %1161 = vmatpush1.msra.mxu0 %v188
    %1162 = vmatprep.subr.mxu0 0.0
    %1163 = vmatpush1.msra.mxu0 %v189
    %1164 = vmatprep.subr.mxu0 0.0
    %1165 = vmatpush1.msra.mxu0 %v190
    %1166 = vmatprep.subr.mxu0 0.0
    %1167 = vmatpush1.msra.mxu0 %v191
    %1168 = vmatprep.subr.mxu0 0.0
    %1169 = vmatpush1.msra.mxu0 %v192
    %1170 = vmatprep.subr.mxu0 0.0
    %1171 = vmatpush1.msra.mxu0 %v193
    %1172 = vmatprep.subr.mxu0 0.0
    %1173 = vmatpush1.msra.mxu0 %v194
    %1174 = vmatprep.subr.mxu0 0.0
    %1175 = vmatpush1.msra.mxu0 %v195
    %1176 = vmatprep.subr.mxu0 0.0
    %1177 = vmatpush1.msra.mxu0 %v196
    %1178 = vmatprep.subr.mxu0 0.0
    %1179 = vmatpush1.msra.mxu0 %v197
    %1180 = vmatprep.subr.mxu0 0.0
    %1181 = vmatpush1.msra.mxu0 %v198
    %1182 = vmatprep.subr.mxu0 0.0
    %1183 = vmatpush1.msra.mxu0 %v199
    %1184 = vmatprep.subr.mxu0 0.0
    %1185 = vmatpush1.msra.mxu0 %v200
    %1186 = vmatprep.subr.mxu0 0.0
    %1187 = vmatpush1.msra.mxu0 %v201
    %1188 = vmatprep.subr.mxu0 0.0
    %1189 = vmatpush1.msra.mxu0 %v202
    %1190 = vmatprep.subr.mxu0 0.0
    %1191 = vmatpush1.msra.mxu0 %v203
    %1192 = vmatprep.subr.mxu0 0.0
    %1193 = vmatpush1.msra.mxu0 %v204
    %1194 = vmatprep.subr.mxu0 0.0
    %1195 = vmatpush1.msra.mxu0 %v205
    %1196 = vmatprep.subr.mxu0 0.0
    %1197 = vmatpush1.msra.mxu0 %v206
    %1198 = vmatprep.subr.mxu0 0.0
    %1199 = vmatpush1.msra.mxu0 %v207
    %1200 = vmatprep.subr.mxu0 0.0
    %1201 = vmatpush1.msra.mxu0 %v208
    %1202 = vmatprep.subr.mxu0 0.0
    %1203 = vmatpush1.msra.mxu0 %v209
    %1204 = vmatprep.subr.mxu0 0.0
    %1205 = vmatpush1.msra.mxu0 %v210
    %1206 = vmatprep.mubr.f32.mxu0 %v1141
    %1207 = vmatmul.mubr.f32.gmra.mrb[0].mxu0 %v1140
    %v1208 = vpop.f32.mrb[0].mxu0
    %v1209 = vadd.f32 %v216, %v1208
    %v1210 = vpop.f32.mrb[0].mxu0
    %1211 = vdwg.mxu0
    %v1212 = vmul.f32 %v1122, 0.95
    %v1213 = vadd.f32 %v1212, %v1209
    %v1214 = vsub.f32 %v1213, %v1125
    %vm1215 = vcmp.gt.f32.partialorder %v1214, 1.0
    %v1216 = vsel %vm1215, 1, 0
    %v1217 = vcvt.s32.f32 %v1216
    %s1218 = scalar_lea.vmem [#allocation8], 80
    %1219 = vst [vmem:[%s1218] sm:$0xff] %v1217
    %s1220 = scalar_lea.vmem [#allocation9], 80
    %1221 = vst [vmem:[%s1220] sm:$0xff] %v1214
    %v1222 = vmul.f32 %v1134, 0.95
    %v1223 = vmul.f32 %v1135, 0.95
    %v1224 = vadd.f32 %v1222, %v175
    %v1225 = vadd.f32 %v1223, %v177
    %v1226 = vsub.f32 %v1224, %v1140
    %v1227 = vsub.f32 %v1225, %v1141
    %vm1228 = vcmp.gt.f32.partialorder %v1226, 1.0
    %vm1229 = vcmp.gt.f32.partialorder %v1227, 1.0
    %v1230 = vsel %vm1228, 1, 0
    %v1231 = vsel %vm1229, 1, 0
    %v1232 = vcvt.s32.f32 %v1230
    %v1233 = vcvt.s32.f32 %v1231
    %1234 = vmatprep.subr.mxu0 0.0
    %1235 = vmatpush1.msra.mxu0 %v179
    %1236 = vmatprep.subr.mxu0 0.0
    %1237 = vmatpush1.msra.mxu0 %v180
    %1238 = vmatprep.subr.mxu0 0.0
    %1239 = vmatpush1.msra.mxu0 %v181
    %1240 = vmatprep.subr.mxu0 0.0
    %1241 = vmatpush1.msra.mxu0 %v182
    %1242 = vmatprep.subr.mxu0 0.0
    %1243 = vmatpush1.msra.mxu0 %v183
    %1244 = vmatprep.subr.mxu0 0.0
    %1245 = vmatpush1.msra.mxu0 %v184
    %1246 = vmatprep.subr.mxu0 0.0
    %1247 = vmatpush1.msra.mxu0 %v185
    %1248 = vmatprep.subr.mxu0 0.0
    %1249 = vmatpush1.msra.mxu0 %v186
    %1250 = vmatprep.subr.mxu0 0.0
    %1251 = vmatpush1.msra.mxu0 %v187
    %1252 = vmatprep.subr.mxu0 0.0
    %1253 = vmatpush1.msra.mxu0 %v188
    %1254 = vmatprep.subr.mxu0 0.0
    %1255 = vmatpush1.msra.mxu0 %v189
    %1256 = vmatprep.subr.mxu0 0.0
    %1257 = vmatpush1.msra.mxu0 %v190
    %1258 = vmatprep.subr.mxu0 0.0
    %1259 = vmatpush1.msra.mxu0 %v191
    %1260 = vmatprep.subr.mxu0 0.0
    %1261 = vmatpush1.msra.mxu0 %v192
    %1262 = vmatprep.subr.mxu0 0.0
    %1263 = vmatpush1.msra.mxu0 %v193
    %1264 = vmatprep.subr.mxu0 0.0
    %1265 = vmatpush1.msra.mxu0 %v194
    %1266 = vmatprep.subr.mxu0 0.0
    %1267 = vmatpush1.msra.mxu0 %v195
    %1268 = vmatprep.subr.mxu0 0.0
    %1269 = vmatpush1.msra.mxu0 %v196
    %1270 = vmatprep.subr.mxu0 0.0
    %1271 = vmatpush1.msra.mxu0 %v197
    %1272 = vmatprep.subr.mxu0 0.0
    %1273 = vmatpush1.msra.mxu0 %v198
    %1274 = vmatprep.subr.mxu0 0.0
    %1275 = vmatpush1.msra.mxu0 %v199
    %1276 = vmatprep.subr.mxu0 0.0
    %1277 = vmatpush1.msra.mxu0 %v200
    %1278 = vmatprep.subr.mxu0 0.0
    %1279 = vmatpush1.msra.mxu0 %v201
    %1280 = vmatprep.subr.mxu0 0.0
    %1281 = vmatpush1.msra.mxu0 %v202
    %1282 = vmatprep.subr.mxu0 0.0
    %1283 = vmatpush1.msra.mxu0 %v203
    %1284 = vmatprep.subr.mxu0 0.0
    %1285 = vmatpush1.msra.mxu0 %v204
    %1286 = vmatprep.subr.mxu0 0.0
    %1287 = vmatpush1.msra.mxu0 %v205
    %1288 = vmatprep.subr.mxu0 0.0
    %1289 = vmatpush1.msra.mxu0 %v206
    %1290 = vmatprep.subr.mxu0 0.0
    %1291 = vmatpush1.msra.mxu0 %v207
    %1292 = vmatprep.subr.mxu0 0.0
    %1293 = vmatpush1.msra.mxu0 %v208
    %1294 = vmatprep.subr.mxu0 0.0
    %1295 = vmatpush1.msra.mxu0 %v209
    %1296 = vmatprep.subr.mxu0 0.0
    %1297 = vmatpush1.msra.mxu0 %v210
    %1298 = vmatprep.mubr.f32.mxu0 %v1233
    %1299 = vmatmul.mubr.f32.gmra.mrb[0].mxu0 %v1232
    %v1300 = vpop.f32.mrb[0].mxu0
    %v1301 = vadd.f32 %v216, %v1300
    %v1302 = vpop.f32.mrb[0].mxu0
    %1303 = vdwg.mxu0
    %v1304 = vmul.f32 %v1214, 0.95
    %v1305 = vadd.f32 %v1304, %v1301
    %v1306 = vsub.f32 %v1305, %v1217
    %vm1307 = vcmp.gt.f32.partialorder %v1306, 1.0
    %v1308 = vsel %vm1307, 1, 0
    %v1309 = vcvt.s32.f32 %v1308
    %s1310 = scalar_lea.vmem [#allocation8], 88
    %1311 = vst [vmem:[%s1310] sm:$0xff] %v1309
    %s1312 = scalar_lea.vmem [#allocation9], 88
    %1313 = vst [vmem:[%s1312] sm:$0xff] %v1306
    %v1314 = vmul.f32 %v1226, 0.95
    %v1315 = vmul.f32 %v1227, 0.95
    %v1316 = vadd.f32 %v1314, %v175
    %v1317 = vadd.f32 %v1315, %v177
    %v1318 = vsub.f32 %v1316, %v1232
    %v1319 = vsub.f32 %v1317, %v1233
    %vm1320 = vcmp.gt.f32.partialorder %v1318, 1.0
    %vm1321 = vcmp.gt.f32.partialorder %v1319, 1.0
    %v1322 = vsel %vm1320, 1, 0
    %v1323 = vsel %vm1321, 1, 0
    %v1324 = vcvt.s32.f32 %v1322
    %v1325 = vcvt.s32.f32 %v1323
    %1326 = vmatprep.subr.mxu0 0.0
    %1327 = vmatpush1.msra.mxu0 %v179
    %1328 = vmatprep.subr.mxu0 0.0
    %1329 = vmatpush1.msra.mxu0 %v180
    %1330 = vmatprep.subr.mxu0 0.0
    %1331 = vmatpush1.msra.mxu0 %v181
    %1332 = vmatprep.subr.mxu0 0.0
    %1333 = vmatpush1.msra.mxu0 %v182
    %1334 = vmatprep.subr.mxu0 0.0
    %1335 = vmatpush1.msra.mxu0 %v183
    %1336 = vmatprep.subr.mxu0 0.0
    %1337 = vmatpush1.msra.mxu0 %v184
    %1338 = vmatprep.subr.mxu0 0.0
    %1339 = vmatpush1.msra.mxu0 %v185
    %1340 = vmatprep.subr.mxu0 0.0
    %1341 = vmatpush1.msra.mxu0 %v186
    %1342 = vmatprep.subr.mxu0 0.0
    %1343 = vmatpush1.msra.mxu0 %v187
    %1344 = vmatprep.subr.mxu0 0.0
    %1345 = vmatpush1.msra.mxu0 %v188
    %1346 = vmatprep.subr.mxu0 0.0
    %1347 = vmatpush1.msra.mxu0 %v189
    %1348 = vmatprep.subr.mxu0 0.0
    %1349 = vmatpush1.msra.mxu0 %v190
    %1350 = vmatprep.subr.mxu0 0.0
    %1351 = vmatpush1.msra.mxu0 %v191
    %1352 = vmatprep.subr.mxu0 0.0
    %1353 = vmatpush1.msra.mxu0 %v192
    %1354 = vmatprep.subr.mxu0 0.0
    %1355 = vmatpush1.msra.mxu0 %v193
    %1356 = vmatprep.subr.mxu0 0.0
    %1357 = vmatpush1.msra.mxu0 %v194
    %1358 = vmatprep.subr.mxu0 0.0
    %1359 = vmatpush1.msra.mxu0 %v195
    %1360 = vmatprep.subr.mxu0 0.0
    %1361 = vmatpush1.msra.mxu0 %v196
    %1362 = vmatprep.subr.mxu0 0.0
    %1363 = vmatpush1.msra.mxu0 %v197
    %1364 = vmatprep.subr.mxu0 0.0
    %1365 = vmatpush1.msra.mxu0 %v198
    %1366 = vmatprep.subr.mxu0 0.0
    %1367 = vmatpush1.msra.mxu0 %v199
    %1368 = vmatprep.subr.mxu0 0.0
    %1369 = vmatpush1.msra.mxu0 %v200
    %1370 = vmatprep.subr.mxu0 0.0
    %1371 = vmatpush1.msra.mxu0 %v201
    %1372 = vmatprep.subr.mxu0 0.0
    %1373 = vmatpush1.msra.mxu0 %v202
    %1374 = vmatprep.subr.mxu0 0.0
    %1375 = vmatpush1.msra.mxu0 %v203
    %1376 = vmatprep.subr.mxu0 0.0
    %1377 = vmatpush1.msra.mxu0 %v204
    %1378 = vmatprep.subr.mxu0 0.0
    %1379 = vmatpush1.msra.mxu0 %v205
    %1380 = vmatprep.subr.mxu0 0.0
    %1381 = vmatpush1.msra.mxu0 %v206
    %1382 = vmatprep.subr.mxu0 0.0
    %1383 = vmatpush1.msra.mxu0 %v207
    %1384 = vmatprep.subr.mxu0 0.0
    %1385 = vmatpush1.msra.mxu0 %v208
    %1386 = vmatprep.subr.mxu0 0.0
    %1387 = vmatpush1.msra.mxu0 %v209
    %1388 = vmatprep.subr.mxu0 0.0
    %1389 = vmatpush1.msra.mxu0 %v210
    %1390 = vmatprep.mubr.f32.mxu0 %v1325
    %1391 = vmatmul.mubr.f32.gmra.mrb[0].mxu0 %v1324
    %v1392 = vpop.f32.mrb[0].mxu0
    %v1393 = vadd.f32 %v216, %v1392
    %v1394 = vpop.f32.mrb[0].mxu0
    %1395 = vdwg.mxu0
    %v1396 = vmul.f32 %v1306, 0.95
    %v1397 = vadd.f32 %v1396, %v1393
    %v1398 = vsub.f32 %v1397, %v1309
    %vm1399 = vcmp.gt.f32.partialorder %v1398, 1.0
    %v1400 = vsel %vm1399, 1, 0
    %v1401 = vcvt.s32.f32 %v1400
    %s1402 = scalar_lea.vmem [#allocation8], 96
    %1403 = vst [vmem:[%s1402] sm:$0xff] %v1401
    %s1404 = scalar_lea.vmem [#allocation9], 96
    %1405 = vst [vmem:[%s1404] sm:$0xff] %v1398
    %v1406 = vmul.f32 %v1318, 0.95
    %v1407 = vmul.f32 %v1319, 0.95
    %v1408 = vadd.f32 %v1406, %v175
    %v1409 = vadd.f32 %v1407, %v177
    %v1410 = vsub.f32 %v1408, %v1324
    %v1411 = vsub.f32 %v1409, %v1325
    %vm1412 = vcmp.gt.f32.partialorder %v1410, 1.0
    %vm1413 = vcmp.gt.f32.partialorder %v1411, 1.0
    %v1414 = vsel %vm1412, 1, 0
    %v1415 = vsel %vm1413, 1, 0
    %v1416 = vcvt.s32.f32 %v1414
    %v1417 = vcvt.s32.f32 %v1415
    %1418 = vmatprep.subr.mxu0 0.0
    %1419 = vmatpush1.msra.mxu0 %v179
    %1420 = vmatprep.subr.mxu0 0.0
    %1421 = vmatpush1.msra.mxu0 %v180
    %1422 = vmatprep.subr.mxu0 0.0
    %1423 = vmatpush1.msra.mxu0 %v181
    %1424 = vmatprep.subr.mxu0 0.0
    %1425 = vmatpush1.msra.mxu0 %v182
    %1426 = vmatprep.subr.mxu0 0.0
    %1427 = vmatpush1.msra.mxu0 %v183
    %1428 = vmatprep.subr.mxu0 0.0
    %1429 = vmatpush1.msra.mxu0 %v184
    %1430 = vmatprep.subr.mxu0 0.0
    %1431 = vmatpush1.msra.mxu0 %v185
    %1432 = vmatprep.subr.mxu0 0.0
    %1433 = vmatpush1.msra.mxu0 %v186
    %1434 = vmatprep.subr.mxu0 0.0
    %1435 = vmatpush1.msra.mxu0 %v187
    %1436 = vmatprep.subr.mxu0 0.0
    %1437 = vmatpush1.msra.mxu0 %v188
    %1438 = vmatprep.subr.mxu0 0.0
    %1439 = vmatpush1.msra.mxu0 %v189
    %1440 = vmatprep.subr.mxu0 0.0
    %1441 = vmatpush1.msra.mxu0 %v190
    %1442 = vmatprep.subr.mxu0 0.0
    %1443 = vmatpush1.msra.mxu0 %v191
    %1444 = vmatprep.subr.mxu0 0.0
    %1445 = vmatpush1.msra.mxu0 %v192
    %1446 = vmatprep.subr.mxu0 0.0
    %1447 = vmatpush1.msra.mxu0 %v193
    %1448 = vmatprep.subr.mxu0 0.0
    %1449 = vmatpush1.msra.mxu0 %v194
    %1450 = vmatprep.subr.mxu0 0.0
    %1451 = vmatpush1.msra.mxu0 %v195
    %1452 = vmatprep.subr.mxu0 0.0
    %1453 = vmatpush1.msra.mxu0 %v196
    %1454 = vmatprep.subr.mxu0 0.0
    %1455 = vmatpush1.msra.mxu0 %v197
    %1456 = vmatprep.subr.mxu0 0.0
    %1457 = vmatpush1.msra.mxu0 %v198
    %1458 = vmatprep.subr.mxu0 0.0
    %1459 = vmatpush1.msra.mxu0 %v199
    %1460 = vmatprep.subr.mxu0 0.0
    %1461 = vmatpush1.msra.mxu0 %v200
    %1462 = vmatprep.subr.mxu0 0.0
    %1463 = vmatpush1.msra.mxu0 %v201
    %1464 = vmatprep.subr.mxu0 0.0
    %1465 = vmatpush1.msra.mxu0 %v202
    %1466 = vmatprep.subr.mxu0 0.0
    %1467 = vmatpush1.msra.mxu0 %v203
    %1468 = vmatprep.subr.mxu0 0.0
    %1469 = vmatpush1.msra.mxu0 %v204
    %1470 = vmatprep.subr.mxu0 0.0
    %1471 = vmatpush1.msra.mxu0 %v205
    %1472 = vmatprep.subr.mxu0 0.0
    %1473 = vmatpush1.msra.mxu0 %v206
    %1474 = vmatprep.subr.mxu0 0.0
    %1475 = vmatpush1.msra.mxu0 %v207
    %1476 = vmatprep.subr.mxu0 0.0
    %1477 = vmatpush1.msra.mxu0 %v208
    %1478 = vmatprep.subr.mxu0 0.0
    %1479 = vmatpush1.msra.mxu0 %v209
    %1480 = vmatprep.subr.mxu0 0.0
    %1481 = vmatpush1.msra.mxu0 %v210
    %1482 = vmatprep.mubr.f32.mxu0 %v1417
    %1483 = vmatmul.mubr.f32.gmra.mrb[0].mxu0 %v1416
    %v1484 = vpop.f32.mrb[0].mxu0
    %v1485 = vadd.f32 %v216, %v1484
    %v1486 = vpop.f32.mrb[0].mxu0
    %1487 = vdwg.mxu0
    %v1488 = vmul.f32 %v1398, 0.95
    %v1489 = vadd.f32 %v1488, %v1485
    %v1490 = vsub.f32 %v1489, %v1401
    %vm1491 = vcmp.gt.f32.partialorder %v1490, 1.0
    %v1492 = vsel %vm1491, 1, 0
    %v1493 = vcvt.s32.f32 %v1492
    %s1494 = scalar_lea.vmem [#allocation8], 104
    %1495 = vst [vmem:[%s1494] sm:$0xff] %v1493
    %s1496 = scalar_lea.vmem [#allocation9], 104
    %1497 = vst [vmem:[%s1496] sm:$0xff] %v1490
    %v1498 = vmul.f32 %v1410, 0.95
    %v1499 = vmul.f32 %v1411, 0.95
    %v1500 = vadd.f32 %v1498, %v175
    %v1501 = vadd.f32 %v1499, %v177
    %v1502 = vsub.f32 %v1500, %v1416
    %v1503 = vsub.f32 %v1501, %v1417
    %vm1504 = vcmp.gt.f32.partialorder %v1502, 1.0
    %vm1505 = vcmp.gt.f32.partialorder %v1503, 1.0
    %v1506 = vsel %vm1504, 1, 0
    %v1507 = vsel %vm1505, 1, 0
    %v1508 = vcvt.s32.f32 %v1506
    %v1509 = vcvt.s32.f32 %v1507
    %1510 = vmatprep.subr.mxu0 0.0
    %1511 = vmatpush1.msra.mxu0 %v179
    %1512 = vmatprep.subr.mxu0 0.0
    %1513 = vmatpush1.msra.mxu0 %v180
    %1514 = vmatprep.subr.mxu0 0.0
    %1515 = vmatpush1.msra.mxu0 %v181
    %1516 = vmatprep.subr.mxu0 0.0
    %1517 = vmatpush1.msra.mxu0 %v182
    %1518 = vmatprep.subr.mxu0 0.0
    %1519 = vmatpush1.msra.mxu0 %v183
    %1520 = vmatprep.subr.mxu0 0.0
    %1521 = vmatpush1.msra.mxu0 %v184
    %1522 = vmatprep.subr.mxu0 0.0
    %1523 = vmatpush1.msra.mxu0 %v185
    %1524 = vmatprep.subr.mxu0 0.0
    %1525 = vmatpush1.msra.mxu0 %v186
    %1526 = vmatprep.subr.mxu0 0.0
    %1527 = vmatpush1.msra.mxu0 %v187
    %1528 = vmatprep.subr.mxu0 0.0
    %1529 = vmatpush1.msra.mxu0 %v188
    %1530 = vmatprep.subr.mxu0 0.0
    %1531 = vmatpush1.msra.mxu0 %v189
    %1532 = vmatprep.subr.mxu0 0.0
    %1533 = vmatpush1.msra.mxu0 %v190
    %1534 = vmatprep.subr.mxu0 0.0
    %1535 = vmatpush1.msra.mxu0 %v191
    %1536 = vmatprep.subr.mxu0 0.0
    %1537 = vmatpush1.msra.mxu0 %v192
    %1538 = vmatprep.subr.mxu0 0.0
    %1539 = vmatpush1.msra.mxu0 %v193
    %1540 = vmatprep.subr.mxu0 0.0
    %1541 = vmatpush1.msra.mxu0 %v194
    %1542 = vmatprep.subr.mxu0 0.0
    %1543 = vmatpush1.msra.mxu0 %v195
    %1544 = vmatprep.subr.mxu0 0.0
    %1545 = vmatpush1.msra.mxu0 %v196
    %1546 = vmatprep.subr.mxu0 0.0
    %1547 = vmatpush1.msra.mxu0 %v197
    %1548 = vmatprep.subr.mxu0 0.0
    %1549 = vmatpush1.msra.mxu0 %v198
    %1550 = vmatprep.subr.mxu0 0.0
    %1551 = vmatpush1.msra.mxu0 %v199
    %1552 = vmatprep.subr.mxu0 0.0
    %1553 = vmatpush1.msra.mxu0 %v200
    %1554 = vmatprep.subr.mxu0 0.0
    %1555 = vmatpush1.msra.mxu0 %v201
    %1556 = vmatprep.subr.mxu0 0.0
    %1557 = vmatpush1.msra.mxu0 %v202
    %1558 = vmatprep.subr.mxu0 0.0
    %1559 = vmatpush1.msra.mxu0 %v203
    %1560 = vmatprep.subr.mxu0 0.0
    %1561 = vmatpush1.msra.mxu0 %v204
    %1562 = vmatprep.subr.mxu0 0.0
    %1563 = vmatpush1.msra.mxu0 %v205
    %1564 = vmatprep.subr.mxu0 0.0
    %1565 = vmatpush1.msra.mxu0 %v206
    %1566 = vmatprep.subr.mxu0 0.0
    %1567 = vmatpush1.msra.mxu0 %v207
    %1568 = vmatprep.subr.mxu0 0.0
    %1569 = vmatpush1.msra.mxu0 %v208
    %1570 = vmatprep.subr.mxu0 0.0
    %1571 = vmatpush1.msra.mxu0 %v209
    %1572 = vmatprep.subr.mxu0 0.0
    %1573 = vmatpush1.msra.mxu0 %v210
    %1574 = vmatprep.mubr.f32.mxu0 %v1509
    %1575 = vmatmul.mubr.f32.gmra.mrb[0].mxu0 %v1508
    %v1576 = vpop.f32.mrb[0].mxu0
    %v1577 = vadd.f32 %v216, %v1576
    %v1578 = vpop.f32.mrb[0].mxu0
    %1579 = vdwg.mxu0
    %v1580 = vmul.f32 %v1490, 0.95
    %v1581 = vadd.f32 %v1580, %v1577
    %v1582 = vsub.f32 %v1581, %v1493
    %vm1583 = vcmp.gt.f32.partialorder %v1582, 1.0
    %v1584 = vsel %vm1583, 1, 0
    %v1585 = vcvt.s32.f32 %v1584
    %s1586 = scalar_lea.vmem [#allocation8], 112
    %1587 = vst [vmem:[%s1586] sm:$0xff] %v1585
    %s1588 = scalar_lea.vmem [#allocation9], 112
    %1589 = vst [vmem:[%s1588] sm:$0xff] %v1582
    %v1590 = vmul.f32 %v1502, 0.95
    %v1591 = vmul.f32 %v1503, 0.95
    %v1592 = vadd.f32 %v1590, %v175
    %v1593 = vadd.f32 %v1591, %v177
    %v1594 = vsub.f32 %v1592, %v1508
    %v1595 = vsub.f32 %v1593, %v1509
    %vm1596 = vcmp.gt.f32.partialorder %v1594, 1.0
    %vm1597 = vcmp.gt.f32.partialorder %v1595, 1.0
    %v1598 = vsel %vm1596, 1, 0
    %v1599 = vsel %vm1597, 1, 0
    %v1600 = vcvt.s32.f32 %v1598
    %v1601 = vcvt.s32.f32 %v1599
    %1602 = vmatprep.subr.mxu0 0.0
    %1603 = vmatpush1.msra.mxu0 %v179
    %1604 = vmatprep.subr.mxu0 0.0
    %1605 = vmatpush1.msra.mxu0 %v180
    %1606 = vmatprep.subr.mxu0 0.0
    %1607 = vmatpush1.msra.mxu0 %v181
    %1608 = vmatprep.subr.mxu0 0.0
    %1609 = vmatpush1.msra.mxu0 %v182
    %1610 = vmatprep.subr.mxu0 0.0
    %1611 = vmatpush1.msra.mxu0 %v183
    %1612 = vmatprep.subr.mxu0 0.0
    %1613 = vmatpush1.msra.mxu0 %v184
    %1614 = vmatprep.subr.mxu0 0.0
    %1615 = vmatpush1.msra.mxu0 %v185
    %1616 = vmatprep.subr.mxu0 0.0
    %1617 = vmatpush1.msra.mxu0 %v186
    %1618 = vmatprep.subr.mxu0 0.0
    %1619 = vmatpush1.msra.mxu0 %v187
    %1620 = vmatprep.subr.mxu0 0.0
    %1621 = vmatpush1.msra.mxu0 %v188
    %1622 = vmatprep.subr.mxu0 0.0
    %1623 = vmatpush1.msra.mxu0 %v189
    %1624 = vmatprep.subr.mxu0 0.0
    %1625 = vmatpush1.msra.mxu0 %v190
    %1626 = vmatprep.subr.mxu0 0.0
    %1627 = vmatpush1.msra.mxu0 %v191
    %1628 = vmatprep.subr.mxu0 0.0
    %1629 = vmatpush1.msra.mxu0 %v192
    %1630 = vmatprep.subr.mxu0 0.0
    %1631 = vmatpush1.msra.mxu0 %v193
    %1632 = vmatprep.subr.mxu0 0.0
    %1633 = vmatpush1.msra.mxu0 %v194
    %1634 = vmatprep.subr.mxu0 0.0
    %1635 = vmatpush1.msra.mxu0 %v195
    %1636 = vmatprep.subr.mxu0 0.0
    %1637 = vmatpush1.msra.mxu0 %v196
    %1638 = vmatprep.subr.mxu0 0.0
    %1639 = vmatpush1.msra.mxu0 %v197
    %1640 = vmatprep.subr.mxu0 0.0
    %1641 = vmatpush1.msra.mxu0 %v198
    %1642 = vmatprep.subr.mxu0 0.0
    %1643 = vmatpush1.msra.mxu0 %v199
    %1644 = vmatprep.subr.mxu0 0.0
    %1645 = vmatpush1.msra.mxu0 %v200
    %1646 = vmatprep.subr.mxu0 0.0
    %1647 = vmatpush1.msra.mxu0 %v201
    %1648 = vmatprep.subr.mxu0 0.0
    %1649 = vmatpush1.msra.mxu0 %v202
    %1650 = vmatprep.subr.mxu0 0.0
    %1651 = vmatpush1.msra.mxu0 %v203
    %1652 = vmatprep.subr.mxu0 0.0
    %1653 = vmatpush1.msra.mxu0 %v204
    %1654 = vmatprep.subr.mxu0 0.0
    %1655 = vmatpush1.msra.mxu0 %v205
    %1656 = vmatprep.subr.mxu0 0.0
    %1657 = vmatpush1.msra.mxu0 %v206
    %1658 = vmatprep.subr.mxu0 0.0
    %1659 = vmatpush1.msra.mxu0 %v207
    %1660 = vmatprep.subr.mxu0 0.0
    %1661 = vmatpush1.msra.mxu0 %v208
    %1662 = vmatprep.subr.mxu0 0.0
    %1663 = vmatpush1.msra.mxu0 %v209
    %1664 = vmatprep.subr.mxu0 0.0
    %1665 = vmatpush1.msra.mxu0 %v210
    %1666 = vmatprep.mubr.f32.mxu0 %v1601
    %1667 = vmatmul.mubr.f32.gmra.mrb[0].mxu0 %v1600
    %v1668 = vpop.f32.mrb[0].mxu0
    %v1669 = vadd.f32 %v216, %v1668
    %v1670 = vpop.f32.mrb[0].mxu0
    %1671 = vdwg.mxu0
    %v1672 = vmul.f32 %v1582, 0.95
    %v1673 = vadd.f32 %v1672, %v1669
    %v1674 = vsub.f32 %v1673, %v1585
    %vm1675 = vcmp.gt.f32.partialorder %v1674, 1.0
    %v1676 = vsel %vm1675, 1, 0
    %v1677 = vcvt.s32.f32 %v1676
    %s1678 = scalar_lea.vmem [#allocation8], 120
    %1679 = vst [vmem:[%s1678] sm:$0xff] %v1677
    %s1680 = scalar_lea.vmem [#allocation9], 120
    %1681 = vst [vmem:[%s1680] sm:$0xff] %v1674
    %v1682 = vmul.f32 %v1594, 0.95
    %v1683 = vmul.f32 %v1595, 0.95
    %v1684 = vadd.f32 %v1682, %v175
    %v1685 = vadd.f32 %v1683, %v177
    %v1686 = vsub.f32 %v1684, %v1600
    %v1687 = vsub.f32 %v1685, %v1601
    %vm1688 = vcmp.gt.f32.partialorder %v1686, 1.0
    %vm1689 = vcmp.gt.f32.partialorder %v1687, 1.0
    %v1690 = vsel %vm1688, 1, 0
    %v1691 = vsel %vm1689, 1, 0
    %v1692 = vcvt.s32.f32 %v1690
    %v1693 = vcvt.s32.f32 %v1691
    %1694 = vmatprep.subr.mxu0 0.0
    %1695 = vmatpush1.msra.mxu0 %v179
    %1696 = vmatprep.subr.mxu0 0.0
    %1697 = vmatpush1.msra.mxu0 %v180
    %1698 = vmatprep.subr.mxu0 0.0
    %1699 = vmatpush1.msra.mxu0 %v181
    %1700 = vmatprep.subr.mxu0 0.0
    %1701 = vmatpush1.msra.mxu0 %v182
    %1702 = vmatprep.subr.mxu0 0.0
    %1703 = vmatpush1.msra.mxu0 %v183
    %1704 = vmatprep.subr.mxu0 0.0
    %1705 = vmatpush1.msra.mxu0 %v184
    %1706 = vmatprep.subr.mxu0 0.0
    %1707 = vmatpush1.msra.mxu0 %v185
    %1708 = vmatprep.subr.mxu0 0.0
    %1709 = vmatpush1.msra.mxu0 %v186
    %1710 = vmatprep.subr.mxu0 0.0
    %1711 = vmatpush1.msra.mxu0 %v187
    %1712 = vmatprep.subr.mxu0 0.0
    %1713 = vmatpush1.msra.mxu0 %v188
    %1714 = vmatprep.subr.mxu0 0.0
    %1715 = vmatpush1.msra.mxu0 %v189
    %1716 = vmatprep.subr.mxu0 0.0
    %1717 = vmatpush1.msra.mxu0 %v190
    %1718 = vmatprep.subr.mxu0 0.0
    %1719 = vmatpush1.msra.mxu0 %v191
    %1720 = vmatprep.subr.mxu0 0.0
    %1721 = vmatpush1.msra.mxu0 %v192
    %1722 = vmatprep.subr.mxu0 0.0
    %1723 = vmatpush1.msra.mxu0 %v193
    %1724 = vmatprep.subr.mxu0 0.0
    %1725 = vmatpush1.msra.mxu0 %v194
    %1726 = vmatprep.subr.mxu0 0.0
    %1727 = vmatpush1.msra.mxu0 %v195
    %1728 = vmatprep.subr.mxu0 0.0
    %1729 = vmatpush1.msra.mxu0 %v196
    %1730 = vmatprep.subr.mxu0 0.0
    %1731 = vmatpush1.msra.mxu0 %v197
    %1732 = vmatprep.subr.mxu0 0.0
    %1733 = vmatpush1.msra.mxu0 %v198
    %1734 = vmatprep.subr.mxu0 0.0
    %1735 = vmatpush1.msra.mxu0 %v199
    %1736 = vmatprep.subr.mxu0 0.0
    %1737 = vmatpush1.msra.mxu0 %v200
    %1738 = vmatprep.subr.mxu0 0.0
    %1739 = vmatpush1.msra.mxu0 %v201
    %1740 = vmatprep.subr.mxu0 0.0
    %1741 = vmatpush1.msra.mxu0 %v202
    %1742 = vmatprep.subr.mxu0 0.0
    %1743 = vmatpush1.msra.mxu0 %v203
    %1744 = vmatprep.subr.mxu0 0.0
    %1745 = vmatpush1.msra.mxu0 %v204
    %1746 = vmatprep.subr.mxu0 0.0
    %1747 = vmatpush1.msra.mxu0 %v205
    %1748 = vmatprep.subr.mxu0 0.0
    %1749 = vmatpush1.msra.mxu0 %v206
    %1750 = vmatprep.subr.mxu0 0.0
    %1751 = vmatpush1.msra.mxu0 %v207
    %1752 = vmatprep.subr.mxu0 0.0
    %1753 = vmatpush1.msra.mxu0 %v208
    %1754 = vmatprep.subr.mxu0 0.0
    %1755 = vmatpush1.msra.mxu0 %v209
    %1756 = vmatprep.subr.mxu0 0.0
    %1757 = vmatpush1.msra.mxu0 %v210
    %1758 = vmatprep.mubr.f32.mxu0 %v1693
    %1759 = vmatmul.mubr.f32.gmra.mrb[0].mxu0 %v1692
    %v1760 = vpop.f32.mrb[0].mxu0
    %v1761 = vadd.f32 %v216, %v1760
    %v1762 = vpop.f32.mrb[0].mxu0
    %1763 = vdwg.mxu0
    %v1764 = vmul.f32 %v1674, 0.95
    %v1765 = vadd.f32 %v1764, %v1761
    %v1766 = vsub.f32 %v1765, %v1677
    %vm1767 = vcmp.gt.f32.partialorder %v1766, 1.0
    %v1768 = vsel %vm1767, 1, 0
    %v1769 = vcvt.s32.f32 %v1768
    %s1770 = scalar_lea.vmem [#allocation8], 128
    %1771 = vst [vmem:[%s1770] sm:$0xff] %v1769
    %s1772 = scalar_lea.vmem [#allocation9], 128
    %1773 = vst [vmem:[%s1772] sm:$0xff] %v1766
    %v1774 = vmul.f32 %v1686, 0.95
    %v1775 = vmul.f32 %v1687, 0.95
    %v1776 = vadd.f32 %v1774, %v175
    %v1777 = vadd.f32 %v1775, %v177
    %v1778 = vsub.f32 %v1776, %v1692
    %v1779 = vsub.f32 %v1777, %v1693
    %vm1780 = vcmp.gt.f32.partialorder %v1778, 1.0
    %vm1781 = vcmp.gt.f32.partialorder %v1779, 1.0
    %v1782 = vsel %vm1780, 1, 0
    %v1783 = vsel %vm1781, 1, 0
    %v1784 = vcvt.s32.f32 %v1782
    %v1785 = vcvt.s32.f32 %v1783
    %1786 = vmatprep.subr.mxu0 0.0
    %1787 = vmatpush1.msra.mxu0 %v179
    %1788 = vmatprep.subr.mxu0 0.0
    %1789 = vmatpush1.msra.mxu0 %v180
    %1790 = vmatprep.subr.mxu0 0.0
    %1791 = vmatpush1.msra.mxu0 %v181
    %1792 = vmatprep.subr.mxu0 0.0
    %1793 = vmatpush1.msra.mxu0 %v182
    %1794 = vmatprep.subr.mxu0 0.0
    %1795 = vmatpush1.msra.mxu0 %v183
    %1796 = vmatprep.subr.mxu0 0.0
    %1797 = vmatpush1.msra.mxu0 %v184
    %1798 = vmatprep.subr.mxu0 0.0
    %1799 = vmatpush1.msra.mxu0 %v185
    %1800 = vmatprep.subr.mxu0 0.0
    %1801 = vmatpush1.msra.mxu0 %v186
    %1802 = vmatprep.subr.mxu0 0.0
    %1803 = vmatpush1.msra.mxu0 %v187
    %1804 = vmatprep.subr.mxu0 0.0
    %1805 = vmatpush1.msra.mxu0 %v188
    %1806 = vmatprep.subr.mxu0 0.0
    %1807 = vmatpush1.msra.mxu0 %v189
    %1808 = vmatprep.subr.mxu0 0.0
    %1809 = vmatpush1.msra.mxu0 %v190
    %1810 = vmatprep.subr.mxu0 0.0
    %1811 = vmatpush1.msra.mxu0 %v191
    %1812 = vmatprep.subr.mxu0 0.0
    %1813 = vmatpush1.msra.mxu0 %v192
    %1814 = vmatprep.subr.mxu0 0.0
    %1815 = vmatpush1.msra.mxu0 %v193
    %1816 = vmatprep.subr.mxu0 0.0
    %1817 = vmatpush1.msra.mxu0 %v194
    %1818 = vmatprep.subr.mxu0 0.0
    %1819 = vmatpush1.msra.mxu0 %v195
    %1820 = vmatprep.subr.mxu0 0.0
    %1821 = vmatpush1.msra.mxu0 %v196
    %1822 = vmatprep.subr.mxu0 0.0
    %1823 = vmatpush1.msra.mxu0 %v197
    %1824 = vmatprep.subr.mxu0 0.0
    %1825 = vmatpush1.msra.mxu0 %v198
    %1826 = vmatprep.subr.mxu0 0.0
    %1827 = vmatpush1.msra.mxu0 %v199
    %1828 = vmatprep.subr.mxu0 0.0
    %1829 = vmatpush1.msra.mxu0 %v200
    %1830 = vmatprep.subr.mxu0 0.0
    %1831 = vmatpush1.msra.mxu0 %v201
    %1832 = vmatprep.subr.mxu0 0.0
    %1833 = vmatpush1.msra.mxu0 %v202
    %1834 = vmatprep.subr.mxu0 0.0
    %1835 = vmatpush1.msra.mxu0 %v203
    %1836 = vmatprep.subr.mxu0 0.0
    %1837 = vmatpush1.msra.mxu0 %v204
    %1838 = vmatprep.subr.mxu0 0.0
    %1839 = vmatpush1.msra.mxu0 %v205
    %1840 = vmatprep.subr.mxu0 0.0
    %1841 = vmatpush1.msra.mxu0 %v206
    %1842 = vmatprep.subr.mxu0 0.0
    %1843 = vmatpush1.msra.mxu0 %v207
    %1844 = vmatprep.subr.mxu0 0.0
    %1845 = vmatpush1.msra.mxu0 %v208
    %1846 = vmatprep.subr.mxu0 0.0
    %1847 = vmatpush1.msra.mxu0 %v209
    %1848 = vmatprep.subr.mxu0 0.0
    %1849 = vmatpush1.msra.mxu0 %v210
    %1850 = vmatprep.mubr.f32.mxu0 %v1785
    %1851 = vmatmul.mubr.f32.gmra.mrb[0].mxu0 %v1784
    %v1852 = vpop.f32.mrb[0].mxu0
    %v1853 = vadd.f32 %v216, %v1852
    %v1854 = vpop.f32.mrb[0].mxu0
    %1855 = vdwg.mxu0
    %v1856 = vmul.f32 %v1766, 0.95
    %v1857 = vadd.f32 %v1856, %v1853
    %v1858 = vsub.f32 %v1857, %v1769
    %vm1859 = vcmp.gt.f32.partialorder %v1858, 1.0
    %v1860 = vsel %vm1859, 1, 0
    %v1861 = vcvt.s32.f32 %v1860
    %s1862 = scalar_lea.vmem [#allocation8], 136
    %1863 = vst [vmem:[%s1862] sm:$0xff] %v1861
    %s1864 = scalar_lea.vmem [#allocation9], 136
    %1865 = vst [vmem:[%s1864] sm:$0xff] %v1858
    %v1866 = vmul.f32 %v1778, 0.95
    %v1867 = vmul.f32 %v1779, 0.95
    %v1868 = vadd.f32 %v1866, %v175
    %v1869 = vadd.f32 %v1867, %v177
    %v1870 = vsub.f32 %v1868, %v1784
    %v1871 = vsub.f32 %v1869, %v1785
    %vm1872 = vcmp.gt.f32.partialorder %v1870, 1.0
    %vm1873 = vcmp.gt.f32.partialorder %v1871, 1.0
    %v1874 = vsel %vm1872, 1, 0
    %v1875 = vsel %vm1873, 1, 0
    %v1876 = vcvt.s32.f32 %v1874
    %v1877 = vcvt.s32.f32 %v1875
    %1878 = vmatprep.subr.mxu0 0.0
    %1879 = vmatpush1.msra.mxu0 %v179
    %1880 = vmatprep.subr.mxu0 0.0
    %1881 = vmatpush1.msra.mxu0 %v180
    %1882 = vmatprep.subr.mxu0 0.0
    %1883 = vmatpush1.msra.mxu0 %v181
    %1884 = vmatprep.subr.mxu0 0.0
    %1885 = vmatpush1.msra.mxu0 %v182
    %1886 = vmatprep.subr.mxu0 0.0
    %1887 = vmatpush1.msra.mxu0 %v183
    %1888 = vmatprep.subr.mxu0 0.0
    %1889 = vmatpush1.msra.mxu0 %v184
    %1890 = vmatprep.subr.mxu0 0.0
    %1891 = vmatpush1.msra.mxu0 %v185
    %1892 = vmatprep.subr.mxu0 0.0
    %1893 = vmatpush1.msra.mxu0 %v186
    %1894 = vmatprep.subr.mxu0 0.0
    %1895 = vmatpush1.msra.mxu0 %v187
    %1896 = vmatprep.subr.mxu0 0.0
    %1897 = vmatpush1.msra.mxu0 %v188
    %1898 = vmatprep.subr.mxu0 0.0
    %1899 = vmatpush1.msra.mxu0 %v189
    %1900 = vmatprep.subr.mxu0 0.0
    %1901 = vmatpush1.msra.mxu0 %v190
    %1902 = vmatprep.subr.mxu0 0.0
    %1903 = vmatpush1.msra.mxu0 %v191
    %1904 = vmatprep.subr.mxu0 0.0
    %1905 = vmatpush1.msra.mxu0 %v192
    %1906 = vmatprep.subr.mxu0 0.0
    %1907 = vmatpush1.msra.mxu0 %v193
    %1908 = vmatprep.subr.mxu0 0.0
    %1909 = vmatpush1.msra.mxu0 %v194
    %1910 = vmatprep.subr.mxu0 0.0
    %1911 = vmatpush1.msra.mxu0 %v195
    %1912 = vmatprep.subr.mxu0 0.0
    %1913 = vmatpush1.msra.mxu0 %v196
    %1914 = vmatprep.subr.mxu0 0.0
    %1915 = vmatpush1.msra.mxu0 %v197
    %1916 = vmatprep.subr.mxu0 0.0
    %1917 = vmatpush1.msra.mxu0 %v198
    %1918 = vmatprep.subr.mxu0 0.0
    %1919 = vmatpush1.msra.mxu0 %v199
    %1920 = vmatprep.subr.mxu0 0.0
    %1921 = vmatpush1.msra.mxu0 %v200
    %1922 = vmatprep.subr.mxu0 0.0
    %1923 = vmatpush1.msra.mxu0 %v201
    %1924 = vmatprep.subr.mxu0 0.0
    %1925 = vmatpush1.msra.mxu0 %v202
    %1926 = vmatprep.subr.mxu0 0.0
    %1927 = vmatpush1.msra.mxu0 %v203
    %1928 = vmatprep.subr.mxu0 0.0
    %1929 = vmatpush1.msra.mxu0 %v204
    %1930 = vmatprep.subr.mxu0 0.0
    %1931 = vmatpush1.msra.mxu0 %v205
    %1932 = vmatprep.subr.mxu0 0.0
    %1933 = vmatpush1.msra.mxu0 %v206
    %1934 = vmatprep.subr.mxu0 0.0
    %1935 = vmatpush1.msra.mxu0 %v207
    %1936 = vmatprep.subr.mxu0 0.0
    %1937 = vmatpush1.msra.mxu0 %v208
    %1938 = vmatprep.subr.mxu0 0.0
    %1939 = vmatpush1.msra.mxu0 %v209
    %1940 = vmatprep.subr.mxu0 0.0
    %1941 = vmatpush1.msra.mxu0 %v210
    %1942 = vmatprep.mubr.f32.mxu0 %v1877
    %1943 = vmatmul.mubr.f32.gmra.mrb[0].mxu0 %v1876
    %v1944 = vpop.f32.mrb[0].mxu0
    %v1945 = vadd.f32 %v216, %v1944
    %v1946 = vpop.f32.mrb[0].mxu0
    %1947 = vdwg.mxu0
    %v1948 = vmul.f32 %v1858, 0.95
    %v1949 = vadd.f32 %v1948, %v1945
    %v1950 = vsub.f32 %v1949, %v1861
    %vm1951 = vcmp.gt.f32.partialorder %v1950, 1.0
    %v1952 = vsel %vm1951, 1, 0
    %v1953 = vcvt.s32.f32 %v1952
    %s1954 = scalar_lea.vmem [#allocation8], 144
    %1955 = vst [vmem:[%s1954] sm:$0xff] %v1953
    %s1956 = scalar_lea.vmem [#allocation9], 144
    %1957 = vst [vmem:[%s1956] sm:$0xff] %v1950
    %v1958 = vmul.f32 %v1870, 0.95
    %v1959 = vmul.f32 %v1871, 0.95
    %v1960 = vadd.f32 %v1958, %v175
    %v1961 = vadd.f32 %v1959, %v177
    %v1962 = vsub.f32 %v1960, %v1876
    %v1963 = vsub.f32 %v1961, %v1877
    %vm1964 = vcmp.gt.f32.partialorder %v1962, 1.0
    %vm1965 = vcmp.gt.f32.partialorder %v1963, 1.0
    %v1966 = vsel %vm1964, 1, 0
    %v1967 = vsel %vm1965, 1, 0
    %v1968 = vcvt.s32.f32 %v1966
    %v1969 = vcvt.s32.f32 %v1967
    %1970 = vmatprep.subr.mxu0 0.0
    %1971 = vmatpush1.msra.mxu0 %v179
    %1972 = vmatprep.subr.mxu0 0.0
    %1973 = vmatpush1.msra.mxu0 %v180
    %1974 = vmatprep.subr.mxu0 0.0
    %1975 = vmatpush1.msra.mxu0 %v181
    %1976 = vmatprep.subr.mxu0 0.0
    %1977 = vmatpush1.msra.mxu0 %v182
    %1978 = vmatprep.subr.mxu0 0.0
    %1979 = vmatpush1.msra.mxu0 %v183
    %1980 = vmatprep.subr.mxu0 0.0
    %1981 = vmatpush1.msra.mxu0 %v184
    %1982 = vmatprep.subr.mxu0 0.0
    %1983 = vmatpush1.msra.mxu0 %v185
    %1984 = vmatprep.subr.mxu0 0.0
    %1985 = vmatpush1.msra.mxu0 %v186
    %1986 = vmatprep.subr.mxu0 0.0
    %1987 = vmatpush1.msra.mxu0 %v187
    %1988 = vmatprep.subr.mxu0 0.0
    %1989 = vmatpush1.msra.mxu0 %v188
    %1990 = vmatprep.subr.mxu0 0.0
    %1991 = vmatpush1.msra.mxu0 %v189
    %1992 = vmatprep.subr.mxu0 0.0
    %1993 = vmatpush1.msra.mxu0 %v190
    %1994 = vmatprep.subr.mxu0 0.0
    %1995 = vmatpush1.msra.mxu0 %v191
    %1996 = vmatprep.subr.mxu0 0.0
    %1997 = vmatpush1.msra.mxu0 %v192
    %1998 = vmatprep.subr.mxu0 0.0
    %1999 = vmatpush1.msra.mxu0 %v193
    %2000 = vmatprep.subr.mxu0 0.0
    %2001 = vmatpush1.msra.mxu0 %v194
    %2002 = vmatprep.subr.mxu0 0.0
    %2003 = vmatpush1.msra.mxu0 %v195
    %2004 = vmatprep.subr.mxu0 0.0
    %2005 = vmatpush1.msra.mxu0 %v196
    %2006 = vmatprep.subr.mxu0 0.0
    %2007 = vmatpush1.msra.mxu0 %v197
    %2008 = vmatprep.subr.mxu0 0.0
    %2009 = vmatpush1.msra.mxu0 %v198
    %2010 = vmatprep.subr.mxu0 0.0
    %2011 = vmatpush1.msra.mxu0 %v199
    %2012 = vmatprep.subr.mxu0 0.0
    %2013 = vmatpush1.msra.mxu0 %v200
    %2014 = vmatprep.subr.mxu0 0.0
    %2015 = vmatpush1.msra.mxu0 %v201
    %2016 = vmatprep.subr.mxu0 0.0
    %2017 = vmatpush1.msra.mxu0 %v202
    %2018 = vmatprep.subr.mxu0 0.0
    %2019 = vmatpush1.msra.mxu0 %v203
    %2020 = vmatprep.subr.mxu0 0.0
    %2021 = vmatpush1.msra.mxu0 %v204
    %2022 = vmatprep.subr.mxu0 0.0
    %2023 = vmatpush1.msra.mxu0 %v205
    %2024 = vmatprep.subr.mxu0 0.0
    %2025 = vmatpush1.msra.mxu0 %v206
    %2026 = vmatprep.subr.mxu0 0.0
    %2027 = vmatpush1.msra.mxu0 %v207
    %2028 = vmatprep.subr.mxu0 0.0
    %2029 = vmatpush1.msra.mxu0 %v208
    %2030 = vmatprep.subr.mxu0 0.0
    %2031 = vmatpush1.msra.mxu0 %v209
    %2032 = vmatprep.subr.mxu0 0.0
    %2033 = vmatpush1.msra.mxu0 %v210
    %2034 = vmatprep.mubr.f32.mxu0 %v1969
    %2035 = vmatmul.mubr.f32.gmra.mrb[0].mxu0 %v1968
    %v2036 = vpop.f32.mrb[0].mxu0
    %v2037 = vadd.f32 %v216, %v2036
    %v2038 = vpop.f32.mrb[0].mxu0
    %2039 = vdwg.mxu0
    %v2040 = vmul.f32 %v1950, 0.95
    %v2041 = vadd.f32 %v2040, %v2037
    %v2042 = vsub.f32 %v2041, %v1953
    %vm2043 = vcmp.gt.f32.partialorder %v2042, 1.0
    %v2044 = vsel %vm2043, 1, 0
    %v2045 = vcvt.s32.f32 %v2044
    %s2046 = scalar_lea.vmem [#allocation8], 152
    %2047 = vst [vmem:[%s2046] sm:$0xff] %v2045
    %s2048 = scalar_lea.vmem [#allocation9], 152
    %2049 = vst [vmem:[%s2048] sm:$0xff] %v2042
    %v2050 = vmul.f32 %v1962, 0.95
    %v2051 = vmul.f32 %v1963, 0.95
    %v2052 = vadd.f32 %v2050, %v175
    %v2053 = vadd.f32 %v2051, %v177
    %v2054 = vsub.f32 %v2052, %v1968
    %v2055 = vsub.f32 %v2053, %v1969
    %vm2056 = vcmp.gt.f32.partialorder %v2054, 1.0
    %vm2057 = vcmp.gt.f32.partialorder %v2055, 1.0
    %v2058 = vsel %vm2056, 1, 0
    %v2059 = vsel %vm2057, 1, 0
    %v2060 = vcvt.s32.f32 %v2058
    %v2061 = vcvt.s32.f32 %v2059
    %2062 = vmatprep.subr.mxu0 0.0
    %2063 = vmatpush1.msra.mxu0 %v179
    %2064 = vmatprep.subr.mxu0 0.0
    %2065 = vmatpush1.msra.mxu0 %v180
    %2066 = vmatprep.subr.mxu0 0.0
    %2067 = vmatpush1.msra.mxu0 %v181
    %2068 = vmatprep.subr.mxu0 0.0
    %2069 = vmatpush1.msra.mxu0 %v182
    %2070 = vmatprep.subr.mxu0 0.0
    %2071 = vmatpush1.msra.mxu0 %v183
    %2072 = vmatprep.subr.mxu0 0.0
    %2073 = vmatpush1.msra.mxu0 %v184
    %2074 = vmatprep.subr.mxu0 0.0
    %2075 = vmatpush1.msra.mxu0 %v185
    %2076 = vmatprep.subr.mxu0 0.0
    %2077 = vmatpush1.msra.mxu0 %v186
    %2078 = vmatprep.subr.mxu0 0.0
    %2079 = vmatpush1.msra.mxu0 %v187
    %2080 = vmatprep.subr.mxu0 0.0
    %2081 = vmatpush1.msra.mxu0 %v188
    %2082 = vmatprep.subr.mxu0 0.0
    %2083 = vmatpush1.msra.mxu0 %v189
    %2084 = vmatprep.subr.mxu0 0.0
    %2085 = vmatpush1.msra.mxu0 %v190
    %2086 = vmatprep.subr.mxu0 0.0
    %2087 = vmatpush1.msra.mxu0 %v191
    %2088 = vmatprep.subr.mxu0 0.0
    %2089 = vmatpush1.msra.mxu0 %v192
    %2090 = vmatprep.subr.mxu0 0.0
    %2091 = vmatpush1.msra.mxu0 %v193
    %2092 = vmatprep.subr.mxu0 0.0
    %2093 = vmatpush1.msra.mxu0 %v194
    %2094 = vmatprep.subr.mxu0 0.0
    %2095 = vmatpush1.msra.mxu0 %v195
    %2096 = vmatprep.subr.mxu0 0.0
    %2097 = vmatpush1.msra.mxu0 %v196
    %2098 = vmatprep.subr.mxu0 0.0
    %2099 = vmatpush1.msra.mxu0 %v197
    %2100 = vmatprep.subr.mxu0 0.0
    %2101 = vmatpush1.msra.mxu0 %v198
    %2102 = vmatprep.subr.mxu0 0.0
    %2103 = vmatpush1.msra.mxu0 %v199
    %2104 = vmatprep.subr.mxu0 0.0
    %2105 = vmatpush1.msra.mxu0 %v200
    %2106 = vmatprep.subr.mxu0 0.0
    %2107 = vmatpush1.msra.mxu0 %v201
    %2108 = vmatprep.subr.mxu0 0.0
    %2109 = vmatpush1.msra.mxu0 %v202
    %2110 = vmatprep.subr.mxu0 0.0
    %2111 = vmatpush1.msra.mxu0 %v203
    %2112 = vmatprep.subr.mxu0 0.0
    %2113 = vmatpush1.msra.mxu0 %v204
    %2114 = vmatprep.subr.mxu0 0.0
    %2115 = vmatpush1.msra.mxu0 %v205
    %2116 = vmatprep.subr.mxu0 0.0
    %2117 = vmatpush1.msra.mxu0 %v206
    %2118 = vmatprep.subr.mxu0 0.0
    %2119 = vmatpush1.msra.mxu0 %v207
    %2120 = vmatprep.subr.mxu0 0.0
    %2121 = vmatpush1.msra.mxu0 %v208
    %2122 = vmatprep.subr.mxu0 0.0
    %2123 = vmatpush1.msra.mxu0 %v209
    %2124 = vmatprep.subr.mxu0 0.0
    %2125 = vmatpush1.msra.mxu0 %v210
    %2126 = vmatprep.mubr.f32.mxu0 %v2061
    %2127 = vmatmul.mubr.f32.gmra.mrb[0].mxu0 %v2060
    %v2128 = vpop.f32.mrb[0].mxu0
    %v2129 = vadd.f32 %v216, %v2128
    %v2130 = vpop.f32.mrb[0].mxu0
    %2131 = vdwg.mxu0
    %v2132 = vmul.f32 %v2042, 0.95
    %v2133 = vadd.f32 %v2132, %v2129
    %v2134 = vsub.f32 %v2133, %v2045
    %vm2135 = vcmp.gt.f32.partialorder %v2134, 1.0
    %v2136 = vsel %vm2135, 1, 0
    %v2137 = vcvt.s32.f32 %v2136
    %s2138 = scalar_lea.vmem [#allocation8], 160
    %2139 = vst [vmem:[%s2138] sm:$0xff] %v2137
    %s2140 = scalar_lea.vmem [#allocation9], 160
    %2141 = vst [vmem:[%s2140] sm:$0xff] %v2134
    %v2142 = vmul.f32 %v2054, 0.95
    %v2143 = vmul.f32 %v2055, 0.95
    %v2144 = vadd.f32 %v2142, %v175
    %v2145 = vadd.f32 %v2143, %v177
    %v2146 = vsub.f32 %v2144, %v2060
    %v2147 = vsub.f32 %v2145, %v2061
    %vm2148 = vcmp.gt.f32.partialorder %v2146, 1.0
    %vm2149 = vcmp.gt.f32.partialorder %v2147, 1.0
    %v2150 = vsel %vm2148, 1, 0
    %v2151 = vsel %vm2149, 1, 0
    %v2152 = vcvt.s32.f32 %v2150
    %v2153 = vcvt.s32.f32 %v2151
    %2154 = vmatprep.subr.mxu0 0.0
    %2155 = vmatpush1.msra.mxu0 %v179
    %2156 = vmatprep.subr.mxu0 0.0
    %2157 = vmatpush1.msra.mxu0 %v180
    %2158 = vmatprep.subr.mxu0 0.0
    %2159 = vmatpush1.msra.mxu0 %v181
    %2160 = vmatprep.subr.mxu0 0.0
    %2161 = vmatpush1.msra.mxu0 %v182
    %2162 = vmatprep.subr.mxu0 0.0
    %2163 = vmatpush1.msra.mxu0 %v183
    %2164 = vmatprep.subr.mxu0 0.0
    %2165 = vmatpush1.msra.mxu0 %v184
    %2166 = vmatprep.subr.mxu0 0.0
    %2167 = vmatpush1.msra.mxu0 %v185
    %2168 = vmatprep.subr.mxu0 0.0
    %2169 = vmatpush1.msra.mxu0 %v186
    %2170 = vmatprep.subr.mxu0 0.0
    %2171 = vmatpush1.msra.mxu0 %v187
    %2172 = vmatprep.subr.mxu0 0.0
    %2173 = vmatpush1.msra.mxu0 %v188
    %2174 = vmatprep.subr.mxu0 0.0
    %2175 = vmatpush1.msra.mxu0 %v189
    %2176 = vmatprep.subr.mxu0 0.0
    %2177 = vmatpush1.msra.mxu0 %v190
    %2178 = vmatprep.subr.mxu0 0.0
    %2179 = vmatpush1.msra.mxu0 %v191
    %2180 = vmatprep.subr.mxu0 0.0
    %2181 = vmatpush1.msra.mxu0 %v192
    %2182 = vmatprep.subr.mxu0 0.0
    %2183 = vmatpush1.msra.mxu0 %v193
    %2184 = vmatprep.subr.mxu0 0.0
    %2185 = vmatpush1.msra.mxu0 %v194
    %2186 = vmatprep.subr.mxu0 0.0
    %2187 = vmatpush1.msra.mxu0 %v195
    %2188 = vmatprep.subr.mxu0 0.0
    %2189 = vmatpush1.msra.mxu0 %v196
    %2190 = vmatprep.subr.mxu0 0.0
    %2191 = vmatpush1.msra.mxu0 %v197
    %2192 = vmatprep.subr.mxu0 0.0
    %2193 = vmatpush1.msra.mxu0 %v198
    %2194 = vmatprep.subr.mxu0 0.0
    %2195 = vmatpush1.msra.mxu0 %v199
    %2196 = vmatprep.subr.mxu0 0.0
    %2197 = vmatpush1.msra.mxu0 %v200
    %2198 = vmatprep.subr.mxu0 0.0
    %2199 = vmatpush1.msra.mxu0 %v201
    %2200 = vmatprep.subr.mxu0 0.0
    %2201 = vmatpush1.msra.mxu0 %v202
    %2202 = vmatprep.subr.mxu0 0.0
    %2203 = vmatpush1.msra.mxu0 %v203
    %2204 = vmatprep.subr.mxu0 0.0
    %2205 = vmatpush1.msra.mxu0 %v204
    %2206 = vmatprep.subr.mxu0 0.0
    %2207 = vmatpush1.msra.mxu0 %v205
    %2208 = vmatprep.subr.mxu0 0.0
    %2209 = vmatpush1.msra.mxu0 %v206
    %2210 = vmatprep.subr.mxu0 0.0
    %2211 = vmatpush1.msra.mxu0 %v207
    %2212 = vmatprep.subr.mxu0 0.0
    %2213 = vmatpush1.msra.mxu0 %v208
    %2214 = vmatprep.subr.mxu0 0.0
    %2215 = vmatpush1.msra.mxu0 %v209
    %2216 = vmatprep.subr.mxu0 0.0
    %2217 = vmatpush1.msra.mxu0 %v210
    %2218 = vmatprep.mubr.f32.mxu0 %v2153
    %2219 = vmatmul.mubr.f32.gmra.mrb[0].mxu0 %v2152
    %v2220 = vpop.f32.mrb[0].mxu0
    %v2221 = vadd.f32 %v216, %v2220
    %v2222 = vpop.f32.mrb[0].mxu0
    %2223 = vdwg.mxu0
    %v2224 = vmul.f32 %v2134, 0.95
    %v2225 = vadd.f32 %v2224, %v2221
    %v2226 = vsub.f32 %v2225, %v2137
    %vm2227 = vcmp.gt.f32.partialorder %v2226, 1.0
    %v2228 = vsel %vm2227, 1, 0
    %v2229 = vcvt.s32.f32 %v2228
    %s2230 = scalar_lea.vmem [#allocation8], 168
    %2231 = vst [vmem:[%s2230] sm:$0xff] %v2229
    %s2232 = scalar_lea.vmem [#allocation9], 168
    %2233 = vst [vmem:[%s2232] sm:$0xff] %v2226
    %v2234 = vmul.f32 %v2146, 0.95
    %v2235 = vmul.f32 %v2147, 0.95
    %v2236 = vadd.f32 %v2234, %v175
    %v2237 = vadd.f32 %v2235, %v177
    %v2238 = vsub.f32 %v2236, %v2152
    %v2239 = vsub.f32 %v2237, %v2153
    %vm2240 = vcmp.gt.f32.partialorder %v2238, 1.0
    %vm2241 = vcmp.gt.f32.partialorder %v2239, 1.0
    %v2242 = vsel %vm2240, 1, 0
    %v2243 = vsel %vm2241, 1, 0
    %v2244 = vcvt.s32.f32 %v2242
    %v2245 = vcvt.s32.f32 %v2243
    %2246 = vmatprep.subr.mxu0 0.0
    %2247 = vmatpush1.msra.mxu0 %v179
    %2248 = vmatprep.subr.mxu0 0.0
    %2249 = vmatpush1.msra.mxu0 %v180
    %2250 = vmatprep.subr.mxu0 0.0
    %2251 = vmatpush1.msra.mxu0 %v181
    %2252 = vmatprep.subr.mxu0 0.0
    %2253 = vmatpush1.msra.mxu0 %v182
    %2254 = vmatprep.subr.mxu0 0.0
    %2255 = vmatpush1.msra.mxu0 %v183
    %2256 = vmatprep.subr.mxu0 0.0
    %2257 = vmatpush1.msra.mxu0 %v184
    %2258 = vmatprep.subr.mxu0 0.0
    %2259 = vmatpush1.msra.mxu0 %v185
    %2260 = vmatprep.subr.mxu0 0.0
    %2261 = vmatpush1.msra.mxu0 %v186
    %2262 = vmatprep.subr.mxu0 0.0
    %2263 = vmatpush1.msra.mxu0 %v187
    %2264 = vmatprep.subr.mxu0 0.0
    %2265 = vmatpush1.msra.mxu0 %v188
    %2266 = vmatprep.subr.mxu0 0.0
    %2267 = vmatpush1.msra.mxu0 %v189
    %2268 = vmatprep.subr.mxu0 0.0
    %2269 = vmatpush1.msra.mxu0 %v190
    %2270 = vmatprep.subr.mxu0 0.0
    %2271 = vmatpush1.msra.mxu0 %v191
    %2272 = vmatprep.subr.mxu0 0.0
    %2273 = vmatpush1.msra.mxu0 %v192
    %2274 = vmatprep.subr.mxu0 0.0
    %2275 = vmatpush1.msra.mxu0 %v193
    %2276 = vmatprep.subr.mxu0 0.0
    %2277 = vmatpush1.msra.mxu0 %v194
    %2278 = vmatprep.subr.mxu0 0.0
    %2279 = vmatpush1.msra.mxu0 %v195
    %2280 = vmatprep.subr.mxu0 0.0
    %2281 = vmatpush1.msra.mxu0 %v196
    %2282 = vmatprep.subr.mxu0 0.0
    %2283 = vmatpush1.msra.mxu0 %v197
    %2284 = vmatprep.subr.mxu0 0.0
    %2285 = vmatpush1.msra.mxu0 %v198
    %2286 = vmatprep.subr.mxu0 0.0
    %2287 = vmatpush1.msra.mxu0 %v199
    %2288 = vmatprep.subr.mxu0 0.0
    %2289 = vmatpush1.msra.mxu0 %v200
    %2290 = vmatprep.subr.mxu0 0.0
    %2291 = vmatpush1.msra.mxu0 %v201
    %2292 = vmatprep.subr.mxu0 0.0
    %2293 = vmatpush1.msra.mxu0 %v202
    %2294 = vmatprep.subr.mxu0 0.0
    %2295 = vmatpush1.msra.mxu0 %v203
    %2296 = vmatprep.subr.mxu0 0.0
    %2297 = vmatpush1.msra.mxu0 %v204
    %2298 = vmatprep.subr.mxu0 0.0
    %2299 = vmatpush1.msra.mxu0 %v205
    %2300 = vmatprep.subr.mxu0 0.0
    %2301 = vmatpush1.msra.mxu0 %v206
    %2302 = vmatprep.subr.mxu0 0.0
    %2303 = vmatpush1.msra.mxu0 %v207
    %2304 = vmatprep.subr.mxu0 0.0
    %2305 = vmatpush1.msra.mxu0 %v208
    %2306 = vmatprep.subr.mxu0 0.0
    %2307 = vmatpush1.msra.mxu0 %v209
    %2308 = vmatprep.subr.mxu0 0.0
    %2309 = vmatpush1.msra.mxu0 %v210
    %2310 = vmatprep.mubr.f32.mxu0 %v2245
    %2311 = vmatmul.mubr.f32.gmra.mrb[0].mxu0 %v2244
    %v2312 = vpop.f32.mrb[0].mxu0
    %v2313 = vadd.f32 %v216, %v2312
    %v2314 = vpop.f32.mrb[0].mxu0
    %2315 = vdwg.mxu0
    %v2316 = vmul.f32 %v2226, 0.95
    %v2317 = vadd.f32 %v2316, %v2313
    %v2318 = vsub.f32 %v2317, %v2229
    %vm2319 = vcmp.gt.f32.partialorder %v2318, 1.0
    %v2320 = vsel %vm2319, 1, 0
    %v2321 = vcvt.s32.f32 %v2320
    %s2322 = scalar_lea.vmem [#allocation8], 176
    %2323 = vst [vmem:[%s2322] sm:$0xff] %v2321
    %s2324 = scalar_lea.vmem [#allocation9], 176
    %2325 = vst [vmem:[%s2324] sm:$0xff] %v2318
    %v2326 = vmul.f32 %v2238, 0.95
    %v2327 = vmul.f32 %v2239, 0.95
    %v2328 = vadd.f32 %v2326, %v175
    %v2329 = vadd.f32 %v2327, %v177
    %v2330 = vsub.f32 %v2328, %v2244
    %v2331 = vsub.f32 %v2329, %v2245
    %vm2332 = vcmp.gt.f32.partialorder %v2330, 1.0
    %vm2333 = vcmp.gt.f32.partialorder %v2331, 1.0
    %v2334 = vsel %vm2332, 1, 0
    %v2335 = vsel %vm2333, 1, 0
    %v2336 = vcvt.s32.f32 %v2334
    %v2337 = vcvt.s32.f32 %v2335
    %2338 = vmatprep.subr.mxu0 0.0
    %2339 = vmatpush1.msra.mxu0 %v179
    %2340 = vmatprep.subr.mxu0 0.0
    %2341 = vmatpush1.msra.mxu0 %v180
    %2342 = vmatprep.subr.mxu0 0.0
    %2343 = vmatpush1.msra.mxu0 %v181
    %2344 = vmatprep.subr.mxu0 0.0
    %2345 = vmatpush1.msra.mxu0 %v182
    %2346 = vmatprep.subr.mxu0 0.0
    %2347 = vmatpush1.msra.mxu0 %v183
    %2348 = vmatprep.subr.mxu0 0.0
    %2349 = vmatpush1.msra.mxu0 %v184
    %2350 = vmatprep.subr.mxu0 0.0
    %2351 = vmatpush1.msra.mxu0 %v185
    %2352 = vmatprep.subr.mxu0 0.0
    %2353 = vmatpush1.msra.mxu0 %v186
    %2354 = vmatprep.subr.mxu0 0.0
    %2355 = vmatpush1.msra.mxu0 %v187
    %2356 = vmatprep.subr.mxu0 0.0
    %2357 = vmatpush1.msra.mxu0 %v188
    %2358 = vmatprep.subr.mxu0 0.0
    %2359 = vmatpush1.msra.mxu0 %v189
    %2360 = vmatprep.subr.mxu0 0.0
    %2361 = vmatpush1.msra.mxu0 %v190
    %2362 = vmatprep.subr.mxu0 0.0
    %2363 = vmatpush1.msra.mxu0 %v191
    %2364 = vmatprep.subr.mxu0 0.0
    %2365 = vmatpush1.msra.mxu0 %v192
    %2366 = vmatprep.subr.mxu0 0.0
    %2367 = vmatpush1.msra.mxu0 %v193
    %2368 = vmatprep.subr.mxu0 0.0
    %2369 = vmatpush1.msra.mxu0 %v194
    %2370 = vmatprep.subr.mxu0 0.0
    %2371 = vmatpush1.msra.mxu0 %v195
    %2372 = vmatprep.subr.mxu0 0.0
    %2373 = vmatpush1.msra.mxu0 %v196
    %2374 = vmatprep.subr.mxu0 0.0
    %2375 = vmatpush1.msra.mxu0 %v197
    %2376 = vmatprep.subr.mxu0 0.0
    %2377 = vmatpush1.msra.mxu0 %v198
    %2378 = vmatprep.subr.mxu0 0.0
    %2379 = vmatpush1.msra.mxu0 %v199
    %2380 = vmatprep.subr.mxu0 0.0
    %2381 = vmatpush1.msra.mxu0 %v200
    %2382 = vmatprep.subr.mxu0 0.0
    %2383 = vmatpush1.msra.mxu0 %v201
    %2384 = vmatprep.subr.mxu0 0.0
    %2385 = vmatpush1.msra.mxu0 %v202
    %2386 = vmatprep.subr.mxu0 0.0
    %2387 = vmatpush1.msra.mxu0 %v203
    %2388 = vmatprep.subr.mxu0 0.0
    %2389 = vmatpush1.msra.mxu0 %v204
    %2390 = vmatprep.subr.mxu0 0.0
    %2391 = vmatpush1.msra.mxu0 %v205
    %2392 = vmatprep.subr.mxu0 0.0
    %2393 = vmatpush1.msra.mxu0 %v206
    %2394 = vmatprep.subr.mxu0 0.0
    %2395 = vmatpush1.msra.mxu0 %v207
    %2396 = vmatprep.subr.mxu0 0.0
    %2397 = vmatpush1.msra.mxu0 %v208
    %2398 = vmatprep.subr.mxu0 0.0
    %2399 = vmatpush1.msra.mxu0 %v209
    %2400 = vmatprep.subr.mxu0 0.0
    %2401 = vmatpush1.msra.mxu0 %v210
    %2402 = vmatprep.mubr.f32.mxu0 %v2337
    %2403 = vmatmul.mubr.f32.gmra.mrb[0].mxu0 %v2336
    %v2404 = vpop.f32.mrb[0].mxu0
    %v2405 = vadd.f32 %v216, %v2404
    %v2406 = vpop.f32.mrb[0].mxu0
    %2407 = vdwg.mxu0
    %v2408 = vmul.f32 %v2318, 0.95
    %v2409 = vadd.f32 %v2408, %v2405
    %v2410 = vsub.f32 %v2409, %v2321
    %vm2411 = vcmp.gt.f32.partialorder %v2410, 1.0
    %v2412 = vsel %vm2411, 1, 0
    %v2413 = vcvt.s32.f32 %v2412
    %s2414 = scalar_lea.vmem [#allocation8], 184
    %2415 = vst [vmem:[%s2414] sm:$0xff] %v2413
    %s2416 = scalar_lea.vmem [#allocation9], 184
    %2417 = vst [vmem:[%s2416] sm:$0xff] %v2410
    %v2418 = vmul.f32 %v2330, 0.95
    %v2419 = vmul.f32 %v2331, 0.95
    %v2420 = vadd.f32 %v2418, %v175
    %v2421 = vadd.f32 %v2419, %v177
    %v2422 = vsub.f32 %v2420, %v2336
    %v2423 = vsub.f32 %v2421, %v2337
    %vm2424 = vcmp.gt.f32.partialorder %v2422, 1.0
    %vm2425 = vcmp.gt.f32.partialorder %v2423, 1.0
    %v2426 = vsel %vm2424, 1, 0
    %v2427 = vsel %vm2425, 1, 0
    %v2428 = vcvt.s32.f32 %v2426
    %v2429 = vcvt.s32.f32 %v2427
    %2430 = vmatprep.subr.mxu0 0.0
    %2431 = vmatpush1.msra.mxu0 %v179
    %2432 = vmatprep.subr.mxu0 0.0
    %2433 = vmatpush1.msra.mxu0 %v180
    %2434 = vmatprep.subr.mxu0 0.0
    %2435 = vmatpush1.msra.mxu0 %v181
    %2436 = vmatprep.subr.mxu0 0.0
    %2437 = vmatpush1.msra.mxu0 %v182
    %2438 = vmatprep.subr.mxu0 0.0
    %2439 = vmatpush1.msra.mxu0 %v183
    %2440 = vmatprep.subr.mxu0 0.0
    %2441 = vmatpush1.msra.mxu0 %v184
    %2442 = vmatprep.subr.mxu0 0.0
    %2443 = vmatpush1.msra.mxu0 %v185
    %2444 = vmatprep.subr.mxu0 0.0
    %2445 = vmatpush1.msra.mxu0 %v186
    %2446 = vmatprep.subr.mxu0 0.0
    %2447 = vmatpush1.msra.mxu0 %v187
    %2448 = vmatprep.subr.mxu0 0.0
    %2449 = vmatpush1.msra.mxu0 %v188
    %2450 = vmatprep.subr.mxu0 0.0
    %2451 = vmatpush1.msra.mxu0 %v189
    %2452 = vmatprep.subr.mxu0 0.0
    %2453 = vmatpush1.msra.mxu0 %v190
    %2454 = vmatprep.subr.mxu0 0.0
    %2455 = vmatpush1.msra.mxu0 %v191
    %2456 = vmatprep.subr.mxu0 0.0
    %2457 = vmatpush1.msra.mxu0 %v192
    %2458 = vmatprep.subr.mxu0 0.0
    %2459 = vmatpush1.msra.mxu0 %v193
    %2460 = vmatprep.subr.mxu0 0.0
    %2461 = vmatpush1.msra.mxu0 %v194
    %2462 = vmatprep.subr.mxu0 0.0
    %2463 = vmatpush1.msra.mxu0 %v195
    %2464 = vmatprep.subr.mxu0 0.0
    %2465 = vmatpush1.msra.mxu0 %v196
    %2466 = vmatprep.subr.mxu0 0.0
    %2467 = vmatpush1.msra.mxu0 %v197
    %2468 = vmatprep.subr.mxu0 0.0
    %2469 = vmatpush1.msra.mxu0 %v198
    %2470 = vmatprep.subr.mxu0 0.0
    %2471 = vmatpush1.msra.mxu0 %v199
    %2472 = vmatprep.subr.mxu0 0.0
    %2473 = vmatpush1.msra.mxu0 %v200
    %2474 = vmatprep.subr.mxu0 0.0
    %2475 = vmatpush1.msra.mxu0 %v201
    %2476 = vmatprep.subr.mxu0 0.0
    %2477 = vmatpush1.msra.mxu0 %v202
    %2478 = vmatprep.subr.mxu0 0.0
    %2479 = vmatpush1.msra.mxu0 %v203
    %2480 = vmatprep.subr.mxu0 0.0
    %2481 = vmatpush1.msra.mxu0 %v204
    %2482 = vmatprep.subr.mxu0 0.0
    %2483 = vmatpush1.msra.mxu0 %v205
    %2484 = vmatprep.subr.mxu0 0.0
    %2485 = vmatpush1.msra.mxu0 %v206
    %2486 = vmatprep.subr.mxu0 0.0
    %2487 = vmatpush1.msra.mxu0 %v207
    %2488 = vmatprep.subr.mxu0 0.0
    %2489 = vmatpush1.msra.mxu0 %v208
    %2490 = vmatprep.subr.mxu0 0.0
    %2491 = vmatpush1.msra.mxu0 %v209
    %2492 = vmatprep.subr.mxu0 0.0
    %2493 = vmatpush1.msra.mxu0 %v210
    %2494 = vmatprep.mubr.f32.mxu0 %v2429
    %2495 = vmatmul.mubr.f32.gmra.mrb[0].mxu0 %v2428
    %v2496 = vpop.f32.mrb[0].mxu0
    %v2497 = vadd.f32 %v216, %v2496
    %v2498 = vpop.f32.mrb[0].mxu0
    %2499 = vdwg.mxu0
    %v2500 = vmul.f32 %v2410, 0.95
    %v2501 = vadd.f32 %v2500, %v2497
    %v2502 = vsub.f32 %v2501, %v2413
    %vm2503 = vcmp.gt.f32.partialorder %v2502, 1.0
    %v2504 = vsel %vm2503, 1, 0
    %v2505 = vcvt.s32.f32 %v2504
    %s2506 = scalar_lea.vmem [#allocation8], 192
    %2507 = vst [vmem:[%s2506] sm:$0xff] %v2505
    %s2508 = scalar_lea.vmem [#allocation9], 192
    %2509 = vst [vmem:[%s2508] sm:$0xff] %v2502
    // Predicated region
    $region34: #{tpu_custom_call.1} parent=1 // pred_check
      _
    $region35: #{tpu_custom_call.1} parent=1 // pred_check_branch
      %2511 = sbr.rel (0) target = $region37
    $region36: #{tpu_custom_call.1} parent=1 // pred_region
      %s2513 = ssub.s32 3200, 3200
      %2514 = vsyncadd [#allocation4], %s2513
      %s2515 = sshll.u32 [#allocation8], 4
      %s2516 = int_to_ptr.vmem [resolvable:$true] %s2515
      %2521 = dma.vmem_to_hbm [thread:$0]  %s2516, 3200, %s5, [#allocation4], 128, 128, 8
    $region37: #{tpu_custom_call.1} parent=1 // pred_fallthru
      _
    // Predicated region
    $region38: #{tpu_custom_call.1} parent=1 // pred_check
      _
    $region39: #{tpu_custom_call.1} parent=1 // pred_check_branch
      %2523 = sbr.rel (0) target = $region41
    $region40: #{tpu_custom_call.1} parent=1 // pred_region
      %s2525 = ssub.s32 3200, 3200
      %2526 = vsyncadd [#allocation10], %s2525
      %s2527 = sshll.u32 [#allocation9], 4
      %s2528 = int_to_ptr.vmem [resolvable:$true] %s2527
      %2533 = dma.vmem_to_hbm [thread:$0]  %s2528, 3200, %s6, [#allocation10], 128, 128, 8
    $region41: #{tpu_custom_call.1} parent=1 // pred_fallthru
      _
    // Predicated region
    $region42: #{tpu_custom_call.1} parent=1 // pred_check
      _
    $region43: #{tpu_custom_call.1} parent=1 // pred_check_branch
      %2535 = sbr.rel (0) target = $region45
    $region44: #{tpu_custom_call.1} parent=1 // pred_region
      %2536 = dma.done [#allocation4], 3200
    $region45: #{tpu_custom_call.1} parent=1 // pred_fallthru
      _
    // Predicated region
    $region46: #{tpu_custom_call.1} parent=1 // pred_check
      _
    $region47: #{tpu_custom_call.1} parent=1 // pred_check_branch
      %2538 = sbr.rel (0) target = $region49
    $region48: #{tpu_custom_call.1} parent=1 // pred_region
      %2539 = dma.done [#allocation10], 3200
    $region49: #{tpu_custom_call.1} parent=1 // pred_fallthru
      _
    %2540 = vsyncpa [#allocation3], 1
    %2541 = vsyncpa [#allocation6], 1
    %2542 = vsyncpa [#allocation4], 1
    %2543 = vsyncpa [#allocation10], 1

</llo_original>
